<compile_context>
chip_gen: v7x
topology: tpu7x:2x2x1
jax: 0.10.0
libtpu: 0.0.40
codegen_flags: <defaults>
</compile_context>

<pallas_src>
import functools

import numpy as np
import jax
import jax.numpy as jnp
from jax.experimental import pallas as pl
from jax.experimental.pallas import tpu as pltpu


# ----------------------------------------------------------------------------------------------
# Host-side helpers (tiny, shape-dependent; all fold under jit)
# ----------------------------------------------------------------------------------------------
def _im2col_nhwc(x, K, stride):
    """x: (B, H, W, C) -> patches (B, OH, OW, K*K*C); flat patch index = (kh*K + kw)*C + ci."""
    B, H, W, C = x.shape
    OH = (H - K) // stride + 1
    OW = (W - K) // stride + 1
    cols = []
    for kh in range(K):
        for kw in range(K):
            cols.append(x[:, kh:kh + stride * OH:stride, kw:kw + stride * OW:stride, :])
    p = jnp.stack(cols, axis=3)                      # (B, OH, OW, K*K, C)
    return p.reshape(B, OH, OW, K * K * C), OH, OW


# ----------------------------------------------------------------------------------------------
# Fused kernel: conv1+BN+LReLU -> conv2+BN+LReLU -> conv3 + sigmoid
# ----------------------------------------------------------------------------------------------
def _disc_fused_kernel(p1_ref, w1_ref, ga1_ref, be1_ref,
                       w2_ref, ga2_ref, be2_ref,
                       w3m_ref, b3_ref, o_ref,
                       h1_scr, p2_scr, *, B, OH1, OH2, K):
    eps = 1e-5

    def bn_lrelu(y, gamma, beta):
        # BatchNorm2d (train mode, biased batch stats over N*OH*OW) + LeakyReLU(0.2),
        # one-pass sum / sum-of-squares statistics.
        inv_m = 1.0 / y.shape[0]
        mean = jnp.sum(y, axis=0, keepdims=True) * inv_m
        var = jnp.sum(y * y, axis=0, keepdims=True) * inv_m - mean * mean
        yn = (y - mean) * jax.lax.rsqrt(var + eps) * gamma + beta
        return jnp.where(yn >= 0.0, yn, 0.2 * yn)

    C1 = w1_ref.shape[1]
    n1 = OH1 * OH1                      # 169 layer-1 output positions per image
    n2 = OH2 * OH2                      # 25  layer-2 output positions per image
    half = OH1 // 2 + 1                 # 7: even rows live at 0..6, odd rows at 7..12 (host permuted)

    # ---- block 1: Conv(im_chan -> C1, k4, s2) as one im2col GEMM (bf16 MXU, f32 acc) + BN + LReLU.
    # Conv bias dropped: it cancels exactly against the BatchNorm mean subtraction.
    y1 = jnp.dot(p1_ref[...], w1_ref[...], preferred_element_type=jnp.float32)
    h1_scr[...] = bn_lrelu(y1, ga1_ref[...], be1_ref[...])                   # (B*169, C1) f32

    # ---- block 2 im2col (in VMEM): assemble the (B*25, K*K*C1) patch matrix from contiguous
    # 5-row slices of h1.  Rows were even/odd permuted on the host, so each tap's 5 source rows
    # (ow = 0..4) are contiguous -> plain static pl.ds reads, no gather matmuls.
    for b in range(B):
        for oh in range(OH2):
            for kh in range(K):
                hoff = kh // 2 + half * (kh % 2)
                row_base = b * n1 + (oh + hoff) * OH1
                for kw in range(K):
                    woff = kw // 2 + half * (kw % 2)
                    piece = h1_scr[pl.ds(row_base + woff, OH2), :]           # (OW2, C1)
                    p2_scr[pl.ds(b * n2 + oh * OH2, OH2),
                           pl.ds((kh * K + kw) * C1, C1)] = piece

    # ---- block 2: Conv(C1 -> C2, k4, s2) as ONE K = K*K*C1 GEMM + BN + LReLU (bias dropped).
    y2 = jnp.dot(p2_scr[...].astype(jnp.bfloat16), w2_ref[...],
                 preferred_element_type=jnp.float32)                          # (B*25, C2) f32
    h2 = bn_lrelu(y2, ga2_ref[...], be2_ref[...])

    # ---- final block: Conv(C2 -> 1, k4, s2) on the 5x5 map == masked multiply + lane-first
    # reduce + per-batch segment sum (tiny dot against an in-kernel 0/1 matrix), then sigmoid.
    per_row = jnp.sum(h2 * w3m_ref[...], axis=1, keepdims=True)              # (B*25, 1)
    rows = jax.lax.broadcasted_iota(jnp.int32, (B, B * n2), 0)
    cols = jax.lax.broadcasted_iota(jnp.int32, (B, B * n2), 1)
    bsel = ((cols >= rows * n2) & (cols < (rows + 1) * n2)).astype(jnp.float32)
    logit = jnp.dot(bsel, per_row, preferred_element_type=jnp.float32) + b3_ref[0]
    o_ref[...] = 1.0 / (1.0 + jnp.exp(-logit))                               # exact sigmoid


# ----------------------------------------------------------------------------------------------
# Wrapper
# ----------------------------------------------------------------------------------------------
def discriminator_forward(params, image, im_chan=1):
    B = image.shape[0]
    # nn.Unflatten(1, (im_chan, 28, 28)), then go channel-last once (cheap; C=1 here).
    x = image.reshape(B, im_chan, 28, 28).transpose(0, 2, 3, 1)              # NHWC

    w1, g1, be1 = params["w1"], params["g1"], params["be1"]
    w2, g2, be2 = params["w2"], params["g2"], params["be2"]
    w3, b3 = params["w3"], params["b3"]
    C1, C2, K, stride = w1.shape[0], w2.shape[0], w1.shape[2], 2

    # Layer-1 im2col on the tiny input image (the only im2col that touches HBM).  Output rows are
    # permuted even/odd along H and W so layer-2's in-kernel im2col uses only contiguous slices.
    p1, OH1, OW1 = _im2col_nhwc(x, K, stride)                                # (B, 13, 13, K*K*im_chan)
    perm = np.array([i for i in range(OH1) if i % 2 == 0] +
                    [i for i in range(OH1) if i % 2 == 1])
    p1 = p1[:, perm][:, :, perm].reshape(B * OH1 * OW1, K * K * im_chan).astype(jnp.bfloat16)
    w1r = w1.transpose(2, 3, 1, 0).reshape(K * K * im_chan, C1).astype(jnp.bfloat16)

    OH2 = (OH1 - K) // stride + 1                                            # 5
    w2r = w2.transpose(2, 3, 1, 0).reshape(K * K * C1, C2).astype(jnp.bfloat16)

    # Final conv (1x1 output per image) expressed as a zero-padded mask over the 5x5 map.
    w3m = jnp.transpose(w3[0], (1, 2, 0))                                    # (K, K, C2) -> (oh, ow, c)
    w3m = jnp.pad(w3m, ((0, OH2 - K), (0, OH2 - K), (0, 0))).reshape(OH2 * OH2, C2)
    w3m = jnp.tile(w3m, (B, 1)).astype(jnp.float32)                          # (B*25, C2)

    kernel = functools.partial(_disc_fused_kernel, B=B, OH1=OH1, OH2=OH2, K=K)
    vmem = pl.BlockSpec(memory_space=pltpu.MemorySpace.VMEM)
    smem = pl.BlockSpec(memory_space=pltpu.MemorySpace.SMEM)

    flops = 2 * (B * OH1 * OW1 * (K * K * im_chan) * C1          # conv1 GEMM
                 + B * OH2 * OH2 * (K * K * C1) * C2             # conv2 GEMM
                 + B * OH2 * OH2 * C2                            # final masked reduce
                 + B * B * OH2 * OH2)                            # segment-sum dot
    bytes_acc = int(p1.size * 2 + w1r.size * 2 + w2r.size * 2 + w3m.size * 4
                    + (2 * C1 + 2 * C2) * 4 + 4 + B * 4)
    cost = pl.CostEstimate(flops=int(flops), transcendentals=int(B + C1 + C2),
                           bytes_accessed=bytes_acc)

    out = pl.pallas_call(
        kernel,
        out_shape=jax.ShapeDtypeStruct((B, 1), jnp.float32),
        in_specs=[vmem] * 8 + [smem],
        out_specs=vmem,
        scratch_shapes=[pltpu.VMEM((B * OH1 * OW1, C1), jnp.float32),        # h1 activation
                        pltpu.VMEM((B * OH2 * OH2, K * K * C1), jnp.float32)],  # layer-2 im2col
        cost_estimate=cost,
    )(p1, w1r, g1.reshape(1, C1), be1.reshape(1, C1),
      w2r, g2.reshape(1, C2), be2.reshape(1, C2),
      w3m, b3.reshape(1).astype(jnp.float32))
    return out                                                               # (B, 1)


# ----------------------------------------------------------------------------------------------
# Params + pure-JAX reference (independent: lax.conv in NCHW, f32) for a sanity check
# ----------------------------------------------------------------------------------------------
def init_params(key, im_chan=1, hidden_dim=16):
    c1, c2 = hidden_dim * 4, hidden_dim * 8
    ks = jax.random.split(key, 6)
    return {
        "w1": jax.random.normal(ks[0], (c1, im_chan, 4, 4), jnp.float32) * 0.1,
        "b1": jax.random.normal(ks[1], (c1,), jnp.float32) * 0.1,
        "g1": jnp.ones((c1,), jnp.float32),
        "be1": jnp.zeros((c1,), jnp.float32),
        "w2": jax.random.normal(ks[2], (c2, c1, 4, 4), jnp.float32) * 0.05,
        "b2": jax.random.normal(ks[3], (c2,), jnp.float32) * 0.1,
        "g2": jnp.ones((c2,), jnp.float32),
        "be2": jnp.zeros((c2,), jnp.float32),
        "w3": jax.random.normal(ks[4], (1, c2, 4, 4), jnp.float32) * 0.05,
        "b3": jax.random.normal(ks[5], (1,), jnp.float32) * 0.1,
    }


def _reference_forward(params, image, im_chan=1):
    B = image.shape[0]
    x = image.reshape(B, im_chan, 28, 28)

    def conv(h, w, b, stride):
        y = jax.lax.conv_general_dilated(h, w, (stride, stride), "VALID",
                                         dimension_numbers=("NCHW", "OIHW", "NCHW"))
        return y + b.reshape(1, -1, 1, 1)

    def bn_lrelu(y, g, be):
        m = jnp.mean(y, axis=(0, 2, 3), keepdims=True)
        v = jnp.mean((y - m) ** 2, axis=(0, 2, 3), keepdims=True)
        yn = (y - m) * jax.lax.rsqrt(v + 1e-5) * g.reshape(1, -1, 1, 1) + be.reshape(1, -1, 1, 1)
        return jnp.where(yn >= 0, yn, 0.2 * yn)

    h = bn_lrelu(conv(x, params["w1"], params["b1"], 2), params["g1"], params["be1"])
    h = bn_lrelu(conv(h, params["w2"], params["b2"], 2), params["g2"], params["be2"])
    h = conv(h, params["w3"], params["b3"], 2)
    return jax.nn.sigmoid(h.reshape(B, -1))


if __name__ == "__main__":
    key = jax.random.PRNGKey(0)
    k_params, k_img = jax.random.split(key)
    params = init_params(k_params, im_chan=1, hidden_dim=16)      # module default hidden_dim=16
    image = jax.random.normal(k_img, (2, 1 * 28 * 28), jnp.float32)   # (B, im_chan*28*28)

    out = jax.block_until_ready(jax.jit(discriminator_forward)(params, image))
    assert out.shape == (2, 1)
    assert bool(jnp.all(jnp.isfinite(out)))

    ref = jax.block_until_ready(jax.jit(_reference_forward)(params, image))
    assert float(jnp.max(jnp.abs(out - ref))) < 5e-2, (out, ref)

    print("KERNEL_OK")
</pallas_src>

<mosaic_0001>
module attributes {stable_mosaic.version = 11 : i64} {
  func.func @_disc_fused_kernel(%arg0: memref<338x16xbf16, #tpu.memory_space<vmem>>, %arg1: memref<16x64xbf16, #tpu.memory_space<vmem>>, %arg2: memref<1x64xf32, #tpu.memory_space<vmem>>, %arg3: memref<1x64xf32, #tpu.memory_space<vmem>>, %arg4: memref<1024x128xbf16, #tpu.memory_space<vmem>>, %arg5: memref<1x128xf32, #tpu.memory_space<vmem>>, %arg6: memref<1x128xf32, #tpu.memory_space<vmem>>, %arg7: memref<50x128xf32, #tpu.memory_space<vmem>>, %arg8: memref<1xf32, #tpu.memory_space<smem>>, %arg9: memref<2x1xf32, #tpu.memory_space<vmem>>, %arg10: memref<338x64xf32, #tpu.memory_space<vmem>>, %arg11: memref<50x1024xf32, #tpu.memory_space<vmem>>) attributes {dimension_semantics = [], scalar_prefetch = 0 : i64, scratch_operands = 2 : i64, tpu.core_type = #tpu.core_type<tc>} {
    %c0 = arith.constant 0 : index
    %c0_0 = arith.constant 0 : index
    %0 = vector.load %arg0[%c0, %c0_0] : memref<338x16xbf16, #tpu.memory_space<vmem>>, vector<338x16xbf16>
    %c0_1 = arith.constant 0 : index
    %c0_2 = arith.constant 0 : index
    %1 = vector.load %arg1[%c0_1, %c0_2] : memref<16x64xbf16, #tpu.memory_space<vmem>>, vector<16x64xbf16>
    %cst = arith.constant dense<0.000000e+00> : vector<338x64xf32>
    %2 = tpu.matmul %0, %1, %cst {dimension_numbers = #tpu.dot_dimension_numbers<[1], [0], [0], [1], [0, 0, 1, 1], [], []>} : vector<338x16xbf16>, vector<16x64xbf16>, vector<338x64xf32> -> vector<338x64xf32>
    %c0_3 = arith.constant 0 : index
    %c0_4 = arith.constant 0 : index
    %3 = vector.load %arg2[%c0_3, %c0_4] : memref<1x64xf32, #tpu.memory_space<vmem>>, vector<1x64xf32>
    %c0_5 = arith.constant 0 : index
    %c0_6 = arith.constant 0 : index
    %4 = vector.load %arg3[%c0_5, %c0_6] : memref<1x64xf32, #tpu.memory_space<vmem>>, vector<1x64xf32>
    %cst_7 = arith.constant dense<0.000000e+00> : vector<64xf32>
    %5 = vector.multi_reduction <add>, %2, %cst_7 [0] : vector<338x64xf32> to vector<64xf32>
    %6 = vector.shape_cast %5 : vector<64xf32> to vector<1x64xf32>
    %cst_8 = arith.constant 2.958580e-03 : f32
    %7 = vector.broadcast %cst_8 : f32 to vector<1x64xf32>
    %8 = arith.mulf %6, %7 : vector<1x64xf32>
    %9 = arith.mulf %2, %2 : vector<338x64xf32>
    %cst_9 = arith.constant dense<0.000000e+00> : vector<64xf32>
    %10 = vector.multi_reduction <add>, %9, %cst_9 [0] : vector<338x64xf32> to vector<64xf32>
    %11 = vector.shape_cast %10 : vector<64xf32> to vector<1x64xf32>
    %cst_10 = arith.constant 2.958580e-03 : f32
    %12 = vector.broadcast %cst_10 : f32 to vector<1x64xf32>
    %13 = arith.mulf %11, %12 : vector<1x64xf32>
    %14 = arith.mulf %8, %8 : vector<1x64xf32>
    %15 = arith.subf %13, %14 : vector<1x64xf32>
    %16 = vector.broadcast %8 : vector<1x64xf32> to vector<338x64xf32>
    %17 = arith.subf %2, %16 : vector<338x64xf32>
    %cst_11 = arith.constant 9.99999974E-6 : f32
    %18 = vector.broadcast %cst_11 : f32 to vector<1x64xf32>
    %19 = arith.addf %15, %18 : vector<1x64xf32>
    %20 = math.rsqrt %19 : vector<1x64xf32>
    %21 = vector.broadcast %20 : vector<1x64xf32> to vector<338x64xf32>
    %22 = arith.mulf %17, %21 : vector<338x64xf32>
    %23 = vector.broadcast %3 : vector<1x64xf32> to vector<338x64xf32>
    %24 = arith.mulf %22, %23 : vector<338x64xf32>
    %25 = vector.broadcast %4 : vector<1x64xf32> to vector<338x64xf32>
    %26 = arith.addf %24, %25 : vector<338x64xf32>
    %cst_12 = arith.constant 0.000000e+00 : f32
    %27 = vector.broadcast %cst_12 : f32 to vector<338x64xf32>
    %28 = arith.cmpf oge, %26, %27 : vector<338x64xf32>
    %cst_13 = arith.constant 2.000000e-01 : f32
    %29 = vector.broadcast %cst_13 : f32 to vector<338x64xf32>
    %30 = arith.mulf %29, %26 : vector<338x64xf32>
    %31 = arith.select %28, %26, %30 : vector<338x64xi1>, vector<338x64xf32>
    %c0_14 = arith.constant 0 : index
    %c0_15 = arith.constant 0 : index
    %32 = vector.load %arg10[%c0_14, %c0_15] : memref<338x64xf32, #tpu.memory_space<vmem>>, vector<338x64xf32>
    tpu.vector_store %arg10[%c0_14, %c0_15], %31 {strides = array<i32>} : memref<338x64xf32, #tpu.memory_space<vmem>>, vector<338x64xf32>,
    %c0_16 = arith.constant 0 : index
    %c0_17 = arith.constant 0 : index
    %33 = vector.load %arg10[%c0_16, %c0_17] : memref<338x64xf32, #tpu.memory_space<vmem>>, vector<5x64xf32>
    %c0_18 = arith.constant 0 : index
    %c0_19 = arith.constant 0 : index
    %34 = vector.load %arg11[%c0_18, %c0_19] : memref<50x1024xf32, #tpu.memory_space<vmem>>, vector<5x64xf32>
    tpu.vector_store %arg11[%c0_18, %c0_19], %33 {strides = array<i32>} : memref<50x1024xf32, #tpu.memory_space<vmem>>, vector<5x64xf32>,
    %c7 = arith.constant 7 : index
    %c0_20 = arith.constant 0 : index
    %35 = vector.load %arg10[%c7, %c0_20] : memref<338x64xf32, #tpu.memory_space<vmem>>, vector<5x64xf32>
    %c0_21 = arith.constant 0 : index
    %c64 = arith.constant 64 : index
    %36 = vector.load %arg11[%c0_21, %c64] : memref<50x1024xf32, #tpu.memory_space<vmem>>, vector<5x64xf32>
    tpu.vector_store %arg11[%c0_21, %c64], %35 {strides = array<i32>} : memref<50x1024xf32, #tpu.memory_space<vmem>>, vector<5x64xf32>,
    %c1 = arith.constant 1 : index
    %c0_22 = arith.constant 0 : index
    %37 = vector.load %arg10[%c1, %c0_22] : memref<338x64xf32, #tpu.memory_space<vmem>>, vector<5x64xf32>
    %c0_23 = arith.constant 0 : index
    %c128 = arith.constant 128 : index
    %38 = vector.load %arg11[%c0_23, %c128] : memref<50x1024xf32, #tpu.memory_space<vmem>>, vector<5x64xf32>
    tpu.vector_store %arg11[%c0_23, %c128], %37 {strides = array<i32>} : memref<50x1024xf32, #tpu.memory_space<vmem>>, vector<5x64xf32>,
    %c8 = arith.constant 8 : index
    %c0_24 = arith.constant 0 : index
    %39 = vector.load %arg10[%c8, %c0_24] : memref<338x64xf32, #tpu.memory_space<vmem>>, vector<5x64xf32>
    %c0_25 = arith.constant 0 : index
    %c192 = arith.constant 192 : index
    %40 = vector.load %arg11[%c0_25, %c192] : memref<50x1024xf32, #tpu.memory_space<vmem>>, vector<5x64xf32>
    tpu.vector_store %arg11[%c0_25, %c192], %39 {strides = array<i32>} : memref<50x1024xf32, #tpu.memory_space<vmem>>, vector<5x64xf32>,
    %c91 = arith.constant 91 : index
    %c0_26 = arith.constant 0 : index
    %41 = vector.load %arg10[%c91, %c0_26] : memref<338x64xf32, #tpu.memory_space<vmem>>, vector<5x64xf32>
    %c0_27 = arith.constant 0 : index
    %c256 = arith.constant 256 : index
    %42 = vector.load %arg11[%c0_27, %c256] : memref<50x1024xf32, #tpu.memory_space<vmem>>, vector<5x64xf32>
    tpu.vector_store %arg11[%c0_27, %c256], %41 {strides = array<i32>} : memref<50x1024xf32, #tpu.memory_space<vmem>>, vector<5x64xf32>,
    %c98 = arith.constant 98 : index
    %c0_28 = arith.constant 0 : index
    %43 = vector.load %arg10[%c98, %c0_28] : memref<338x64xf32, #tpu.memory_space<vmem>>, vector<5x64xf32>
    %c0_29 = arith.constant 0 : index
    %c320 = arith.constant 320 : index
    %44 = vector.load %arg11[%c0_29, %c320] : memref<50x1024xf32, #tpu.memory_space<vmem>>, vector<5x64xf32>
    tpu.vector_store %arg11[%c0_29, %c320], %43 {strides = array<i32>} : memref<50x1024xf32, #tpu.memory_space<vmem>>, vector<5x64xf32>,
    %c92 = arith.constant 92 : index
    %c0_30 = arith.constant 0 : index
    %45 = vector.load %arg10[%c92, %c0_30] : memref<338x64xf32, #tpu.memory_space<vmem>>, vector<5x64xf32>
    %c0_31 = arith.constant 0 : index
    %c384 = arith.constant 384 : index
    %46 = vector.load %arg11[%c0_31, %c384] : memref<50x1024xf32, #tpu.memory_space<vmem>>, vector<5x64xf32>
    tpu.vector_store %arg11[%c0_31, %c384], %45 {strides = array<i32>} : memref<50x1024xf32, #tpu.memory_space<vmem>>, vector<5x64xf32>,
    %c99 = arith.constant 99 : index
    %c0_32 = arith.constant 0 : index
    %47 = vector.load %arg10[%c99, %c0_32] : memref<338x64xf32, #tpu.memory_space<vmem>>, vector<5x64xf32>
    %c0_33 = arith.constant 0 : index
    %c448 = arith.constant 448 : index
    %48 = vector.load %arg11[%c0_33, %c448] : memref<50x1024xf32, #tpu.memory_space<vmem>>, vector<5x64xf32>
    tpu.vector_store %arg11[%c0_33, %c448], %47 {strides = array<i32>} : memref<50x1024xf32, #tpu.memory_space<vmem>>, vector<5x64xf32>,
    %c13 = arith.constant 13 : index
    %c0_34 = arith.constant 0 : index
    %49 = vector.load %arg10[%c13, %c0_34] : memref<338x64xf32, #tpu.memory_space<vmem>>, vector<5x64xf32>
    %c0_35 = arith.constant 0 : index
    %c512 = arith.constant 512 : index
    %50 = vector.load %arg11[%c0_35, %c512] : memref<50x1024xf32, #tpu.memory_space<vmem>>, vector<5x64xf32>
    tpu.vector_store %arg11[%c0_35, %c512], %49 {strides = array<i32>} : memref<50x1024xf32, #tpu.memory_space<vmem>>, vector<5x64xf32>,
    %c20 = arith.constant 20 : index
    %c0_36 = arith.constant 0 : index
    %51 = vector.load %arg10[%c20, %c0_36] : memref<338x64xf32, #tpu.memory_space<vmem>>, vector<5x64xf32>
    %c0_37 = arith.constant 0 : index
    %c576 = arith.constant 576 : index
    %52 = vector.load %arg11[%c0_37, %c576] : memref<50x1024xf32, #tpu.memory_space<vmem>>, vector<5x64xf32>
    tpu.vector_store %arg11[%c0_37, %c576], %51 {strides = array<i32>} : memref<50x1024xf32, #tpu.memory_space<vmem>>, vector<5x64xf32>,
    %c14 = arith.constant 14 : index
    %c0_38 = arith.constant 0 : index
    %53 = vector.load %arg10[%c14, %c0_38] : memref<338x64xf32, #tpu.memory_space<vmem>>, vector<5x64xf32>
    %c0_39 = arith.constant 0 : index
    %c640 = arith.constant 640 : index
    %54 = vector.load %arg11[%c0_39, %c640] : memref<50x1024xf32, #tpu.memory_space<vmem>>, vector<5x64xf32>
    tpu.vector_store %arg11[%c0_39, %c640], %53 {strides = array<i32>} : memref<50x1024xf32, #tpu.memory_space<vmem>>, vector<5x64xf32>,
    %c21 = arith.constant 21 : index
    %c0_40 = arith.constant 0 : index
    %55 = vector.load %arg10[%c21, %c0_40] : memref<338x64xf32, #tpu.memory_space<vmem>>, vector<5x64xf32>
    %c0_41 = arith.constant 0 : index
    %c704 = arith.constant 704 : index
    %56 = vector.load %arg11[%c0_41, %c704] : memref<50x1024xf32, #tpu.memory_space<vmem>>, vector<5x64xf32>
    tpu.vector_store %arg11[%c0_41, %c704], %55 {strides = array<i32>} : memref<50x1024xf32, #tpu.memory_space<vmem>>, vector<5x64xf32>,
    %c104 = arith.constant 104 : index
    %c0_42 = arith.constant 0 : index
    %57 = vector.load %arg10[%c104, %c0_42] : memref<338x64xf32, #tpu.memory_space<vmem>>, vector<5x64xf32>
    %c0_43 = arith.constant 0 : index
    %c768 = arith.constant 768 : index
    %58 = vector.load %arg11[%c0_43, %c768] : memref<50x1024xf32, #tpu.memory_space<vmem>>, vector<5x64xf32>
    tpu.vector_store %arg11[%c0_43, %c768], %57 {strides = array<i32>} : memref<50x1024xf32, #tpu.memory_space<vmem>>, vector<5x64xf32>,
    %c111 = arith.constant 111 : index
    %c0_44 = arith.constant 0 : index
    %59 = vector.load %arg10[%c111, %c0_44] : memref<338x64xf32, #tpu.memory_space<vmem>>, vector<5x64xf32>
    %c0_45 = arith.constant 0 : index
    %c832 = arith.constant 832 : index
    %60 = vector.load %arg11[%c0_45, %c832] : memref<50x1024xf32, #tpu.memory_space<vmem>>, vector<5x64xf32>
    tpu.vector_store %arg11[%c0_45, %c832], %59 {strides = array<i32>} : memref<50x1024xf32, #tpu.memory_space<vmem>>, vector<5x64xf32>,
    %c105 = arith.constant 105 : index
    %c0_46 = arith.constant 0 : index
    %61 = vector.load %arg10[%c105, %c0_46] : memref<338x64xf32, #tpu.memory_space<vmem>>, vector<5x64xf32>
    %c0_47 = arith.constant 0 : index
    %c896 = arith.constant 896 : index
    %62 = vector.load %arg11[%c0_47, %c896] : memref<50x1024xf32, #tpu.memory_space<vmem>>, vector<5x64xf32>
    tpu.vector_store %arg11[%c0_47, %c896], %61 {strides = array<i32>} : memref<50x1024xf32, #tpu.memory_space<vmem>>, vector<5x64xf32>,
    %c112 = arith.constant 112 : index
    %c0_48 = arith.constant 0 : index
    %63 = vector.load %arg10[%c112, %c0_48] : memref<338x64xf32, #tpu.memory_space<vmem>>, vector<5x64xf32>
    %c0_49 = arith.constant 0 : index
    %c960 = arith.constant 960 : index
    %64 = vector.load %arg11[%c0_49, %c960] : memref<50x1024xf32, #tpu.memory_space<vmem>>, vector<5x64xf32>
    tpu.vector_store %arg11[%c0_49, %c960], %63 {strides = array<i32>} : memref<50x1024xf32, #tpu.memory_space<vmem>>, vector<5x64xf32>,
    %c13_50 = arith.constant 13 : index
    %c0_51 = arith.constant 0 : index
    %65 = vector.load %arg10[%c13_50, %c0_51] : memref<338x64xf32, #tpu.memory_space<vmem>>, vector<5x64xf32>
    %c5 = arith.constant 5 : index
    %c0_52 = arith.constant 0 : index
    %66 = vector.load %arg11[%c5, %c0_52] : memref<50x1024xf32, #tpu.memory_space<vmem>>, vector<5x64xf32>
    tpu.vector_store %arg11[%c5, %c0_52], %65 {strides = array<i32>} : memref<50x1024xf32, #tpu.memory_space<vmem>>, vector<5x64xf32>,
    %c20_53 = arith.constant 20 : index
    %c0_54 = arith.constant 0 : index
    %67 = vector.load %arg10[%c20_53, %c0_54] : memref<338x64xf32, #tpu.memory_space<vmem>>, vector<5x64xf32>
    %c5_55 = arith.constant 5 : index
    %c64_56 = arith.constant 64 : index
    %68 = vector.load %arg11[%c5_55, %c64_56] : memref<50x1024xf32, #tpu.memory_space<vmem>>, vector<5x64xf32>
    tpu.vector_store %arg11[%c5_55, %c64_56], %67 {strides = array<i32>} : memref<50x1024xf32, #tpu.memory_space<vmem>>, vector<5x64xf32>,
    %c14_57 = arith.constant 14 : index
    %c0_58 = arith.constant 0 : index
    %69 = vector.load %arg10[%c14_57, %c0_58] : memref<338x64xf32, #tpu.memory_space<vmem>>, vector<5x64xf32>
    %c5_59 = arith.constant 5 : index
    %c128_60 = arith.constant 128 : index
    %70 = vector.load %arg11[%c5_59, %c128_60] : memref<50x1024xf32, #tpu.memory_space<vmem>>, vector<5x64xf32>
    tpu.vector_store %arg11[%c5_59, %c128_60], %69 {strides = array<i32>} : memref<50x1024xf32, #tpu.memory_space<vmem>>, vector<5x64xf32>,
    %c21_61 = arith.constant 21 : index
    %c0_62 = arith.constant 0 : index
    %71 = vector.load %arg10[%c21_61, %c0_62] : memref<338x64xf32, #tpu.memory_space<vmem>>, vector<5x64xf32>
    %c5_63 = arith.constant 5 : index
    %c192_64 = arith.constant 192 : index
    %72 = vector.load %arg11[%c5_63, %c192_64] : memref<50x1024xf32, #tpu.memory_space<vmem>>, vector<5x64xf32>
    tpu.vector_store %arg11[%c5_63, %c192_64], %71 {strides = array<i32>} : memref<50x1024xf32, #tpu.memory_space<vmem>>, vector<5x64xf32>,
    %c104_65 = arith.constant 104 : index
    %c0_66 = arith.constant 0 : index
    %73 = vector.load %arg10[%c104_65, %c0_66] : memref<338x64xf32, #tpu.memory_space<vmem>>, vector<5x64xf32>
    %c5_67 = arith.constant 5 : index
    %c256_68 = arith.constant 256 : index
    %74 = vector.load %arg11[%c5_67, %c256_68] : memref<50x1024xf32, #tpu.memory_space<vmem>>, vector<5x64xf32>
    tpu.vector_store %arg11[%c5_67, %c256_68], %73 {strides = array<i32>} : memref<50x1024xf32, #tpu.memory_space<vmem>>, vector<5x64xf32>,
    %c111_69 = arith.constant 111 : index
    %c0_70 = arith.constant 0 : index
    %75 = vector.load %arg10[%c111_69, %c0_70] : memref<338x64xf32, #tpu.memory_space<vmem>>, vector<5x64xf32>
    %c5_71 = arith.constant 5 : index
    %c320_72 = arith.constant 320 : index
    %76 = vector.load %arg11[%c5_71, %c320_72] : memref<50x1024xf32, #tpu.memory_space<vmem>>, vector<5x64xf32>
    tpu.vector_store %arg11[%c5_71, %c320_72], %75 {strides = array<i32>} : memref<50x1024xf32, #tpu.memory_space<vmem>>, vector<5x64xf32>,
    %c105_73 = arith.constant 105 : index
    %c0_74 = arith.constant 0 : index
    %77 = vector.load %arg10[%c105_73, %c0_74] : memref<338x64xf32, #tpu.memory_space<vmem>>, vector<5x64xf32>
    %c5_75 = arith.constant 5 : index
    %c384_76 = arith.constant 384 : index
    %78 = vector.load %arg11[%c5_75, %c384_76] : memref<50x1024xf32, #tpu.memory_space<vmem>>, vector<5x64xf32>
    tpu.vector_store %arg11[%c5_75, %c384_76], %77 {strides = array<i32>} : memref<50x1024xf32, #tpu.memory_space<vmem>>, vector<5x64xf32>,
    %c112_77 = arith.constant 112 : index
    %c0_78 = arith.constant 0 : index
    %79 = vector.load %arg10[%c112_77, %c0_78] : memref<338x64xf32, #tpu.memory_space<vmem>>, vector<5x64xf32>
    %c5_79 = arith.constant 5 : index
    %c448_80 = arith.constant 448 : index
    %80 = vector.load %arg11[%c5_79, %c448_80] : memref<50x1024xf32, #tpu.memory_space<vmem>>, vector<5x64xf32>
    tpu.vector_store %arg11[%c5_79, %c448_80], %79 {strides = array<i32>} : memref<50x1024xf32, #tpu.memory_space<vmem>>, vector<5x64xf32>,
    %c26 = arith.constant 26 : index
    %c0_81 = arith.constant 0 : index
    %81 = vector.load %arg10[%c26, %c0_81] : memref<338x64xf32, #tpu.memory_space<vmem>>, vector<5x64xf32>
    %c5_82 = arith.constant 5 : index
    %c512_83 = arith.constant 512 : index
    %82 = vector.load %arg11[%c5_82, %c512_83] : memref<50x1024xf32, #tpu.memory_space<vmem>>, vector<5x64xf32>
    tpu.vector_store %arg11[%c5_82, %c512_83], %81 {strides = array<i32>} : memref<50x1024xf32, #tpu.memory_space<vmem>>, vector<5x64xf32>,
    %c33 = arith.constant 33 : index
    %c0_84 = arith.constant 0 : index
    %83 = vector.load %arg10[%c33, %c0_84] : memref<338x64xf32, #tpu.memory_space<vmem>>, vector<5x64xf32>
    %c5_85 = arith.constant 5 : index
    %c576_86 = arith.constant 576 : index
    %84 = vector.load %arg11[%c5_85, %c576_86] : memref<50x1024xf32, #tpu.memory_space<vmem>>, vector<5x64xf32>
    tpu.vector_store %arg11[%c5_85, %c576_86], %83 {strides = array<i32>} : memref<50x1024xf32, #tpu.memory_space<vmem>>, vector<5x64xf32>,
    %c27 = arith.constant 27 : index
    %c0_87 = arith.constant 0 : index
    %85 = vector.load %arg10[%c27, %c0_87] : memref<338x64xf32, #tpu.memory_space<vmem>>, vector<5x64xf32>
    %c5_88 = arith.constant 5 : index
    %c640_89 = arith.constant 640 : index
    %86 = vector.load %arg11[%c5_88, %c640_89] : memref<50x1024xf32, #tpu.memory_space<vmem>>, vector<5x64xf32>
    tpu.vector_store %arg11[%c5_88, %c640_89], %85 {strides = array<i32>} : memref<50x1024xf32, #tpu.memory_space<vmem>>, vector<5x64xf32>,
    %c34 = arith.constant 34 : index
    %c0_90 = arith.constant 0 : index
    %87 = vector.load %arg10[%c34, %c0_90] : memref<338x64xf32, #tpu.memory_space<vmem>>, vector<5x64xf32>
    %c5_91 = arith.constant 5 : index
    %c704_92 = arith.constant 704 : index
    %88 = vector.load %arg11[%c5_91, %c704_92] : memref<50x1024xf32, #tpu.memory_space<vmem>>, vector<5x64xf32>
    tpu.vector_store %arg11[%c5_91, %c704_92], %87 {strides = array<i32>} : memref<50x1024xf32, #tpu.memory_space<vmem>>, vector<5x64xf32>,
    %c117 = arith.constant 117 : index
    %c0_93 = arith.constant 0 : index
    %89 = vector.load %arg10[%c117, %c0_93] : memref<338x64xf32, #tpu.memory_space<vmem>>, vector<5x64xf32>
    %c5_94 = arith.constant 5 : index
    %c768_95 = arith.constant 768 : index
    %90 = vector.load %arg11[%c5_94, %c768_95] : memref<50x1024xf32, #tpu.memory_space<vmem>>, vector<5x64xf32>
    tpu.vector_store %arg11[%c5_94, %c768_95], %89 {strides = array<i32>} : memref<50x1024xf32, #tpu.memory_space<vmem>>, vector<5x64xf32>,
    %c124 = arith.constant 124 : index
    %c0_96 = arith.constant 0 : index
    %91 = vector.load %arg10[%c124, %c0_96] : memref<338x64xf32, #tpu.memory_space<vmem>>, vector<5x64xf32>
    %c5_97 = arith.constant 5 : index
    %c832_98 = arith.constant 832 : index
    %92 = vector.load %arg11[%c5_97, %c832_98] : memref<50x1024xf32, #tpu.memory_space<vmem>>, vector<5x64xf32>
    tpu.vector_store %arg11[%c5_97, %c832_98], %91 {strides = array<i32>} : memref<50x1024xf32, #tpu.memory_space<vmem>>, vector<5x64xf32>,
    %c118 = arith.constant 118 : index
    %c0_99 = arith.constant 0 : index
    %93 = vector.load %arg10[%c118, %c0_99] : memref<338x64xf32, #tpu.memory_space<vmem>>, vector<5x64xf32>
    %c5_100 = arith.constant 5 : index
    %c896_101 = arith.constant 896 : index
    %94 = vector.load %arg11[%c5_100, %c896_101] : memref<50x1024xf32, #tpu.memory_space<vmem>>, vector<5x64xf32>
    tpu.vector_store %arg11[%c5_100, %c896_101], %93 {strides = array<i32>} : memref<50x1024xf32, #tpu.memory_space<vmem>>, vector<5x64xf32>,
    %c125 = arith.constant 125 : index
    %c0_102 = arith.constant 0 : index
    %95 = vector.load %arg10[%c125, %c0_102] : memref<338x64xf32, #tpu.memory_space<vmem>>, vector<5x64xf32>
    %c5_103 = arith.constant 5 : index
    %c960_104 = arith.constant 960 : index
    %96 = vector.load %arg11[%c5_103, %c960_104] : memref<50x1024xf32, #tpu.memory_space<vmem>>, vector<5x64xf32>
    tpu.vector_store %arg11[%c5_103, %c960_104], %95 {strides = array<i32>} : memref<50x1024xf32, #tpu.memory_space<vmem>>, vector<5x64xf32>,
    %c26_105 = arith.constant 26 : index
    %c0_106 = arith.constant 0 : index
    %97 = vector.load %arg10[%c26_105, %c0_106] : memref<338x64xf32, #tpu.memory_space<vmem>>, vector<5x64xf32>
    %c10 = arith.constant 10 : index
    %c0_107 = arith.constant 0 : index
    %98 = vector.load %arg11[%c10, %c0_107] : memref<50x1024xf32, #tpu.memory_space<vmem>>, vector<5x64xf32>
    tpu.vector_store %arg11[%c10, %c0_107], %97 {strides = array<i32>} : memref<50x1024xf32, #tpu.memory_space<vmem>>, vector<5x64xf32>,
    %c33_108 = arith.constant 33 : index
    %c0_109 = arith.constant 0 : index
    %99 = vector.load %arg10[%c33_108, %c0_109] : memref<338x64xf32, #tpu.memory_space<vmem>>, vector<5x64xf32>
    %c10_110 = arith.constant 10 : index
    %c64_111 = arith.constant 64 : index
    %100 = vector.load %arg11[%c10_110, %c64_111] : memref<50x1024xf32, #tpu.memory_space<vmem>>, vector<5x64xf32>
    tpu.vector_store %arg11[%c10_110, %c64_111], %99 {strides = array<i32>} : memref<50x1024xf32, #tpu.memory_space<vmem>>, vector<5x64xf32>,
    %c27_112 = arith.constant 27 : index
    %c0_113 = arith.constant 0 : index
    %101 = vector.load %arg10[%c27_112, %c0_113] : memref<338x64xf32, #tpu.memory_space<vmem>>, vector<5x64xf32>
    %c10_114 = arith.constant 10 : index
    %c128_115 = arith.constant 128 : index
    %102 = vector.load %arg11[%c10_114, %c128_115] : memref<50x1024xf32, #tpu.memory_space<vmem>>, vector<5x64xf32>
    tpu.vector_store %arg11[%c10_114, %c128_115], %101 {strides = array<i32>} : memref<50x1024xf32, #tpu.memory_space<vmem>>, vector<5x64xf32>,
    %c34_116 = arith.constant 34 : index
    %c0_117 = arith.constant 0 : index
    %103 = vector.load %arg10[%c34_116, %c0_117] : memref<338x64xf32, #tpu.memory_space<vmem>>, vector<5x64xf32>
    %c10_118 = arith.constant 10 : index
    %c192_119 = arith.constant 192 : index
    %104 = vector.load %arg11[%c10_118, %c192_119] : memref<50x1024xf32, #tpu.memory_space<vmem>>, vector<5x64xf32>
    tpu.vector_store %arg11[%c10_118, %c192_119], %103 {strides = array<i32>} : memref<50x1024xf32, #tpu.memory_space<vmem>>, vector<5x64xf32>,
    %c117_120 = arith.constant 117 : index
    %c0_121 = arith.constant 0 : index
    %105 = vector.load %arg10[%c117_120, %c0_121] : memref<338x64xf32, #tpu.memory_space<vmem>>, vector<5x64xf32>
    %c10_122 = arith.constant 10 : index
    %c256_123 = arith.constant 256 : index
    %106 = vector.load %arg11[%c10_122, %c256_123] : memref<50x1024xf32, #tpu.memory_space<vmem>>, vector<5x64xf32>
    tpu.vector_store %arg11[%c10_122, %c256_123], %105 {strides = array<i32>} : memref<50x1024xf32, #tpu.memory_space<vmem>>, vector<5x64xf32>,
    %c124_124 = arith.constant 124 : index
    %c0_125 = arith.constant 0 : index
    %107 = vector.load %arg10[%c124_124, %c0_125] : memref<338x64xf32, #tpu.memory_space<vmem>>, vector<5x64xf32>
    %c10_126 = arith.constant 10 : index
    %c320_127 = arith.constant 320 : index
    %108 = vector.load %arg11[%c10_126, %c320_127] : memref<50x1024xf32, #tpu.memory_space<vmem>>, vector<5x64xf32>
    tpu.vector_store %arg11[%c10_126, %c320_127], %107 {strides = array<i32>} : memref<50x1024xf32, #tpu.memory_space<vmem>>, vector<5x64xf32>,
    %c118_128 = arith.constant 118 : index
    %c0_129 = arith.constant 0 : index
    %109 = vector.load %arg10[%c118_128, %c0_129] : memref<338x64xf32, #tpu.memory_space<vmem>>, vector<5x64xf32>
    %c10_130 = arith.constant 10 : index
    %c384_131 = arith.constant 384 : index
    %110 = vector.load %arg11[%c10_130, %c384_131] : memref<50x1024xf32, #tpu.memory_space<vmem>>, vector<5x64xf32>
    tpu.vector_store %arg11[%c10_130, %c384_131], %109 {strides = array<i32>} : memref<50x1024xf32, #tpu.memory_space<vmem>>, vector<5x64xf32>,
    %c125_132 = arith.constant 125 : index
    %c0_133 = arith.constant 0 : index
    %111 = vector.load %arg10[%c125_132, %c0_133] : memref<338x64xf32, #tpu.memory_space<vmem>>, vector<5x64xf32>
    %c10_134 = arith.constant 10 : index
    %c448_135 = arith.constant 448 : index
    %112 = vector.load %arg11[%c10_134, %c448_135] : memref<50x1024xf32, #tpu.memory_space<vmem>>, vector<5x64xf32>
    tpu.vector_store %arg11[%c10_134, %c448_135], %111 {strides = array<i32>} : memref<50x1024xf32, #tpu.memory_space<vmem>>, vector<5x64xf32>,
    %c39 = arith.constant 39 : index
    %c0_136 = arith.constant 0 : index
    %113 = vector.load %arg10[%c39, %c0_136] : memref<338x64xf32, #tpu.memory_space<vmem>>, vector<5x64xf32>
    %c10_137 = arith.constant 10 : index
    %c512_138 = arith.constant 512 : index
    %114 = vector.load %arg11[%c10_137, %c512_138] : memref<50x1024xf32, #tpu.memory_space<vmem>>, vector<5x64xf32>
    tpu.vector_store %arg11[%c10_137, %c512_138], %113 {strides = array<i32>} : memref<50x1024xf32, #tpu.memory_space<vmem>>, vector<5x64xf32>,
    %c46 = arith.constant 46 : index
    %c0_139 = arith.constant 0 : index
    %115 = vector.load %arg10[%c46, %c0_139] : memref<338x64xf32, #tpu.memory_space<vmem>>, vector<5x64xf32>
    %c10_140 = arith.constant 10 : index
    %c576_141 = arith.constant 576 : index
    %116 = vector.load %arg11[%c10_140, %c576_141] : memref<50x1024xf32, #tpu.memory_space<vmem>>, vector<5x64xf32>
    tpu.vector_store %arg11[%c10_140, %c576_141], %115 {strides = array<i32>} : memref<50x1024xf32, #tpu.memory_space<vmem>>, vector<5x64xf32>,
    %c40 = arith.constant 40 : index
    %c0_142 = arith.constant 0 : index
    %117 = vector.load %arg10[%c40, %c0_142] : memref<338x64xf32, #tpu.memory_space<vmem>>, vector<5x64xf32>
    %c10_143 = arith.constant 10 : index
    %c640_144 = arith.constant 640 : index
    %118 = vector.load %arg11[%c10_143, %c640_144] : memref<50x1024xf32, #tpu.memory_space<vmem>>, vector<5x64xf32>
    tpu.vector_store %arg11[%c10_143, %c640_144], %117 {strides = array<i32>} : memref<50x1024xf32, #tpu.memory_space<vmem>>, vector<5x64xf32>,
    %c47 = arith.constant 47 : index
    %c0_145 = arith.constant 0 : index
    %119 = vector.load %arg10[%c47, %c0_145] : memref<338x64xf32, #tpu.memory_space<vmem>>, vector<5x64xf32>
    %c10_146 = arith.constant 10 : index
    %c704_147 = arith.constant 704 : index
    %120 = vector.load %arg11[%c10_146, %c704_147] : memref<50x1024xf32, #tpu.memory_space<vmem>>, vector<5x64xf32>
    tpu.vector_store %arg11[%c10_146, %c704_147], %119 {strides = array<i32>} : memref<50x1024xf32, #tpu.memory_space<vmem>>, vector<5x64xf32>,
    %c130 = arith.constant 130 : index
    %c0_148 = arith.constant 0 : index
    %121 = vector.load %arg10[%c130, %c0_148] : memref<338x64xf32, #tpu.memory_space<vmem>>, vector<5x64xf32>
    %c10_149 = arith.constant 10 : index
    %c768_150 = arith.constant 768 : index
    %122 = vector.load %arg11[%c10_149, %c768_150] : memref<50x1024xf32, #tpu.memory_space<vmem>>, vector<5x64xf32>
    tpu.vector_store %arg11[%c10_149, %c768_150], %121 {strides = array<i32>} : memref<50x1024xf32, #tpu.memory_space<vmem>>, vector<5x64xf32>,
    %c137 = arith.constant 137 : index
    %c0_151 = arith.constant 0 : index
    %123 = vector.load %arg10[%c137, %c0_151] : memref<338x64xf32, #tpu.memory_space<vmem>>, vector<5x64xf32>
    %c10_152 = arith.constant 10 : index
    %c832_153 = arith.constant 832 : index
    %124 = vector.load %arg11[%c10_152, %c832_153] : memref<50x1024xf32, #tpu.memory_space<vmem>>, vector<5x64xf32>
    tpu.vector_store %arg11[%c10_152, %c832_153], %123 {strides = array<i32>} : memref<50x1024xf32, #tpu.memory_space<vmem>>, vector<5x64xf32>,
    %c131 = arith.constant 131 : index
    %c0_154 = arith.constant 0 : index
    %125 = vector.load %arg10[%c131, %c0_154] : memref<338x64xf32, #tpu.memory_space<vmem>>, vector<5x64xf32>
    %c10_155 = arith.constant 10 : index
    %c896_156 = arith.constant 896 : index
    %126 = vector.load %arg11[%c10_155, %c896_156] : memref<50x1024xf32, #tpu.memory_space<vmem>>, vector<5x64xf32>
    tpu.vector_store %arg11[%c10_155, %c896_156], %125 {strides = array<i32>} : memref<50x1024xf32, #tpu.memory_space<vmem>>, vector<5x64xf32>,
    %c138 = arith.constant 138 : index
    %c0_157 = arith.constant 0 : index
    %127 = vector.load %arg10[%c138, %c0_157] : memref<338x64xf32, #tpu.memory_space<vmem>>, vector<5x64xf32>
    %c10_158 = arith.constant 10 : index
    %c960_159 = arith.constant 960 : index
    %128 = vector.load %arg11[%c10_158, %c960_159] : memref<50x1024xf32, #tpu.memory_space<vmem>>, vector<5x64xf32>
    tpu.vector_store %arg11[%c10_158, %c960_159], %127 {strides = array<i32>} : memref<50x1024xf32, #tpu.memory_space<vmem>>, vector<5x64xf32>,
    %c39_160 = arith.constant 39 : index
    %c0_161 = arith.constant 0 : index
    %129 = vector.load %arg10[%c39_160, %c0_161] : memref<338x64xf32, #tpu.memory_space<vmem>>, vector<5x64xf32>
    %c15 = arith.constant 15 : index
    %c0_162 = arith.constant 0 : index
    %130 = vector.load %arg11[%c15, %c0_162] : memref<50x1024xf32, #tpu.memory_space<vmem>>, vector<5x64xf32>
    tpu.vector_store %arg11[%c15, %c0_162], %129 {strides = array<i32>} : memref<50x1024xf32, #tpu.memory_space<vmem>>, vector<5x64xf32>,
    %c46_163 = arith.constant 46 : index
    %c0_164 = arith.constant 0 : index
    %131 = vector.load %arg10[%c46_163, %c0_164] : memref<338x64xf32, #tpu.memory_space<vmem>>, vector<5x64xf32>
    %c15_165 = arith.constant 15 : index
    %c64_166 = arith.constant 64 : index
    %132 = vector.load %arg11[%c15_165, %c64_166] : memref<50x1024xf32, #tpu.memory_space<vmem>>, vector<5x64xf32>
    tpu.vector_store %arg11[%c15_165, %c64_166], %131 {strides = array<i32>} : memref<50x1024xf32, #tpu.memory_space<vmem>>, vector<5x64xf32>,
    %c40_167 = arith.constant 40 : index
    %c0_168 = arith.constant 0 : index
    %133 = vector.load %arg10[%c40_167, %c0_168] : memref<338x64xf32, #tpu.memory_space<vmem>>, vector<5x64xf32>
    %c15_169 = arith.constant 15 : index
    %c128_170 = arith.constant 128 : index
    %134 = vector.load %arg11[%c15_169, %c128_170] : memref<50x1024xf32, #tpu.memory_space<vmem>>, vector<5x64xf32>
    tpu.vector_store %arg11[%c15_169, %c128_170], %133 {strides = array<i32>} : memref<50x1024xf32, #tpu.memory_space<vmem>>, vector<5x64xf32>,
    %c47_171 = arith.constant 47 : index
    %c0_172 = arith.constant 0 : index
    %135 = vector.load %arg10[%c47_171, %c0_172] : memref<338x64xf32, #tpu.memory_space<vmem>>, vector<5x64xf32>
    %c15_173 = arith.constant 15 : index
    %c192_174 = arith.constant 192 : index
    %136 = vector.load %arg11[%c15_173, %c192_174] : memref<50x1024xf32, #tpu.memory_space<vmem>>, vector<5x64xf32>
    tpu.vector_store %arg11[%c15_173, %c192_174], %135 {strides = array<i32>} : memref<50x1024xf32, #tpu.memory_space<vmem>>, vector<5x64xf32>,
    %c130_175 = arith.constant 130 : index
    %c0_176 = arith.constant 0 : index
    %137 = vector.load %arg10[%c130_175, %c0_176] : memref<338x64xf32, #tpu.memory_space<vmem>>, vector<5x64xf32>
    %c15_177 = arith.constant 15 : index
    %c256_178 = arith.constant 256 : index
    %138 = vector.load %arg11[%c15_177, %c256_178] : memref<50x1024xf32, #tpu.memory_space<vmem>>, vector<5x64xf32>
    tpu.vector_store %arg11[%c15_177, %c256_178], %137 {strides = array<i32>} : memref<50x1024xf32, #tpu.memory_space<vmem>>, vector<5x64xf32>,
    %c137_179 = arith.constant 137 : index
    %c0_180 = arith.constant 0 : index
    %139 = vector.load %arg10[%c137_179, %c0_180] : memref<338x64xf32, #tpu.memory_space<vmem>>, vector<5x64xf32>
    %c15_181 = arith.constant 15 : index
    %c320_182 = arith.constant 320 : index
    %140 = vector.load %arg11[%c15_181, %c320_182] : memref<50x1024xf32, #tpu.memory_space<vmem>>, vector<5x64xf32>
    tpu.vector_store %arg11[%c15_181, %c320_182], %139 {strides = array<i32>} : memref<50x1024xf32, #tpu.memory_space<vmem>>, vector<5x64xf32>,
    %c131_183 = arith.constant 131 : index
    %c0_184 = arith.constant 0 : index
    %141 = vector.load %arg10[%c131_183, %c0_184] : memref<338x64xf32, #tpu.memory_space<vmem>>, vector<5x64xf32>
    %c15_185 = arith.constant 15 : index
    %c384_186 = arith.constant 384 : index
    %142 = vector.load %arg11[%c15_185, %c384_186] : memref<50x1024xf32, #tpu.memory_space<vmem>>, vector<5x64xf32>
    tpu.vector_store %arg11[%c15_185, %c384_186], %141 {strides = array<i32>} : memref<50x1024xf32, #tpu.memory_space<vmem>>, vector<5x64xf32>,
    %c138_187 = arith.constant 138 : index
    %c0_188 = arith.constant 0 : index
    %143 = vector.load %arg10[%c138_187, %c0_188] : memref<338x64xf32, #tpu.memory_space<vmem>>, vector<5x64xf32>
    %c15_189 = arith.constant 15 : index
    %c448_190 = arith.constant 448 : index
    %144 = vector.load %arg11[%c15_189, %c448_190] : memref<50x1024xf32, #tpu.memory_space<vmem>>, vector<5x64xf32>
    tpu.vector_store %arg11[%c15_189, %c448_190], %143 {strides = array<i32>} : memref<50x1024xf32, #tpu.memory_space<vmem>>, vector<5x64xf32>,
    %c52 = arith.constant 52 : index
    %c0_191 = arith.constant 0 : index
    %145 = vector.load %arg10[%c52, %c0_191] : memref<338x64xf32, #tpu.memory_space<vmem>>, vector<5x64xf32>
    %c15_192 = arith.constant 15 : index
    %c512_193 = arith.constant 512 : index
    %146 = vector.load %arg11[%c15_192, %c512_193] : memref<50x1024xf32, #tpu.memory_space<vmem>>, vector<5x64xf32>
    tpu.vector_store %arg11[%c15_192, %c512_193], %145 {strides = array<i32>} : memref<50x1024xf32, #tpu.memory_space<vmem>>, vector<5x64xf32>,
    %c59 = arith.constant 59 : index
    %c0_194 = arith.constant 0 : index
    %147 = vector.load %arg10[%c59, %c0_194] : memref<338x64xf32, #tpu.memory_space<vmem>>, vector<5x64xf32>
    %c15_195 = arith.constant 15 : index
    %c576_196 = arith.constant 576 : index
    %148 = vector.load %arg11[%c15_195, %c576_196] : memref<50x1024xf32, #tpu.memory_space<vmem>>, vector<5x64xf32>
    tpu.vector_store %arg11[%c15_195, %c576_196], %147 {strides = array<i32>} : memref<50x1024xf32, #tpu.memory_space<vmem>>, vector<5x64xf32>,
    %c53 = arith.constant 53 : index
    %c0_197 = arith.constant 0 : index
    %149 = vector.load %arg10[%c53, %c0_197] : memref<338x64xf32, #tpu.memory_space<vmem>>, vector<5x64xf32>
    %c15_198 = arith.constant 15 : index
    %c640_199 = arith.constant 640 : index
    %150 = vector.load %arg11[%c15_198, %c640_199] : memref<50x1024xf32, #tpu.memory_space<vmem>>, vector<5x64xf32>
    tpu.vector_store %arg11[%c15_198, %c640_199], %149 {strides = array<i32>} : memref<50x1024xf32, #tpu.memory_space<vmem>>, vector<5x64xf32>,
    %c60 = arith.constant 60 : index
    %c0_200 = arith.constant 0 : index
    %151 = vector.load %arg10[%c60, %c0_200] : memref<338x64xf32, #tpu.memory_space<vmem>>, vector<5x64xf32>
    %c15_201 = arith.constant 15 : index
    %c704_202 = arith.constant 704 : index
    %152 = vector.load %arg11[%c15_201, %c704_202] : memref<50x1024xf32, #tpu.memory_space<vmem>>, vector<5x64xf32>
    tpu.vector_store %arg11[%c15_201, %c704_202], %151 {strides = array<i32>} : memref<50x1024xf32, #tpu.memory_space<vmem>>, vector<5x64xf32>,
    %c143 = arith.constant 143 : index
    %c0_203 = arith.constant 0 : index
    %153 = vector.load %arg10[%c143, %c0_203] : memref<338x64xf32, #tpu.memory_space<vmem>>, vector<5x64xf32>
    %c15_204 = arith.constant 15 : index
    %c768_205 = arith.constant 768 : index
    %154 = vector.load %arg11[%c15_204, %c768_205] : memref<50x1024xf32, #tpu.memory_space<vmem>>, vector<5x64xf32>
    tpu.vector_store %arg11[%c15_204, %c768_205], %153 {strides = array<i32>} : memref<50x1024xf32, #tpu.memory_space<vmem>>, vector<5x64xf32>,
    %c150 = arith.constant 150 : index
    %c0_206 = arith.constant 0 : index
    %155 = vector.load %arg10[%c150, %c0_206] : memref<338x64xf32, #tpu.memory_space<vmem>>, vector<5x64xf32>
    %c15_207 = arith.constant 15 : index
    %c832_208 = arith.constant 832 : index
    %156 = vector.load %arg11[%c15_207, %c832_208] : memref<50x1024xf32, #tpu.memory_space<vmem>>, vector<5x64xf32>
    tpu.vector_store %arg11[%c15_207, %c832_208], %155 {strides = array<i32>} : memref<50x1024xf32, #tpu.memory_space<vmem>>, vector<5x64xf32>,
    %c144 = arith.constant 144 : index
    %c0_209 = arith.constant 0 : index
    %157 = vector.load %arg10[%c144, %c0_209] : memref<338x64xf32, #tpu.memory_space<vmem>>, vector<5x64xf32>
    %c15_210 = arith.constant 15 : index
    %c896_211 = arith.constant 896 : index
    %158 = vector.load %arg11[%c15_210, %c896_211] : memref<50x1024xf32, #tpu.memory_space<vmem>>, vector<5x64xf32>
    tpu.vector_store %arg11[%c15_210, %c896_211], %157 {strides = array<i32>} : memref<50x1024xf32, #tpu.memory_space<vmem>>, vector<5x64xf32>,
    %c151 = arith.constant 151 : index
    %c0_212 = arith.constant 0 : index
    %159 = vector.load %arg10[%c151, %c0_212] : memref<338x64xf32, #tpu.memory_space<vmem>>, vector<5x64xf32>
    %c15_213 = arith.constant 15 : index
    %c960_214 = arith.constant 960 : index
    %160 = vector.load %arg11[%c15_213, %c960_214] : memref<50x1024xf32, #tpu.memory_space<vmem>>, vector<5x64xf32>
    tpu.vector_store %arg11[%c15_213, %c960_214], %159 {strides = array<i32>} : memref<50x1024xf32, #tpu.memory_space<vmem>>, vector<5x64xf32>,
    %c52_215 = arith.constant 52 : index
    %c0_216 = arith.constant 0 : index
    %161 = vector.load %arg10[%c52_215, %c0_216] : memref<338x64xf32, #tpu.memory_space<vmem>>, vector<5x64xf32>
    %c20_217 = arith.constant 20 : index
    %c0_218 = arith.constant 0 : index
    %162 = vector.load %arg11[%c20_217, %c0_218] : memref<50x1024xf32, #tpu.memory_space<vmem>>, vector<5x64xf32>
    tpu.vector_store %arg11[%c20_217, %c0_218], %161 {strides = array<i32>} : memref<50x1024xf32, #tpu.memory_space<vmem>>, vector<5x64xf32>,
    %c59_219 = arith.constant 59 : index
    %c0_220 = arith.constant 0 : index
    %163 = vector.load %arg10[%c59_219, %c0_220] : memref<338x64xf32, #tpu.memory_space<vmem>>, vector<5x64xf32>
    %c20_221 = arith.constant 20 : index
    %c64_222 = arith.constant 64 : index
    %164 = vector.load %arg11[%c20_221, %c64_222] : memref<50x1024xf32, #tpu.memory_space<vmem>>, vector<5x64xf32>
    tpu.vector_store %arg11[%c20_221, %c64_222], %163 {strides = array<i32>} : memref<50x1024xf32, #tpu.memory_space<vmem>>, vector<5x64xf32>,
    %c53_223 = arith.constant 53 : index
    %c0_224 = arith.constant 0 : index
    %165 = vector.load %arg10[%c53_223, %c0_224] : memref<338x64xf32, #tpu.memory_space<vmem>>, vector<5x64xf32>
    %c20_225 = arith.constant 20 : index
    %c128_226 = arith.constant 128 : index
    %166 = vector.load %arg11[%c20_225, %c128_226] : memref<50x1024xf32, #tpu.memory_space<vmem>>, vector<5x64xf32>
    tpu.vector_store %arg11[%c20_225, %c128_226], %165 {strides = array<i32>} : memref<50x1024xf32, #tpu.memory_space<vmem>>, vector<5x64xf32>,
    %c60_227 = arith.constant 60 : index
    %c0_228 = arith.constant 0 : index
    %167 = vector.load %arg10[%c60_227, %c0_228] : memref<338x64xf32, #tpu.memory_space<vmem>>, vector<5x64xf32>
    %c20_229 = arith.constant 20 : index
    %c192_230 = arith.constant 192 : index
    %168 = vector.load %arg11[%c20_229, %c192_230] : memref<50x1024xf32, #tpu.memory_space<vmem>>, vector<5x64xf32>
    tpu.vector_store %arg11[%c20_229, %c192_230], %167 {strides = array<i32>} : memref<50x1024xf32, #tpu.memory_space<vmem>>, vector<5x64xf32>,
    %c143_231 = arith.constant 143 : index
    %c0_232 = arith.constant 0 : index
    %169 = vector.load %arg10[%c143_231, %c0_232] : memref<338x64xf32, #tpu.memory_space<vmem>>, vector<5x64xf32>
    %c20_233 = arith.constant 20 : index
    %c256_234 = arith.constant 256 : index
    %170 = vector.load %arg11[%c20_233, %c256_234] : memref<50x1024xf32, #tpu.memory_space<vmem>>, vector<5x64xf32>
    tpu.vector_store %arg11[%c20_233, %c256_234], %169 {strides = array<i32>} : memref<50x1024xf32, #tpu.memory_space<vmem>>, vector<5x64xf32>,
    %c150_235 = arith.constant 150 : index
    %c0_236 = arith.constant 0 : index
    %171 = vector.load %arg10[%c150_235, %c0_236] : memref<338x64xf32, #tpu.memory_space<vmem>>, vector<5x64xf32>
    %c20_237 = arith.constant 20 : index
    %c320_238 = arith.constant 320 : index
    %172 = vector.load %arg11[%c20_237, %c320_238] : memref<50x1024xf32, #tpu.memory_space<vmem>>, vector<5x64xf32>
    tpu.vector_store %arg11[%c20_237, %c320_238], %171 {strides = array<i32>} : memref<50x1024xf32, #tpu.memory_space<vmem>>, vector<5x64xf32>,
    %c144_239 = arith.constant 144 : index
    %c0_240 = arith.constant 0 : index
    %173 = vector.load %arg10[%c144_239, %c0_240] : memref<338x64xf32, #tpu.memory_space<vmem>>, vector<5x64xf32>
    %c20_241 = arith.constant 20 : index
    %c384_242 = arith.constant 384 : index
    %174 = vector.load %arg11[%c20_241, %c384_242] : memref<50x1024xf32, #tpu.memory_space<vmem>>, vector<5x64xf32>
    tpu.vector_store %arg11[%c20_241, %c384_242], %173 {strides = array<i32>} : memref<50x1024xf32, #tpu.memory_space<vmem>>, vector<5x64xf32>,
    %c151_243 = arith.constant 151 : index
    %c0_244 = arith.constant 0 : index
    %175 = vector.load %arg10[%c151_243, %c0_244] : memref<338x64xf32, #tpu.memory_space<vmem>>, vector<5x64xf32>
    %c20_245 = arith.constant 20 : index
    %c448_246 = arith.constant 448 : index
    %176 = vector.load %arg11[%c20_245, %c448_246] : memref<50x1024xf32, #tpu.memory_space<vmem>>, vector<5x64xf32>
    tpu.vector_store %arg11[%c20_245, %c448_246], %175 {strides = array<i32>} : memref<50x1024xf32, #tpu.memory_space<vmem>>, vector<5x64xf32>,
    %c65 = arith.constant 65 : index
    %c0_247 = arith.constant 0 : index
    %177 = vector.load %arg10[%c65, %c0_247] : memref<338x64xf32, #tpu.memory_space<vmem>>, vector<5x64xf32>
    %c20_248 = arith.constant 20 : index
    %c512_249 = arith.constant 512 : index
    %178 = vector.load %arg11[%c20_248, %c512_249] : memref<50x1024xf32, #tpu.memory_space<vmem>>, vector<5x64xf32>
    tpu.vector_store %arg11[%c20_248, %c512_249], %177 {strides = array<i32>} : memref<50x1024xf32, #tpu.memory_space<vmem>>, vector<5x64xf32>,
    %c72 = arith.constant 72 : index
    %c0_250 = arith.constant 0 : index
    %179 = vector.load %arg10[%c72, %c0_250] : memref<338x64xf32, #tpu.memory_space<vmem>>, vector<5x64xf32>
    %c20_251 = arith.constant 20 : index
    %c576_252 = arith.constant 576 : index
    %180 = vector.load %arg11[%c20_251, %c576_252] : memref<50x1024xf32, #tpu.memory_space<vmem>>, vector<5x64xf32>
    tpu.vector_store %arg11[%c20_251, %c576_252], %179 {strides = array<i32>} : memref<50x1024xf32, #tpu.memory_space<vmem>>, vector<5x64xf32>,
    %c66 = arith.constant 66 : index
    %c0_253 = arith.constant 0 : index
    %181 = vector.load %arg10[%c66, %c0_253] : memref<338x64xf32, #tpu.memory_space<vmem>>, vector<5x64xf32>
    %c20_254 = arith.constant 20 : index
    %c640_255 = arith.constant 640 : index
    %182 = vector.load %arg11[%c20_254, %c640_255] : memref<50x1024xf32, #tpu.memory_space<vmem>>, vector<5x64xf32>
    tpu.vector_store %arg11[%c20_254, %c640_255], %181 {strides = array<i32>} : memref<50x1024xf32, #tpu.memory_space<vmem>>, vector<5x64xf32>,
    %c73 = arith.constant 73 : index
    %c0_256 = arith.constant 0 : index
    %183 = vector.load %arg10[%c73, %c0_256] : memref<338x64xf32, #tpu.memory_space<vmem>>, vector<5x64xf32>
    %c20_257 = arith.constant 20 : index
    %c704_258 = arith.constant 704 : index
    %184 = vector.load %arg11[%c20_257, %c704_258] : memref<50x1024xf32, #tpu.memory_space<vmem>>, vector<5x64xf32>
    tpu.vector_store %arg11[%c20_257, %c704_258], %183 {strides = array<i32>} : memref<50x1024xf32, #tpu.memory_space<vmem>>, vector<5x64xf32>,
    %c156 = arith.constant 156 : index
    %c0_259 = arith.constant 0 : index
    %185 = vector.load %arg10[%c156, %c0_259] : memref<338x64xf32, #tpu.memory_space<vmem>>, vector<5x64xf32>
    %c20_260 = arith.constant 20 : index
    %c768_261 = arith.constant 768 : index
    %186 = vector.load %arg11[%c20_260, %c768_261] : memref<50x1024xf32, #tpu.memory_space<vmem>>, vector<5x64xf32>
    tpu.vector_store %arg11[%c20_260, %c768_261], %185 {strides = array<i32>} : memref<50x1024xf32, #tpu.memory_space<vmem>>, vector<5x64xf32>,
    %c163 = arith.constant 163 : index
    %c0_262 = arith.constant 0 : index
    %187 = vector.load %arg10[%c163, %c0_262] : memref<338x64xf32, #tpu.memory_space<vmem>>, vector<5x64xf32>
    %c20_263 = arith.constant 20 : index
    %c832_264 = arith.constant 832 : index
    %188 = vector.load %arg11[%c20_263, %c832_264] : memref<50x1024xf32, #tpu.memory_space<vmem>>, vector<5x64xf32>
    tpu.vector_store %arg11[%c20_263, %c832_264], %187 {strides = array<i32>} : memref<50x1024xf32, #tpu.memory_space<vmem>>, vector<5x64xf32>,
    %c157 = arith.constant 157 : index
    %c0_265 = arith.constant 0 : index
    %189 = vector.load %arg10[%c157, %c0_265] : memref<338x64xf32, #tpu.memory_space<vmem>>, vector<5x64xf32>
    %c20_266 = arith.constant 20 : index
    %c896_267 = arith.constant 896 : index
    %190 = vector.load %arg11[%c20_266, %c896_267] : memref<50x1024xf32, #tpu.memory_space<vmem>>, vector<5x64xf32>
    tpu.vector_store %arg11[%c20_266, %c896_267], %189 {strides = array<i32>} : memref<50x1024xf32, #tpu.memory_space<vmem>>, vector<5x64xf32>,
    %c164 = arith.constant 164 : index
    %c0_268 = arith.constant 0 : index
    %191 = vector.load %arg10[%c164, %c0_268] : memref<338x64xf32, #tpu.memory_space<vmem>>, vector<5x64xf32>
    %c20_269 = arith.constant 20 : index
    %c960_270 = arith.constant 960 : index
    %192 = vector.load %arg11[%c20_269, %c960_270] : memref<50x1024xf32, #tpu.memory_space<vmem>>, vector<5x64xf32>
    tpu.vector_store %arg11[%c20_269, %c960_270], %191 {strides = array<i32>} : memref<50x1024xf32, #tpu.memory_space<vmem>>, vector<5x64xf32>,
    %c169 = arith.constant 169 : index
    %c0_271 = arith.constant 0 : index
    %193 = vector.load %arg10[%c169, %c0_271] : memref<338x64xf32, #tpu.memory_space<vmem>>, vector<5x64xf32>
    %c25 = arith.constant 25 : index
    %c0_272 = arith.constant 0 : index
    %194 = vector.load %arg11[%c25, %c0_272] : memref<50x1024xf32, #tpu.memory_space<vmem>>, vector<5x64xf32>
    tpu.vector_store %arg11[%c25, %c0_272], %193 {strides = array<i32>} : memref<50x1024xf32, #tpu.memory_space<vmem>>, vector<5x64xf32>,
    %c176 = arith.constant 176 : index
    %c0_273 = arith.constant 0 : index
    %195 = vector.load %arg10[%c176, %c0_273] : memref<338x64xf32, #tpu.memory_space<vmem>>, vector<5x64xf32>
    %c25_274 = arith.constant 25 : index
    %c64_275 = arith.constant 64 : index
    %196 = vector.load %arg11[%c25_274, %c64_275] : memref<50x1024xf32, #tpu.memory_space<vmem>>, vector<5x64xf32>
    tpu.vector_store %arg11[%c25_274, %c64_275], %195 {strides = array<i32>} : memref<50x1024xf32, #tpu.memory_space<vmem>>, vector<5x64xf32>,
    %c170 = arith.constant 170 : index
    %c0_276 = arith.constant 0 : index
    %197 = vector.load %arg10[%c170, %c0_276] : memref<338x64xf32, #tpu.memory_space<vmem>>, vector<5x64xf32>
    %c25_277 = arith.constant 25 : index
    %c128_278 = arith.constant 128 : index
    %198 = vector.load %arg11[%c25_277, %c128_278] : memref<50x1024xf32, #tpu.memory_space<vmem>>, vector<5x64xf32>
    tpu.vector_store %arg11[%c25_277, %c128_278], %197 {strides = array<i32>} : memref<50x1024xf32, #tpu.memory_space<vmem>>, vector<5x64xf32>,
    %c177 = arith.constant 177 : index
    %c0_279 = arith.constant 0 : index
    %199 = vector.load %arg10[%c177, %c0_279] : memref<338x64xf32, #tpu.memory_space<vmem>>, vector<5x64xf32>
    %c25_280 = arith.constant 25 : index
    %c192_281 = arith.constant 192 : index
    %200 = vector.load %arg11[%c25_280, %c192_281] : memref<50x1024xf32, #tpu.memory_space<vmem>>, vector<5x64xf32>
    tpu.vector_store %arg11[%c25_280, %c192_281], %199 {strides = array<i32>} : memref<50x1024xf32, #tpu.memory_space<vmem>>, vector<5x64xf32>,
    %c260 = arith.constant 260 : index
    %c0_282 = arith.constant 0 : index
    %201 = vector.load %arg10[%c260, %c0_282] : memref<338x64xf32, #tpu.memory_space<vmem>>, vector<5x64xf32>
    %c25_283 = arith.constant 25 : index
    %c256_284 = arith.constant 256 : index
    %202 = vector.load %arg11[%c25_283, %c256_284] : memref<50x1024xf32, #tpu.memory_space<vmem>>, vector<5x64xf32>
    tpu.vector_store %arg11[%c25_283, %c256_284], %201 {strides = array<i32>} : memref<50x1024xf32, #tpu.memory_space<vmem>>, vector<5x64xf32>,
    %c267 = arith.constant 267 : index
    %c0_285 = arith.constant 0 : index
    %203 = vector.load %arg10[%c267, %c0_285] : memref<338x64xf32, #tpu.memory_space<vmem>>, vector<5x64xf32>
    %c25_286 = arith.constant 25 : index
    %c320_287 = arith.constant 320 : index
    %204 = vector.load %arg11[%c25_286, %c320_287] : memref<50x1024xf32, #tpu.memory_space<vmem>>, vector<5x64xf32>
    tpu.vector_store %arg11[%c25_286, %c320_287], %203 {strides = array<i32>} : memref<50x1024xf32, #tpu.memory_space<vmem>>, vector<5x64xf32>,
    %c261 = arith.constant 261 : index
    %c0_288 = arith.constant 0 : index
    %205 = vector.load %arg10[%c261, %c0_288] : memref<338x64xf32, #tpu.memory_space<vmem>>, vector<5x64xf32>
    %c25_289 = arith.constant 25 : index
    %c384_290 = arith.constant 384 : index
    %206 = vector.load %arg11[%c25_289, %c384_290] : memref<50x1024xf32, #tpu.memory_space<vmem>>, vector<5x64xf32>
    tpu.vector_store %arg11[%c25_289, %c384_290], %205 {strides = array<i32>} : memref<50x1024xf32, #tpu.memory_space<vmem>>, vector<5x64xf32>,
    %c268 = arith.constant 268 : index
    %c0_291 = arith.constant 0 : index
    %207 = vector.load %arg10[%c268, %c0_291] : memref<338x64xf32, #tpu.memory_space<vmem>>, vector<5x64xf32>
    %c25_292 = arith.constant 25 : index
    %c448_293 = arith.constant 448 : index
    %208 = vector.load %arg11[%c25_292, %c448_293] : memref<50x1024xf32, #tpu.memory_space<vmem>>, vector<5x64xf32>
    tpu.vector_store %arg11[%c25_292, %c448_293], %207 {strides = array<i32>} : memref<50x1024xf32, #tpu.memory_space<vmem>>, vector<5x64xf32>,
    %c182 = arith.constant 182 : index
    %c0_294 = arith.constant 0 : index
    %209 = vector.load %arg10[%c182, %c0_294] : memref<338x64xf32, #tpu.memory_space<vmem>>, vector<5x64xf32>
    %c25_295 = arith.constant 25 : index
    %c512_296 = arith.constant 512 : index
    %210 = vector.load %arg11[%c25_295, %c512_296] : memref<50x1024xf32, #tpu.memory_space<vmem>>, vector<5x64xf32>
    tpu.vector_store %arg11[%c25_295, %c512_296], %209 {strides = array<i32>} : memref<50x1024xf32, #tpu.memory_space<vmem>>, vector<5x64xf32>,
    %c189 = arith.constant 189 : index
    %c0_297 = arith.constant 0 : index
    %211 = vector.load %arg10[%c189, %c0_297] : memref<338x64xf32, #tpu.memory_space<vmem>>, vector<5x64xf32>
    %c25_298 = arith.constant 25 : index
    %c576_299 = arith.constant 576 : index
    %212 = vector.load %arg11[%c25_298, %c576_299] : memref<50x1024xf32, #tpu.memory_space<vmem>>, vector<5x64xf32>
    tpu.vector_store %arg11[%c25_298, %c576_299], %211 {strides = array<i32>} : memref<50x1024xf32, #tpu.memory_space<vmem>>, vector<5x64xf32>,
    %c183 = arith.constant 183 : index
    %c0_300 = arith.constant 0 : index
    %213 = vector.load %arg10[%c183, %c0_300] : memref<338x64xf32, #tpu.memory_space<vmem>>, vector<5x64xf32>
    %c25_301 = arith.constant 25 : index
    %c640_302 = arith.constant 640 : index
    %214 = vector.load %arg11[%c25_301, %c640_302] : memref<50x1024xf32, #tpu.memory_space<vmem>>, vector<5x64xf32>
    tpu.vector_store %arg11[%c25_301, %c640_302], %213 {strides = array<i32>} : memref<50x1024xf32, #tpu.memory_space<vmem>>, vector<5x64xf32>,
    %c190 = arith.constant 190 : index
    %c0_303 = arith.constant 0 : index
    %215 = vector.load %arg10[%c190, %c0_303] : memref<338x64xf32, #tpu.memory_space<vmem>>, vector<5x64xf32>
    %c25_304 = arith.constant 25 : index
    %c704_305 = arith.constant 704 : index
    %216 = vector.load %arg11[%c25_304, %c704_305] : memref<50x1024xf32, #tpu.memory_space<vmem>>, vector<5x64xf32>
    tpu.vector_store %arg11[%c25_304, %c704_305], %215 {strides = array<i32>} : memref<50x1024xf32, #tpu.memory_space<vmem>>, vector<5x64xf32>,
    %c273 = arith.constant 273 : index
    %c0_306 = arith.constant 0 : index
    %217 = vector.load %arg10[%c273, %c0_306] : memref<338x64xf32, #tpu.memory_space<vmem>>, vector<5x64xf32>
    %c25_307 = arith.constant 25 : index
    %c768_308 = arith.constant 768 : index
    %218 = vector.load %arg11[%c25_307, %c768_308] : memref<50x1024xf32, #tpu.memory_space<vmem>>, vector<5x64xf32>
    tpu.vector_store %arg11[%c25_307, %c768_308], %217 {strides = array<i32>} : memref<50x1024xf32, #tpu.memory_space<vmem>>, vector<5x64xf32>,
    %c280 = arith.constant 280 : index
    %c0_309 = arith.constant 0 : index
    %219 = vector.load %arg10[%c280, %c0_309] : memref<338x64xf32, #tpu.memory_space<vmem>>, vector<5x64xf32>
    %c25_310 = arith.constant 25 : index
    %c832_311 = arith.constant 832 : index
    %220 = vector.load %arg11[%c25_310, %c832_311] : memref<50x1024xf32, #tpu.memory_space<vmem>>, vector<5x64xf32>
    tpu.vector_store %arg11[%c25_310, %c832_311], %219 {strides = array<i32>} : memref<50x1024xf32, #tpu.memory_space<vmem>>, vector<5x64xf32>,
    %c274 = arith.constant 274 : index
    %c0_312 = arith.constant 0 : index
    %221 = vector.load %arg10[%c274, %c0_312] : memref<338x64xf32, #tpu.memory_space<vmem>>, vector<5x64xf32>
    %c25_313 = arith.constant 25 : index
    %c896_314 = arith.constant 896 : index
    %222 = vector.load %arg11[%c25_313, %c896_314] : memref<50x1024xf32, #tpu.memory_space<vmem>>, vector<5x64xf32>
    tpu.vector_store %arg11[%c25_313, %c896_314], %221 {strides = array<i32>} : memref<50x1024xf32, #tpu.memory_space<vmem>>, vector<5x64xf32>,
    %c281 = arith.constant 281 : index
    %c0_315 = arith.constant 0 : index
    %223 = vector.load %arg10[%c281, %c0_315] : memref<338x64xf32, #tpu.memory_space<vmem>>, vector<5x64xf32>
    %c25_316 = arith.constant 25 : index
    %c960_317 = arith.constant 960 : index
    %224 = vector.load %arg11[%c25_316, %c960_317] : memref<50x1024xf32, #tpu.memory_space<vmem>>, vector<5x64xf32>
    tpu.vector_store %arg11[%c25_316, %c960_317], %223 {strides = array<i32>} : memref<50x1024xf32, #tpu.memory_space<vmem>>, vector<5x64xf32>,
    %c182_318 = arith.constant 182 : index
    %c0_319 = arith.constant 0 : index
    %225 = vector.load %arg10[%c182_318, %c0_319] : memref<338x64xf32, #tpu.memory_space<vmem>>, vector<5x64xf32>
    %c30 = arith.constant 30 : index
    %c0_320 = arith.constant 0 : index
    %226 = vector.load %arg11[%c30, %c0_320] : memref<50x1024xf32, #tpu.memory_space<vmem>>, vector<5x64xf32>
    tpu.vector_store %arg11[%c30, %c0_320], %225 {strides = array<i32>} : memref<50x1024xf32, #tpu.memory_space<vmem>>, vector<5x64xf32>,
    %c189_321 = arith.constant 189 : index
    %c0_322 = arith.constant 0 : index
    %227 = vector.load %arg10[%c189_321, %c0_322] : memref<338x64xf32, #tpu.memory_space<vmem>>, vector<5x64xf32>
    %c30_323 = arith.constant 30 : index
    %c64_324 = arith.constant 64 : index
    %228 = vector.load %arg11[%c30_323, %c64_324] : memref<50x1024xf32, #tpu.memory_space<vmem>>, vector<5x64xf32>
    tpu.vector_store %arg11[%c30_323, %c64_324], %227 {strides = array<i32>} : memref<50x1024xf32, #tpu.memory_space<vmem>>, vector<5x64xf32>,
    %c183_325 = arith.constant 183 : index
    %c0_326 = arith.constant 0 : index
    %229 = vector.load %arg10[%c183_325, %c0_326] : memref<338x64xf32, #tpu.memory_space<vmem>>, vector<5x64xf32>
    %c30_327 = arith.constant 30 : index
    %c128_328 = arith.constant 128 : index
    %230 = vector.load %arg11[%c30_327, %c128_328] : memref<50x1024xf32, #tpu.memory_space<vmem>>, vector<5x64xf32>
    tpu.vector_store %arg11[%c30_327, %c128_328], %229 {strides = array<i32>} : memref<50x1024xf32, #tpu.memory_space<vmem>>, vector<5x64xf32>,
    %c190_329 = arith.constant 190 : index
    %c0_330 = arith.constant 0 : index
    %231 = vector.load %arg10[%c190_329, %c0_330] : memref<338x64xf32, #tpu.memory_space<vmem>>, vector<5x64xf32>
    %c30_331 = arith.constant 30 : index
    %c192_332 = arith.constant 192 : index
    %232 = vector.load %arg11[%c30_331, %c192_332] : memref<50x1024xf32, #tpu.memory_space<vmem>>, vector<5x64xf32>
    tpu.vector_store %arg11[%c30_331, %c192_332], %231 {strides = array<i32>} : memref<50x1024xf32, #tpu.memory_space<vmem>>, vector<5x64xf32>,
    %c273_333 = arith.constant 273 : index
    %c0_334 = arith.constant 0 : index
    %233 = vector.load %arg10[%c273_333, %c0_334] : memref<338x64xf32, #tpu.memory_space<vmem>>, vector<5x64xf32>
    %c30_335 = arith.constant 30 : index
    %c256_336 = arith.constant 256 : index
    %234 = vector.load %arg11[%c30_335, %c256_336] : memref<50x1024xf32, #tpu.memory_space<vmem>>, vector<5x64xf32>
    tpu.vector_store %arg11[%c30_335, %c256_336], %233 {strides = array<i32>} : memref<50x1024xf32, #tpu.memory_space<vmem>>, vector<5x64xf32>,
    %c280_337 = arith.constant 280 : index
    %c0_338 = arith.constant 0 : index
    %235 = vector.load %arg10[%c280_337, %c0_338] : memref<338x64xf32, #tpu.memory_space<vmem>>, vector<5x64xf32>
    %c30_339 = arith.constant 30 : index
    %c320_340 = arith.constant 320 : index
    %236 = vector.load %arg11[%c30_339, %c320_340] : memref<50x1024xf32, #tpu.memory_space<vmem>>, vector<5x64xf32>
    tpu.vector_store %arg11[%c30_339, %c320_340], %235 {strides = array<i32>} : memref<50x1024xf32, #tpu.memory_space<vmem>>, vector<5x64xf32>,
    %c274_341 = arith.constant 274 : index
    %c0_342 = arith.constant 0 : index
    %237 = vector.load %arg10[%c274_341, %c0_342] : memref<338x64xf32, #tpu.memory_space<vmem>>, vector<5x64xf32>
    %c30_343 = arith.constant 30 : index
    %c384_344 = arith.constant 384 : index
    %238 = vector.load %arg11[%c30_343, %c384_344] : memref<50x1024xf32, #tpu.memory_space<vmem>>, vector<5x64xf32>
    tpu.vector_store %arg11[%c30_343, %c384_344], %237 {strides = array<i32>} : memref<50x1024xf32, #tpu.memory_space<vmem>>, vector<5x64xf32>,
    %c281_345 = arith.constant 281 : index
    %c0_346 = arith.constant 0 : index
    %239 = vector.load %arg10[%c281_345, %c0_346] : memref<338x64xf32, #tpu.memory_space<vmem>>, vector<5x64xf32>
    %c30_347 = arith.constant 30 : index
    %c448_348 = arith.constant 448 : index
    %240 = vector.load %arg11[%c30_347, %c448_348] : memref<50x1024xf32, #tpu.memory_space<vmem>>, vector<5x64xf32>
    tpu.vector_store %arg11[%c30_347, %c448_348], %239 {strides = array<i32>} : memref<50x1024xf32, #tpu.memory_space<vmem>>, vector<5x64xf32>,
    %c195 = arith.constant 195 : index
    %c0_349 = arith.constant 0 : index
    %241 = vector.load %arg10[%c195, %c0_349] : memref<338x64xf32, #tpu.memory_space<vmem>>, vector<5x64xf32>
    %c30_350 = arith.constant 30 : index
    %c512_351 = arith.constant 512 : index
    %242 = vector.load %arg11[%c30_350, %c512_351] : memref<50x1024xf32, #tpu.memory_space<vmem>>, vector<5x64xf32>
    tpu.vector_store %arg11[%c30_350, %c512_351], %241 {strides = array<i32>} : memref<50x1024xf32, #tpu.memory_space<vmem>>, vector<5x64xf32>,
    %c202 = arith.constant 202 : index
    %c0_352 = arith.constant 0 : index
    %243 = vector.load %arg10[%c202, %c0_352] : memref<338x64xf32, #tpu.memory_space<vmem>>, vector<5x64xf32>
    %c30_353 = arith.constant 30 : index
    %c576_354 = arith.constant 576 : index
    %244 = vector.load %arg11[%c30_353, %c576_354] : memref<50x1024xf32, #tpu.memory_space<vmem>>, vector<5x64xf32>
    tpu.vector_store %arg11[%c30_353, %c576_354], %243 {strides = array<i32>} : memref<50x1024xf32, #tpu.memory_space<vmem>>, vector<5x64xf32>,
    %c196 = arith.constant 196 : index
    %c0_355 = arith.constant 0 : index
    %245 = vector.load %arg10[%c196, %c0_355] : memref<338x64xf32, #tpu.memory_space<vmem>>, vector<5x64xf32>
    %c30_356 = arith.constant 30 : index
    %c640_357 = arith.constant 640 : index
    %246 = vector.load %arg11[%c30_356, %c640_357] : memref<50x1024xf32, #tpu.memory_space<vmem>>, vector<5x64xf32>
    tpu.vector_store %arg11[%c30_356, %c640_357], %245 {strides = array<i32>} : memref<50x1024xf32, #tpu.memory_space<vmem>>, vector<5x64xf32>,
    %c203 = arith.constant 203 : index
    %c0_358 = arith.constant 0 : index
    %247 = vector.load %arg10[%c203, %c0_358] : memref<338x64xf32, #tpu.memory_space<vmem>>, vector<5x64xf32>
    %c30_359 = arith.constant 30 : index
    %c704_360 = arith.constant 704 : index
    %248 = vector.load %arg11[%c30_359, %c704_360] : memref<50x1024xf32, #tpu.memory_space<vmem>>, vector<5x64xf32>
    tpu.vector_store %arg11[%c30_359, %c704_360], %247 {strides = array<i32>} : memref<50x1024xf32, #tpu.memory_space<vmem>>, vector<5x64xf32>,
    %c286 = arith.constant 286 : index
    %c0_361 = arith.constant 0 : index
    %249 = vector.load %arg10[%c286, %c0_361] : memref<338x64xf32, #tpu.memory_space<vmem>>, vector<5x64xf32>
    %c30_362 = arith.constant 30 : index
    %c768_363 = arith.constant 768 : index
    %250 = vector.load %arg11[%c30_362, %c768_363] : memref<50x1024xf32, #tpu.memory_space<vmem>>, vector<5x64xf32>
    tpu.vector_store %arg11[%c30_362, %c768_363], %249 {strides = array<i32>} : memref<50x1024xf32, #tpu.memory_space<vmem>>, vector<5x64xf32>,
    %c293 = arith.constant 293 : index
    %c0_364 = arith.constant 0 : index
    %251 = vector.load %arg10[%c293, %c0_364] : memref<338x64xf32, #tpu.memory_space<vmem>>, vector<5x64xf32>
    %c30_365 = arith.constant 30 : index
    %c832_366 = arith.constant 832 : index
    %252 = vector.load %arg11[%c30_365, %c832_366] : memref<50x1024xf32, #tpu.memory_space<vmem>>, vector<5x64xf32>
    tpu.vector_store %arg11[%c30_365, %c832_366], %251 {strides = array<i32>} : memref<50x1024xf32, #tpu.memory_space<vmem>>, vector<5x64xf32>,
    %c287 = arith.constant 287 : index
    %c0_367 = arith.constant 0 : index
    %253 = vector.load %arg10[%c287, %c0_367] : memref<338x64xf32, #tpu.memory_space<vmem>>, vector<5x64xf32>
    %c30_368 = arith.constant 30 : index
    %c896_369 = arith.constant 896 : index
    %254 = vector.load %arg11[%c30_368, %c896_369] : memref<50x1024xf32, #tpu.memory_space<vmem>>, vector<5x64xf32>
    tpu.vector_store %arg11[%c30_368, %c896_369], %253 {strides = array<i32>} : memref<50x1024xf32, #tpu.memory_space<vmem>>, vector<5x64xf32>,
    %c294 = arith.constant 294 : index
    %c0_370 = arith.constant 0 : index
    %255 = vector.load %arg10[%c294, %c0_370] : memref<338x64xf32, #tpu.memory_space<vmem>>, vector<5x64xf32>
    %c30_371 = arith.constant 30 : index
    %c960_372 = arith.constant 960 : index
    %256 = vector.load %arg11[%c30_371, %c960_372] : memref<50x1024xf32, #tpu.memory_space<vmem>>, vector<5x64xf32>
    tpu.vector_store %arg11[%c30_371, %c960_372], %255 {strides = array<i32>} : memref<50x1024xf32, #tpu.memory_space<vmem>>, vector<5x64xf32>,
    %c195_373 = arith.constant 195 : index
    %c0_374 = arith.constant 0 : index
    %257 = vector.load %arg10[%c195_373, %c0_374] : memref<338x64xf32, #tpu.memory_space<vmem>>, vector<5x64xf32>
    %c35 = arith.constant 35 : index
    %c0_375 = arith.constant 0 : index
    %258 = vector.load %arg11[%c35, %c0_375] : memref<50x1024xf32, #tpu.memory_space<vmem>>, vector<5x64xf32>
    tpu.vector_store %arg11[%c35, %c0_375], %257 {strides = array<i32>} : memref<50x1024xf32, #tpu.memory_space<vmem>>, vector<5x64xf32>,
    %c202_376 = arith.constant 202 : index
    %c0_377 = arith.constant 0 : index
    %259 = vector.load %arg10[%c202_376, %c0_377] : memref<338x64xf32, #tpu.memory_space<vmem>>, vector<5x64xf32>
    %c35_378 = arith.constant 35 : index
    %c64_379 = arith.constant 64 : index
    %260 = vector.load %arg11[%c35_378, %c64_379] : memref<50x1024xf32, #tpu.memory_space<vmem>>, vector<5x64xf32>
    tpu.vector_store %arg11[%c35_378, %c64_379], %259 {strides = array<i32>} : memref<50x1024xf32, #tpu.memory_space<vmem>>, vector<5x64xf32>,
    %c196_380 = arith.constant 196 : index
    %c0_381 = arith.constant 0 : index
    %261 = vector.load %arg10[%c196_380, %c0_381] : memref<338x64xf32, #tpu.memory_space<vmem>>, vector<5x64xf32>
    %c35_382 = arith.constant 35 : index
    %c128_383 = arith.constant 128 : index
    %262 = vector.load %arg11[%c35_382, %c128_383] : memref<50x1024xf32, #tpu.memory_space<vmem>>, vector<5x64xf32>
    tpu.vector_store %arg11[%c35_382, %c128_383], %261 {strides = array<i32>} : memref<50x1024xf32, #tpu.memory_space<vmem>>, vector<5x64xf32>,
    %c203_384 = arith.constant 203 : index
    %c0_385 = arith.constant 0 : index
    %263 = vector.load %arg10[%c203_384, %c0_385] : memref<338x64xf32, #tpu.memory_space<vmem>>, vector<5x64xf32>
    %c35_386 = arith.constant 35 : index
    %c192_387 = arith.constant 192 : index
    %264 = vector.load %arg11[%c35_386, %c192_387] : memref<50x1024xf32, #tpu.memory_space<vmem>>, vector<5x64xf32>
    tpu.vector_store %arg11[%c35_386, %c192_387], %263 {strides = array<i32>} : memref<50x1024xf32, #tpu.memory_space<vmem>>, vector<5x64xf32>,
    %c286_388 = arith.constant 286 : index
    %c0_389 = arith.constant 0 : index
    %265 = vector.load %arg10[%c286_388, %c0_389] : memref<338x64xf32, #tpu.memory_space<vmem>>, vector<5x64xf32>
    %c35_390 = arith.constant 35 : index
    %c256_391 = arith.constant 256 : index
    %266 = vector.load %arg11[%c35_390, %c256_391] : memref<50x1024xf32, #tpu.memory_space<vmem>>, vector<5x64xf32>
    tpu.vector_store %arg11[%c35_390, %c256_391], %265 {strides = array<i32>} : memref<50x1024xf32, #tpu.memory_space<vmem>>, vector<5x64xf32>,
    %c293_392 = arith.constant 293 : index
    %c0_393 = arith.constant 0 : index
    %267 = vector.load %arg10[%c293_392, %c0_393] : memref<338x64xf32, #tpu.memory_space<vmem>>, vector<5x64xf32>
    %c35_394 = arith.constant 35 : index
    %c320_395 = arith.constant 320 : index
    %268 = vector.load %arg11[%c35_394, %c320_395] : memref<50x1024xf32, #tpu.memory_space<vmem>>, vector<5x64xf32>
    tpu.vector_store %arg11[%c35_394, %c320_395], %267 {strides = array<i32>} : memref<50x1024xf32, #tpu.memory_space<vmem>>, vector<5x64xf32>,
    %c287_396 = arith.constant 287 : index
    %c0_397 = arith.constant 0 : index
    %269 = vector.load %arg10[%c287_396, %c0_397] : memref<338x64xf32, #tpu.memory_space<vmem>>, vector<5x64xf32>
    %c35_398 = arith.constant 35 : index
    %c384_399 = arith.constant 384 : index
    %270 = vector.load %arg11[%c35_398, %c384_399] : memref<50x1024xf32, #tpu.memory_space<vmem>>, vector<5x64xf32>
    tpu.vector_store %arg11[%c35_398, %c384_399], %269 {strides = array<i32>} : memref<50x1024xf32, #tpu.memory_space<vmem>>, vector<5x64xf32>,
    %c294_400 = arith.constant 294 : index
    %c0_401 = arith.constant 0 : index
    %271 = vector.load %arg10[%c294_400, %c0_401] : memref<338x64xf32, #tpu.memory_space<vmem>>, vector<5x64xf32>
    %c35_402 = arith.constant 35 : index
    %c448_403 = arith.constant 448 : index
    %272 = vector.load %arg11[%c35_402, %c448_403] : memref<50x1024xf32, #tpu.memory_space<vmem>>, vector<5x64xf32>
    tpu.vector_store %arg11[%c35_402, %c448_403], %271 {strides = array<i32>} : memref<50x1024xf32, #tpu.memory_space<vmem>>, vector<5x64xf32>,
    %c208 = arith.constant 208 : index
    %c0_404 = arith.constant 0 : index
    %273 = vector.load %arg10[%c208, %c0_404] : memref<338x64xf32, #tpu.memory_space<vmem>>, vector<5x64xf32>
    %c35_405 = arith.constant 35 : index
    %c512_406 = arith.constant 512 : index
    %274 = vector.load %arg11[%c35_405, %c512_406] : memref<50x1024xf32, #tpu.memory_space<vmem>>, vector<5x64xf32>
    tpu.vector_store %arg11[%c35_405, %c512_406], %273 {strides = array<i32>} : memref<50x1024xf32, #tpu.memory_space<vmem>>, vector<5x64xf32>,
    %c215 = arith.constant 215 : index
    %c0_407 = arith.constant 0 : index
    %275 = vector.load %arg10[%c215, %c0_407] : memref<338x64xf32, #tpu.memory_space<vmem>>, vector<5x64xf32>
    %c35_408 = arith.constant 35 : index
    %c576_409 = arith.constant 576 : index
    %276 = vector.load %arg11[%c35_408, %c576_409] : memref<50x1024xf32, #tpu.memory_space<vmem>>, vector<5x64xf32>
    tpu.vector_store %arg11[%c35_408, %c576_409], %275 {strides = array<i32>} : memref<50x1024xf32, #tpu.memory_space<vmem>>, vector<5x64xf32>,
    %c209 = arith.constant 209 : index
    %c0_410 = arith.constant 0 : index
    %277 = vector.load %arg10[%c209, %c0_410] : memref<338x64xf32, #tpu.memory_space<vmem>>, vector<5x64xf32>
    %c35_411 = arith.constant 35 : index
    %c640_412 = arith.constant 640 : index
    %278 = vector.load %arg11[%c35_411, %c640_412] : memref<50x1024xf32, #tpu.memory_space<vmem>>, vector<5x64xf32>
    tpu.vector_store %arg11[%c35_411, %c640_412], %277 {strides = array<i32>} : memref<50x1024xf32, #tpu.memory_space<vmem>>, vector<5x64xf32>,
    %c216 = arith.constant 216 : index
    %c0_413 = arith.constant 0 : index
    %279 = vector.load %arg10[%c216, %c0_413] : memref<338x64xf32, #tpu.memory_space<vmem>>, vector<5x64xf32>
    %c35_414 = arith.constant 35 : index
    %c704_415 = arith.constant 704 : index
    %280 = vector.load %arg11[%c35_414, %c704_415] : memref<50x1024xf32, #tpu.memory_space<vmem>>, vector<5x64xf32>
    tpu.vector_store %arg11[%c35_414, %c704_415], %279 {strides = array<i32>} : memref<50x1024xf32, #tpu.memory_space<vmem>>, vector<5x64xf32>,
    %c299 = arith.constant 299 : index
    %c0_416 = arith.constant 0 : index
    %281 = vector.load %arg10[%c299, %c0_416] : memref<338x64xf32, #tpu.memory_space<vmem>>, vector<5x64xf32>
    %c35_417 = arith.constant 35 : index
    %c768_418 = arith.constant 768 : index
    %282 = vector.load %arg11[%c35_417, %c768_418] : memref<50x1024xf32, #tpu.memory_space<vmem>>, vector<5x64xf32>
    tpu.vector_store %arg11[%c35_417, %c768_418], %281 {strides = array<i32>} : memref<50x1024xf32, #tpu.memory_space<vmem>>, vector<5x64xf32>,
    %c306 = arith.constant 306 : index
    %c0_419 = arith.constant 0 : index
    %283 = vector.load %arg10[%c306, %c0_419] : memref<338x64xf32, #tpu.memory_space<vmem>>, vector<5x64xf32>
    %c35_420 = arith.constant 35 : index
    %c832_421 = arith.constant 832 : index
    %284 = vector.load %arg11[%c35_420, %c832_421] : memref<50x1024xf32, #tpu.memory_space<vmem>>, vector<5x64xf32>
    tpu.vector_store %arg11[%c35_420, %c832_421], %283 {strides = array<i32>} : memref<50x1024xf32, #tpu.memory_space<vmem>>, vector<5x64xf32>,
    %c300 = arith.constant 300 : index
    %c0_422 = arith.constant 0 : index
    %285 = vector.load %arg10[%c300, %c0_422] : memref<338x64xf32, #tpu.memory_space<vmem>>, vector<5x64xf32>
    %c35_423 = arith.constant 35 : index
    %c896_424 = arith.constant 896 : index
    %286 = vector.load %arg11[%c35_423, %c896_424] : memref<50x1024xf32, #tpu.memory_space<vmem>>, vector<5x64xf32>
    tpu.vector_store %arg11[%c35_423, %c896_424], %285 {strides = array<i32>} : memref<50x1024xf32, #tpu.memory_space<vmem>>, vector<5x64xf32>,
    %c307 = arith.constant 307 : index
    %c0_425 = arith.constant 0 : index
    %287 = vector.load %arg10[%c307, %c0_425] : memref<338x64xf32, #tpu.memory_space<vmem>>, vector<5x64xf32>
    %c35_426 = arith.constant 35 : index
    %c960_427 = arith.constant 960 : index
    %288 = vector.load %arg11[%c35_426, %c960_427] : memref<50x1024xf32, #tpu.memory_space<vmem>>, vector<5x64xf32>
    tpu.vector_store %arg11[%c35_426, %c960_427], %287 {strides = array<i32>} : memref<50x1024xf32, #tpu.memory_space<vmem>>, vector<5x64xf32>,
    %c208_428 = arith.constant 208 : index
    %c0_429 = arith.constant 0 : index
    %289 = vector.load %arg10[%c208_428, %c0_429] : memref<338x64xf32, #tpu.memory_space<vmem>>, vector<5x64xf32>
    %c40_430 = arith.constant 40 : index
    %c0_431 = arith.constant 0 : index
    %290 = vector.load %arg11[%c40_430, %c0_431] : memref<50x1024xf32, #tpu.memory_space<vmem>>, vector<5x64xf32>
    tpu.vector_store %arg11[%c40_430, %c0_431], %289 {strides = array<i32>} : memref<50x1024xf32, #tpu.memory_space<vmem>>, vector<5x64xf32>,
    %c215_432 = arith.constant 215 : index
    %c0_433 = arith.constant 0 : index
    %291 = vector.load %arg10[%c215_432, %c0_433] : memref<338x64xf32, #tpu.memory_space<vmem>>, vector<5x64xf32>
    %c40_434 = arith.constant 40 : index
    %c64_435 = arith.constant 64 : index
    %292 = vector.load %arg11[%c40_434, %c64_435] : memref<50x1024xf32, #tpu.memory_space<vmem>>, vector<5x64xf32>
    tpu.vector_store %arg11[%c40_434, %c64_435], %291 {strides = array<i32>} : memref<50x1024xf32, #tpu.memory_space<vmem>>, vector<5x64xf32>,
    %c209_436 = arith.constant 209 : index
    %c0_437 = arith.constant 0 : index
    %293 = vector.load %arg10[%c209_436, %c0_437] : memref<338x64xf32, #tpu.memory_space<vmem>>, vector<5x64xf32>
    %c40_438 = arith.constant 40 : index
    %c128_439 = arith.constant 128 : index
    %294 = vector.load %arg11[%c40_438, %c128_439] : memref<50x1024xf32, #tpu.memory_space<vmem>>, vector<5x64xf32>
    tpu.vector_store %arg11[%c40_438, %c128_439], %293 {strides = array<i32>} : memref<50x1024xf32, #tpu.memory_space<vmem>>, vector<5x64xf32>,
    %c216_440 = arith.constant 216 : index
    %c0_441 = arith.constant 0 : index
    %295 = vector.load %arg10[%c216_440, %c0_441] : memref<338x64xf32, #tpu.memory_space<vmem>>, vector<5x64xf32>
    %c40_442 = arith.constant 40 : index
    %c192_443 = arith.constant 192 : index
    %296 = vector.load %arg11[%c40_442, %c192_443] : memref<50x1024xf32, #tpu.memory_space<vmem>>, vector<5x64xf32>
    tpu.vector_store %arg11[%c40_442, %c192_443], %295 {strides = array<i32>} : memref<50x1024xf32, #tpu.memory_space<vmem>>, vector<5x64xf32>,
    %c299_444 = arith.constant 299 : index
    %c0_445 = arith.constant 0 : index
    %297 = vector.load %arg10[%c299_444, %c0_445] : memref<338x64xf32, #tpu.memory_space<vmem>>, vector<5x64xf32>
    %c40_446 = arith.constant 40 : index
    %c256_447 = arith.constant 256 : index
    %298 = vector.load %arg11[%c40_446, %c256_447] : memref<50x1024xf32, #tpu.memory_space<vmem>>, vector<5x64xf32>
    tpu.vector_store %arg11[%c40_446, %c256_447], %297 {strides = array<i32>} : memref<50x1024xf32, #tpu.memory_space<vmem>>, vector<5x64xf32>,
    %c306_448 = arith.constant 306 : index
    %c0_449 = arith.constant 0 : index
    %299 = vector.load %arg10[%c306_448, %c0_449] : memref<338x64xf32, #tpu.memory_space<vmem>>, vector<5x64xf32>
    %c40_450 = arith.constant 40 : index
    %c320_451 = arith.constant 320 : index
    %300 = vector.load %arg11[%c40_450, %c320_451] : memref<50x1024xf32, #tpu.memory_space<vmem>>, vector<5x64xf32>
    tpu.vector_store %arg11[%c40_450, %c320_451], %299 {strides = array<i32>} : memref<50x1024xf32, #tpu.memory_space<vmem>>, vector<5x64xf32>,
    %c300_452 = arith.constant 300 : index
    %c0_453 = arith.constant 0 : index
    %301 = vector.load %arg10[%c300_452, %c0_453] : memref<338x64xf32, #tpu.memory_space<vmem>>, vector<5x64xf32>
    %c40_454 = arith.constant 40 : index
    %c384_455 = arith.constant 384 : index
    %302 = vector.load %arg11[%c40_454, %c384_455] : memref<50x1024xf32, #tpu.memory_space<vmem>>, vector<5x64xf32>
    tpu.vector_store %arg11[%c40_454, %c384_455], %301 {strides = array<i32>} : memref<50x1024xf32, #tpu.memory_space<vmem>>, vector<5x64xf32>,
    %c307_456 = arith.constant 307 : index
    %c0_457 = arith.constant 0 : index
    %303 = vector.load %arg10[%c307_456, %c0_457] : memref<338x64xf32, #tpu.memory_space<vmem>>, vector<5x64xf32>
    %c40_458 = arith.constant 40 : index
    %c448_459 = arith.constant 448 : index
    %304 = vector.load %arg11[%c40_458, %c448_459] : memref<50x1024xf32, #tpu.memory_space<vmem>>, vector<5x64xf32>
    tpu.vector_store %arg11[%c40_458, %c448_459], %303 {strides = array<i32>} : memref<50x1024xf32, #tpu.memory_space<vmem>>, vector<5x64xf32>,
    %c221 = arith.constant 221 : index
    %c0_460 = arith.constant 0 : index
    %305 = vector.load %arg10[%c221, %c0_460] : memref<338x64xf32, #tpu.memory_space<vmem>>, vector<5x64xf32>
    %c40_461 = arith.constant 40 : index
    %c512_462 = arith.constant 512 : index
    %306 = vector.load %arg11[%c40_461, %c512_462] : memref<50x1024xf32, #tpu.memory_space<vmem>>, vector<5x64xf32>
    tpu.vector_store %arg11[%c40_461, %c512_462], %305 {strides = array<i32>} : memref<50x1024xf32, #tpu.memory_space<vmem>>, vector<5x64xf32>,
    %c228 = arith.constant 228 : index
    %c0_463 = arith.constant 0 : index
    %307 = vector.load %arg10[%c228, %c0_463] : memref<338x64xf32, #tpu.memory_space<vmem>>, vector<5x64xf32>
    %c40_464 = arith.constant 40 : index
    %c576_465 = arith.constant 576 : index
    %308 = vector.load %arg11[%c40_464, %c576_465] : memref<50x1024xf32, #tpu.memory_space<vmem>>, vector<5x64xf32>
    tpu.vector_store %arg11[%c40_464, %c576_465], %307 {strides = array<i32>} : memref<50x1024xf32, #tpu.memory_space<vmem>>, vector<5x64xf32>,
    %c222 = arith.constant 222 : index
    %c0_466 = arith.constant 0 : index
    %309 = vector.load %arg10[%c222, %c0_466] : memref<338x64xf32, #tpu.memory_space<vmem>>, vector<5x64xf32>
    %c40_467 = arith.constant 40 : index
    %c640_468 = arith.constant 640 : index
    %310 = vector.load %arg11[%c40_467, %c640_468] : memref<50x1024xf32, #tpu.memory_space<vmem>>, vector<5x64xf32>
    tpu.vector_store %arg11[%c40_467, %c640_468], %309 {strides = array<i32>} : memref<50x1024xf32, #tpu.memory_space<vmem>>, vector<5x64xf32>,
    %c229 = arith.constant 229 : index
    %c0_469 = arith.constant 0 : index
    %311 = vector.load %arg10[%c229, %c0_469] : memref<338x64xf32, #tpu.memory_space<vmem>>, vector<5x64xf32>
    %c40_470 = arith.constant 40 : index
    %c704_471 = arith.constant 704 : index
    %312 = vector.load %arg11[%c40_470, %c704_471] : memref<50x1024xf32, #tpu.memory_space<vmem>>, vector<5x64xf32>
    tpu.vector_store %arg11[%c40_470, %c704_471], %311 {strides = array<i32>} : memref<50x1024xf32, #tpu.memory_space<vmem>>, vector<5x64xf32>,
    %c312 = arith.constant 312 : index
    %c0_472 = arith.constant 0 : index
    %313 = vector.load %arg10[%c312, %c0_472] : memref<338x64xf32, #tpu.memory_space<vmem>>, vector<5x64xf32>
    %c40_473 = arith.constant 40 : index
    %c768_474 = arith.constant 768 : index
    %314 = vector.load %arg11[%c40_473, %c768_474] : memref<50x1024xf32, #tpu.memory_space<vmem>>, vector<5x64xf32>
    tpu.vector_store %arg11[%c40_473, %c768_474], %313 {strides = array<i32>} : memref<50x1024xf32, #tpu.memory_space<vmem>>, vector<5x64xf32>,
    %c319 = arith.constant 319 : index
    %c0_475 = arith.constant 0 : index
    %315 = vector.load %arg10[%c319, %c0_475] : memref<338x64xf32, #tpu.memory_space<vmem>>, vector<5x64xf32>
    %c40_476 = arith.constant 40 : index
    %c832_477 = arith.constant 832 : index
    %316 = vector.load %arg11[%c40_476, %c832_477] : memref<50x1024xf32, #tpu.memory_space<vmem>>, vector<5x64xf32>
    tpu.vector_store %arg11[%c40_476, %c832_477], %315 {strides = array<i32>} : memref<50x1024xf32, #tpu.memory_space<vmem>>, vector<5x64xf32>,
    %c313 = arith.constant 313 : index
    %c0_478 = arith.constant 0 : index
    %317 = vector.load %arg10[%c313, %c0_478] : memref<338x64xf32, #tpu.memory_space<vmem>>, vector<5x64xf32>
    %c40_479 = arith.constant 40 : index
    %c896_480 = arith.constant 896 : index
    %318 = vector.load %arg11[%c40_479, %c896_480] : memref<50x1024xf32, #tpu.memory_space<vmem>>, vector<5x64xf32>
    tpu.vector_store %arg11[%c40_479, %c896_480], %317 {strides = array<i32>} : memref<50x1024xf32, #tpu.memory_space<vmem>>, vector<5x64xf32>,
    %c320_481 = arith.constant 320 : index
    %c0_482 = arith.constant 0 : index
    %319 = vector.load %arg10[%c320_481, %c0_482] : memref<338x64xf32, #tpu.memory_space<vmem>>, vector<5x64xf32>
    %c40_483 = arith.constant 40 : index
    %c960_484 = arith.constant 960 : index
    %320 = vector.load %arg11[%c40_483, %c960_484] : memref<50x1024xf32, #tpu.memory_space<vmem>>, vector<5x64xf32>
    tpu.vector_store %arg11[%c40_483, %c960_484], %319 {strides = array<i32>} : memref<50x1024xf32, #tpu.memory_space<vmem>>, vector<5x64xf32>,
    %c221_485 = arith.constant 221 : index
    %c0_486 = arith.constant 0 : index
    %321 = vector.load %arg10[%c221_485, %c0_486] : memref<338x64xf32, #tpu.memory_space<vmem>>, vector<5x64xf32>
    %c45 = arith.constant 45 : index
    %c0_487 = arith.constant 0 : index
    %322 = vector.load %arg11[%c45, %c0_487] : memref<50x1024xf32, #tpu.memory_space<vmem>>, vector<5x64xf32>
    tpu.vector_store %arg11[%c45, %c0_487], %321 {strides = array<i32>} : memref<50x1024xf32, #tpu.memory_space<vmem>>, vector<5x64xf32>,
    %c228_488 = arith.constant 228 : index
    %c0_489 = arith.constant 0 : index
    %323 = vector.load %arg10[%c228_488, %c0_489] : memref<338x64xf32, #tpu.memory_space<vmem>>, vector<5x64xf32>
    %c45_490 = arith.constant 45 : index
    %c64_491 = arith.constant 64 : index
    %324 = vector.load %arg11[%c45_490, %c64_491] : memref<50x1024xf32, #tpu.memory_space<vmem>>, vector<5x64xf32>
    tpu.vector_store %arg11[%c45_490, %c64_491], %323 {strides = array<i32>} : memref<50x1024xf32, #tpu.memory_space<vmem>>, vector<5x64xf32>,
    %c222_492 = arith.constant 222 : index
    %c0_493 = arith.constant 0 : index
    %325 = vector.load %arg10[%c222_492, %c0_493] : memref<338x64xf32, #tpu.memory_space<vmem>>, vector<5x64xf32>
    %c45_494 = arith.constant 45 : index
    %c128_495 = arith.constant 128 : index
    %326 = vector.load %arg11[%c45_494, %c128_495] : memref<50x1024xf32, #tpu.memory_space<vmem>>, vector<5x64xf32>
    tpu.vector_store %arg11[%c45_494, %c128_495], %325 {strides = array<i32>} : memref<50x1024xf32, #tpu.memory_space<vmem>>, vector<5x64xf32>,
    %c229_496 = arith.constant 229 : index
    %c0_497 = arith.constant 0 : index
    %327 = vector.load %arg10[%c229_496, %c0_497] : memref<338x64xf32, #tpu.memory_space<vmem>>, vector<5x64xf32>
    %c45_498 = arith.constant 45 : index
    %c192_499 = arith.constant 192 : index
    %328 = vector.load %arg11[%c45_498, %c192_499] : memref<50x1024xf32, #tpu.memory_space<vmem>>, vector<5x64xf32>
    tpu.vector_store %arg11[%c45_498, %c192_499], %327 {strides = array<i32>} : memref<50x1024xf32, #tpu.memory_space<vmem>>, vector<5x64xf32>,
    %c312_500 = arith.constant 312 : index
    %c0_501 = arith.constant 0 : index
    %329 = vector.load %arg10[%c312_500, %c0_501] : memref<338x64xf32, #tpu.memory_space<vmem>>, vector<5x64xf32>
    %c45_502 = arith.constant 45 : index
    %c256_503 = arith.constant 256 : index
    %330 = vector.load %arg11[%c45_502, %c256_503] : memref<50x1024xf32, #tpu.memory_space<vmem>>, vector<5x64xf32>
    tpu.vector_store %arg11[%c45_502, %c256_503], %329 {strides = array<i32>} : memref<50x1024xf32, #tpu.memory_space<vmem>>, vector<5x64xf32>,
    %c319_504 = arith.constant 319 : index
    %c0_505 = arith.constant 0 : index
    %331 = vector.load %arg10[%c319_504, %c0_505] : memref<338x64xf32, #tpu.memory_space<vmem>>, vector<5x64xf32>
    %c45_506 = arith.constant 45 : index
    %c320_507 = arith.constant 320 : index
    %332 = vector.load %arg11[%c45_506, %c320_507] : memref<50x1024xf32, #tpu.memory_space<vmem>>, vector<5x64xf32>
    tpu.vector_store %arg11[%c45_506, %c320_507], %331 {strides = array<i32>} : memref<50x1024xf32, #tpu.memory_space<vmem>>, vector<5x64xf32>,
    %c313_508 = arith.constant 313 : index
    %c0_509 = arith.constant 0 : index
    %333 = vector.load %arg10[%c313_508, %c0_509] : memref<338x64xf32, #tpu.memory_space<vmem>>, vector<5x64xf32>
    %c45_510 = arith.constant 45 : index
    %c384_511 = arith.constant 384 : index
    %334 = vector.load %arg11[%c45_510, %c384_511] : memref<50x1024xf32, #tpu.memory_space<vmem>>, vector<5x64xf32>
    tpu.vector_store %arg11[%c45_510, %c384_511], %333 {strides = array<i32>} : memref<50x1024xf32, #tpu.memory_space<vmem>>, vector<5x64xf32>,
    %c320_512 = arith.constant 320 : index
    %c0_513 = arith.constant 0 : index
    %335 = vector.load %arg10[%c320_512, %c0_513] : memref<338x64xf32, #tpu.memory_space<vmem>>, vector<5x64xf32>
    %c45_514 = arith.constant 45 : index
    %c448_515 = arith.constant 448 : index
    %336 = vector.load %arg11[%c45_514, %c448_515] : memref<50x1024xf32, #tpu.memory_space<vmem>>, vector<5x64xf32>
    tpu.vector_store %arg11[%c45_514, %c448_515], %335 {strides = array<i32>} : memref<50x1024xf32, #tpu.memory_space<vmem>>, vector<5x64xf32>,
    %c234 = arith.constant 234 : index
    %c0_516 = arith.constant 0 : index
    %337 = vector.load %arg10[%c234, %c0_516] : memref<338x64xf32, #tpu.memory_space<vmem>>, vector<5x64xf32>
    %c45_517 = arith.constant 45 : index
    %c512_518 = arith.constant 512 : index
    %338 = vector.load %arg11[%c45_517, %c512_518] : memref<50x1024xf32, #tpu.memory_space<vmem>>, vector<5x64xf32>
    tpu.vector_store %arg11[%c45_517, %c512_518], %337 {strides = array<i32>} : memref<50x1024xf32, #tpu.memory_space<vmem>>, vector<5x64xf32>,
    %c241 = arith.constant 241 : index
    %c0_519 = arith.constant 0 : index
    %339 = vector.load %arg10[%c241, %c0_519] : memref<338x64xf32, #tpu.memory_space<vmem>>, vector<5x64xf32>
    %c45_520 = arith.constant 45 : index
    %c576_521 = arith.constant 576 : index
    %340 = vector.load %arg11[%c45_520, %c576_521] : memref<50x1024xf32, #tpu.memory_space<vmem>>, vector<5x64xf32>
    tpu.vector_store %arg11[%c45_520, %c576_521], %339 {strides = array<i32>} : memref<50x1024xf32, #tpu.memory_space<vmem>>, vector<5x64xf32>,
    %c235 = arith.constant 235 : index
    %c0_522 = arith.constant 0 : index
    %341 = vector.load %arg10[%c235, %c0_522] : memref<338x64xf32, #tpu.memory_space<vmem>>, vector<5x64xf32>
    %c45_523 = arith.constant 45 : index
    %c640_524 = arith.constant 640 : index
    %342 = vector.load %arg11[%c45_523, %c640_524] : memref<50x1024xf32, #tpu.memory_space<vmem>>, vector<5x64xf32>
    tpu.vector_store %arg11[%c45_523, %c640_524], %341 {strides = array<i32>} : memref<50x1024xf32, #tpu.memory_space<vmem>>, vector<5x64xf32>,
    %c242 = arith.constant 242 : index
    %c0_525 = arith.constant 0 : index
    %343 = vector.load %arg10[%c242, %c0_525] : memref<338x64xf32, #tpu.memory_space<vmem>>, vector<5x64xf32>
    %c45_526 = arith.constant 45 : index
    %c704_527 = arith.constant 704 : index
    %344 = vector.load %arg11[%c45_526, %c704_527] : memref<50x1024xf32, #tpu.memory_space<vmem>>, vector<5x64xf32>
    tpu.vector_store %arg11[%c45_526, %c704_527], %343 {strides = array<i32>} : memref<50x1024xf32, #tpu.memory_space<vmem>>, vector<5x64xf32>,
    %c325 = arith.constant 325 : index
    %c0_528 = arith.constant 0 : index
    %345 = vector.load %arg10[%c325, %c0_528] : memref<338x64xf32, #tpu.memory_space<vmem>>, vector<5x64xf32>
    %c45_529 = arith.constant 45 : index
    %c768_530 = arith.constant 768 : index
    %346 = vector.load %arg11[%c45_529, %c768_530] : memref<50x1024xf32, #tpu.memory_space<vmem>>, vector<5x64xf32>
    tpu.vector_store %arg11[%c45_529, %c768_530], %345 {strides = array<i32>} : memref<50x1024xf32, #tpu.memory_space<vmem>>, vector<5x64xf32>,
    %c332 = arith.constant 332 : index
    %c0_531 = arith.constant 0 : index
    %347 = vector.load %arg10[%c332, %c0_531] : memref<338x64xf32, #tpu.memory_space<vmem>>, vector<5x64xf32>
    %c45_532 = arith.constant 45 : index
    %c832_533 = arith.constant 832 : index
    %348 = vector.load %arg11[%c45_532, %c832_533] : memref<50x1024xf32, #tpu.memory_space<vmem>>, vector<5x64xf32>
    tpu.vector_store %arg11[%c45_532, %c832_533], %347 {strides = array<i32>} : memref<50x1024xf32, #tpu.memory_space<vmem>>, vector<5x64xf32>,
    %c326 = arith.constant 326 : index
    %c0_534 = arith.constant 0 : index
    %349 = vector.load %arg10[%c326, %c0_534] : memref<338x64xf32, #tpu.memory_space<vmem>>, vector<5x64xf32>
    %c45_535 = arith.constant 45 : index
    %c896_536 = arith.constant 896 : index
    %350 = vector.load %arg11[%c45_535, %c896_536] : memref<50x1024xf32, #tpu.memory_space<vmem>>, vector<5x64xf32>
    tpu.vector_store %arg11[%c45_535, %c896_536], %349 {strides = array<i32>} : memref<50x1024xf32, #tpu.memory_space<vmem>>, vector<5x64xf32>,
    %c333 = arith.constant 333 : index
    %c0_537 = arith.constant 0 : index
    %351 = vector.load %arg10[%c333, %c0_537] : memref<338x64xf32, #tpu.memory_space<vmem>>, vector<5x64xf32>
    %c45_538 = arith.constant 45 : index
    %c960_539 = arith.constant 960 : index
    %352 = vector.load %arg11[%c45_538, %c960_539] : memref<50x1024xf32, #tpu.memory_space<vmem>>, vector<5x64xf32>
    tpu.vector_store %arg11[%c45_538, %c960_539], %351 {strides = array<i32>} : memref<50x1024xf32, #tpu.memory_space<vmem>>, vector<5x64xf32>,
    %c0_540 = arith.constant 0 : index
    %c0_541 = arith.constant 0 : index
    %353 = vector.load %arg11[%c0_540, %c0_541] : memref<50x1024xf32, #tpu.memory_space<vmem>>, vector<50x1024xf32>
    %354 = arith.truncf %353 : vector<50x1024xf32> to vector<50x1024xbf16>
    %c0_542 = arith.constant 0 : index
    %c0_543 = arith.constant 0 : index
    %355 = vector.load %arg4[%c0_542, %c0_543] : memref<1024x128xbf16, #tpu.memory_space<vmem>>, vector<1024x128xbf16>
    %cst_544 = arith.constant dense<0.000000e+00> : vector<50x128xf32>
    %356 = tpu.matmul %354, %355, %cst_544 {dimension_numbers = #tpu.dot_dimension_numbers<[1], [0], [0], [1], [0, 0, 1, 1], [], []>} : vector<50x1024xbf16>, vector<1024x128xbf16>, vector<50x128xf32> -> vector<50x128xf32>
    %c0_545 = arith.constant 0 : index
    %c0_546 = arith.constant 0 : index
    %357 = vector.load %arg5[%c0_545, %c0_546] : memref<1x128xf32, #tpu.memory_space<vmem>>, vector<1x128xf32>
    %c0_547 = arith.constant 0 : index
    %c0_548 = arith.constant 0 : index
    %358 = vector.load %arg6[%c0_547, %c0_548] : memref<1x128xf32, #tpu.memory_space<vmem>>, vector<1x128xf32>
    %cst_549 = arith.constant dense<0.000000e+00> : vector<128xf32>
    %359 = vector.multi_reduction <add>, %356, %cst_549 [0] : vector<50x128xf32> to vector<128xf32>
    %360 = vector.shape_cast %359 : vector<128xf32> to vector<1x128xf32>
    %cst_550 = arith.constant 2.000000e-02 : f32
    %361 = vector.broadcast %cst_550 : f32 to vector<1x128xf32>
    %362 = arith.mulf %360, %361 : vector<1x128xf32>
    %363 = arith.mulf %356, %356 : vector<50x128xf32>
    %cst_551 = arith.constant dense<0.000000e+00> : vector<128xf32>
    %364 = vector.multi_reduction <add>, %363, %cst_551 [0] : vector<50x128xf32> to vector<128xf32>
    %365 = vector.shape_cast %364 : vector<128xf32> to vector<1x128xf32>
    %cst_552 = arith.constant 2.000000e-02 : f32
    %366 = vector.broadcast %cst_552 : f32 to vector<1x128xf32>
    %367 = arith.mulf %365, %366 : vector<1x128xf32>
    %368 = arith.mulf %362, %362 : vector<1x128xf32>
    %369 = arith.subf %367, %368 : vector<1x128xf32>
    %370 = vector.broadcast %362 : vector<1x128xf32> to vector<50x128xf32>
    %371 = arith.subf %356, %370 : vector<50x128xf32>
    %cst_553 = arith.constant 9.99999974E-6 : f32
    %372 = vector.broadcast %cst_553 : f32 to vector<1x128xf32>
    %373 = arith.addf %369, %372 : vector<1x128xf32>
    %374 = math.rsqrt %373 : vector<1x128xf32>
    %375 = vector.broadcast %374 : vector<1x128xf32> to vector<50x128xf32>
    %376 = arith.mulf %371, %375 : vector<50x128xf32>
    %377 = vector.broadcast %357 : vector<1x128xf32> to vector<50x128xf32>
    %378 = arith.mulf %376, %377 : vector<50x128xf32>
    %379 = vector.broadcast %358 : vector<1x128xf32> to vector<50x128xf32>
    %380 = arith.addf %378, %379 : vector<50x128xf32>
    %cst_554 = arith.constant 0.000000e+00 : f32
    %381 = vector.broadcast %cst_554 : f32 to vector<50x128xf32>
    %382 = arith.cmpf oge, %380, %381 : vector<50x128xf32>
    %cst_555 = arith.constant 2.000000e-01 : f32
    %383 = vector.broadcast %cst_555 : f32 to vector<50x128xf32>
    %384 = arith.mulf %383, %380 : vector<50x128xf32>
    %385 = arith.select %382, %380, %384 : vector<50x128xi1>, vector<50x128xf32>
    %c0_556 = arith.constant 0 : index
    %c0_557 = arith.constant 0 : index
    %386 = vector.load %arg7[%c0_556, %c0_557] : memref<50x128xf32, #tpu.memory_space<vmem>>, vector<50x128xf32>
    %387 = arith.mulf %385, %386 : vector<50x128xf32>
    %cst_558 = arith.constant dense<0.000000e+00> : vector<50xf32>
    %388 = vector.multi_reduction <add>, %387, %cst_558 [1] : vector<50x128xf32> to vector<50xf32>
    %389 = vector.shape_cast %388 : vector<50xf32> to vector<50x1xf32>
    %390 = tpu.iota {dimensions = array<i32: 0>} : vector<2x50xi32>
    %391 = tpu.iota {dimensions = array<i32: 1>} : vector<2x50xi32>
    %c25_i32 = arith.constant 25 : i32
    %392 = vector.broadcast %c25_i32 : i32 to vector<2x50xi32>
    %393 = arith.muli %390, %392 : vector<2x50xi32>
    %394 = arith.cmpi sge, %391, %393 : vector<2x50xi32>
    %c1_i32 = arith.constant 1 : i32
    %395 = vector.broadcast %c1_i32 : i32 to vector<2x50xi32>
    %396 = arith.addi %390, %395 : vector<2x50xi32>
    %c25_i32_559 = arith.constant 25 : i32
    %397 = vector.broadcast %c25_i32_559 : i32 to vector<2x50xi32>
    %398 = arith.muli %396, %397 : vector<2x50xi32>
    %399 = arith.cmpi slt, %391, %398 : vector<2x50xi32>
    %400 = arith.andi %394, %399 : vector<2x50xi1>
    %401 = arith.extui %400 : vector<2x50xi1> to vector<2x50xi32>
    %402 = arith.sitofp %401 : vector<2x50xi32> to vector<2x50xf32>
    %cst_560 = arith.constant dense<0.000000e+00> : vector<2x1xf32>
    %403 = tpu.matmul %402, %389, %cst_560 {dimension_numbers = #tpu.dot_dimension_numbers<[1], [0], [0], [1], [0, 0, 1, 1], [], []>} : vector<2x50xf32>, vector<50x1xf32>, vector<2x1xf32> -> vector<2x1xf32>
    %c0_561 = arith.constant 0 : index
    %404 = memref.load %arg8[%c0_561] : memref<1xf32, #tpu.memory_space<smem>>
    %405 = vector.broadcast %404 : f32 to vector<2x1xf32>
    %406 = arith.addf %403, %405 : vector<2x1xf32>
    %cst_562 = arith.constant 0.000000e+00 : f32
    %407 = vector.broadcast %cst_562 : f32 to vector<2x1xf32>
    %408 = arith.subf %407, %406 : vector<2x1xf32>
    %409 = math.exp %408 : vector<2x1xf32>
    %cst_563 = arith.constant 1.000000e+00 : f32
    %410 = vector.broadcast %cst_563 : f32 to vector<2x1xf32>
    %411 = arith.addf %410, %409 : vector<2x1xf32>
    %cst_564 = arith.constant 1.000000e+00 : f32
    %412 = vector.broadcast %cst_564 : f32 to vector<2x1xf32>
    %413 = arith.divf %412, %411 : vector<2x1xf32>
    %c0_565 = arith.constant 0 : index
    %c0_566 = arith.constant 0 : index
    %414 = vector.load %arg9[%c0_565, %c0_566] : memref<2x1xf32, #tpu.memory_space<vmem>>, vector<2x1xf32>
    tpu.vector_store %arg9[%c0_565, %c0_566], %413 {strides = array<i32>} : memref<2x1xf32, #tpu.memory_space<vmem>>, vector<2x1xf32>,
    return
  }
}

</mosaic_0001>

<llo_original>
// kernel: tile.7
$region0: #{tile.7}
  %s0 = inlined_call_operand.vmem [shape: f32[2,25,128], index: 0, kind: input, shape index: {}]
  %s1 = inlined_call_operand.vmem [shape: f32[50,128], index: 1, kind: output, shape index: {}]
  %v2 = vld [vmem:[%s0] sm:$0xff]
  %3 = vst [vmem:[%s1] sm:$0xff] %v2
  %s4 = scalar_lea.vmem %s0, 8
  %v5 = vld [vmem:[%s4] sm:$0xff]
  %s6 = scalar_lea.vmem %s1, 8
  %7 = vst [vmem:[%s6] sm:$0xff] %v5
  %s8 = scalar_lea.vmem %s0, 16
  %v9 = vld [vmem:[%s8] sm:$0xff]
  %s10 = scalar_lea.vmem %s1, 16
  %11 = vst [vmem:[%s10] sm:$0xff] %v9
  %s12 = scalar_lea.vmem %s0, 24
  %s13 = smov 3
  %v14 = vld [vmem:[%s12] ss:$8 sm:%s13]
  %s15 = scalar_lea.vmem %s1, 24
  %16 = vst [vmem:[%s15] sm:$0x3] %v14
  %s17 = scalar_lea.vmem %s0, 33
  %v18 = vld [vmem:[%s17] sm:$0xff]
  %s19 = scalar_lea.vmem %s1, 26
  %20 = vst [vmem:[%s19] sm:$0xff] %v18
  %s21 = scalar_lea.vmem %s0, 41
  %v22 = vld [vmem:[%s21] sm:$0xff]
  %s23 = scalar_lea.vmem %s1, 34
  %24 = vst [vmem:[%s23] sm:$0xff] %v22
  %s25 = scalar_lea.vmem %s0, 49
  %v26 = vld [vmem:[%s25] sm:$0xff]
  %s27 = scalar_lea.vmem %s1, 42
  %28 = vst [vmem:[%s27] sm:$0xff] %v26

// kernel: discriminator_forward.1
$region0: #{discriminator_forward.1}
  #allocation0 [shape = 'u32[]', space=smem, size = 0x4, offset = 0x4, fixed_abs, tag = 'smem constant byte address 0x4 - core index']
  #allocation1 [shape = 'u32[144,128]{1,0:T(1,128)}', space=vmem, size = 0x12000, scoped, tag = 'internal scratch']
  #allocation2 [shape = 'f32[338,64]{1,0:T(8,128)}', space=vmem, size = 0x2b000, scoped, tag = 'scratch operand']
  #allocation3 [shape = 'f32[50,1024]{1,0:T(8,128)}', space=vmem, size = 0x38000, scoped, tag = 'scratch operand']
  #allocation4 [shape = 'f32[1]{0:T(128)S(6)}', space=smem, size = 0x200, scoped, tag = 'scoped memory for discriminator_forward.1']
  %s0 = inlined_call_operand.vmem [shape: bf16[338,16], index: 0, kind: input, shape index: {}]
  %s1 = inlined_call_operand.vmem [shape: bf16[16,64], index: 1, kind: input, shape index: {}]
  %s2 = inlined_call_operand.vmem [shape: f32[1,64], index: 2, kind: input, shape index: {}]
  %s3 = inlined_call_operand.vmem [shape: f32[1,64], index: 3, kind: input, shape index: {}]
  %s4 = inlined_call_operand.vmem [shape: bf16[1024,128], index: 4, kind: input, shape index: {}]
  %s5 = inlined_call_operand.vmem [shape: f32[1,128], index: 5, kind: input, shape index: {}]
  %s6 = inlined_call_operand.vmem [shape: f32[1,128], index: 6, kind: input, shape index: {}]
  %s7 = inlined_call_operand.vmem [shape: f32[50,128], index: 7, kind: input, shape index: {}]
  %s8 = inlined_call_operand.<no memory space> [shape: f32[1], index: 8, kind: input, shape index: {}]
  %s9 = inlined_call_operand.vmem [shape: f32[2,1], index: 9, kind: output, shape index: {}]
  %s10 = sld [smem:[#allocation0]]
  $region46: #{discriminator_forward.1} parent=0
    _
  %s12 = ssub.s32 1, %s10
  %s13 = scalar_select 0, %s12, %s10
  %14 = sst [smem:[#allocation4]] %s8
  // Predicated region
  $region2: #{discriminator_forward.1} parent=0 // pred_check
    _
  $region3: #{discriminator_forward.1} parent=0 // pred_check_branch
    %16 = sbr.rel (0) target = $region5
  $region4: #{discriminator_forward.1} parent=0 // pred_region
    _
  $region5: #{discriminator_forward.1} parent=0 // pred_fallthru
    _
  // Predicated region
  $region6: #{discriminator_forward.1} parent=0 // pred_check
    _
  $region7: #{discriminator_forward.1} parent=0 // pred_check_branch
    %18 = sbr.rel (0) target = $region9
  $region8: #{discriminator_forward.1} parent=0 // pred_region
    _
  $region9: #{discriminator_forward.1} parent=0 // pred_fallthru
    _
  // Predicated region
  $region10: #{discriminator_forward.1} parent=0 // pred_check
    _
  $region11: #{discriminator_forward.1} parent=0 // pred_check_branch
    %20 = sbr.rel (0) target = $region13
  $region12: #{discriminator_forward.1} parent=0 // pred_region
    _
  $region13: #{discriminator_forward.1} parent=0 // pred_fallthru
    _
  // Predicated region
  $region14: #{discriminator_forward.1} parent=0 // pred_check
    _
  $region15: #{discriminator_forward.1} parent=0 // pred_check_branch
    %22 = sbr.rel (0) target = $region17
  $region16: #{discriminator_forward.1} parent=0 // pred_region
    _
  $region17: #{discriminator_forward.1} parent=0 // pred_fallthru
    _
  // Predicated region
  $region18: #{discriminator_forward.1} parent=0 // pred_check
    _
  $region19: #{discriminator_forward.1} parent=0 // pred_check_branch
    %24 = sbr.rel (0) target = $region21
  $region20: #{discriminator_forward.1} parent=0 // pred_region
    _
  $region21: #{discriminator_forward.1} parent=0 // pred_fallthru
    _
  // Predicated region
  $region22: #{discriminator_forward.1} parent=0 // pred_check
    _
  $region23: #{discriminator_forward.1} parent=0 // pred_check_branch
    %26 = sbr.rel (0) target = $region25
  $region24: #{discriminator_forward.1} parent=0 // pred_region
    _
  $region25: #{discriminator_forward.1} parent=0 // pred_fallthru
    _
  // Predicated region
  $region26: #{discriminator_forward.1} parent=0 // pred_check
    _
  $region27: #{discriminator_forward.1} parent=0 // pred_check_branch
    %28 = sbr.rel (0) target = $region29
  $region28: #{discriminator_forward.1} parent=0 // pred_region
    _
  $region29: #{discriminator_forward.1} parent=0 // pred_fallthru
    _
  // Predicated region
  $region30: #{discriminator_forward.1} parent=0 // pred_check
    _
  $region31: #{discriminator_forward.1} parent=0 // pred_check_branch
    %30 = sbr.rel (0) target = $region33
  $region32: #{discriminator_forward.1} parent=0 // pred_region
    _
  $region33: #{discriminator_forward.1} parent=0 // pred_fallthru
    _
  // Predicated region
  $region34: #{discriminator_forward.1} parent=0 // pred_check
    _
  $region35: #{discriminator_forward.1} parent=0 // pred_check_branch
    %32 = sbr.rel (0) target = $region37
  $region36: #{discriminator_forward.1} parent=0 // pred_region
    _
  $region37: #{discriminator_forward.1} parent=0 // pred_fallthru
    _
  %v34 = vld [vmem:[%s0] sm:$0xf]
  %v35 = vld [vmem:[%s0 + $0x4] sm:$0xf]
  %v36 = vld [vmem:[%s0 + $0x8] sm:$0xf]
  %v37 = vld [vmem:[%s0 + $0xc] sm:$0xf]
  %v38 = vld [vmem:[%s0 + $0x10] sm:$0xf]
  %v39 = vld [vmem:[%s0 + $0x14] sm:$0xf]
  %v40 = vld [vmem:[%s0 + $0x18] sm:$0xf]
  %v41 = vld [vmem:[%s0 + $0x1c] sm:$0xf]
  %v42 = vld [vmem:[%s0 + $0x20] sm:$0xf]
  %v43 = vld [vmem:[%s0 + $0x24] sm:$0xf]
  %v44 = vld [vmem:[%s0 + $0x28] sm:$0xf]
  %v45 = vld [vmem:[%s0 + $0x2c] sm:$0xf]
  %v46 = vld [vmem:[%s0 + $0x30] sm:$0xf]
  %v47 = vld [vmem:[%s0 + $0x34] sm:$0xf]
  %v48 = vld [vmem:[%s0 + $0x38] sm:$0xf]
  %v49 = vld [vmem:[%s0 + $0x3c] sm:$0xf]
  %v50 = vld [vmem:[%s0 + $0x40] sm:$0xf]
  %v51 = vld [vmem:[%s0 + $0x44] sm:$0xf]
  %v52 = vld [vmem:[%s0 + $0x48] sm:$0xf]
  %v53 = vld [vmem:[%s0 + $0x4c] sm:$0xf]
  %v54 = vld [vmem:[%s0 + $0x50] sm:$0xf]
  %v55 = vld [vmem:[%s0 + $0x54] sm:$0xf]
  %v56 = vld [vmem:[%s0 + $0x58] sm:$0xf]
  %v57 = vld [vmem:[%s0 + $0x5c] sm:$0xf]
  %v58 = vld [vmem:[%s0 + $0x60] sm:$0xf]
  %v59 = vld [vmem:[%s0 + $0x64] sm:$0xf]
  %v60 = vld [vmem:[%s0 + $0x68] sm:$0xf]
  %v61 = vld [vmem:[%s0 + $0x6c] sm:$0xf]
  %v62 = vld [vmem:[%s0 + $0x70] sm:$0xf]
  %v63 = vld [vmem:[%s0 + $0x74] sm:$0xf]
  %v64 = vld [vmem:[%s0 + $0x78] sm:$0xf]
  %v65 = vld [vmem:[%s0 + $0x7c] sm:$0xf]
  %v66 = vld [vmem:[%s0 + $0x80] sm:$0xf]
  %v67 = vld [vmem:[%s0 + $0x84] sm:$0xf]
  %v68 = vld [vmem:[%s0 + $0x88] sm:$0xf]
  %v69 = vld [vmem:[%s0 + $0x8c] sm:$0xf]
  %v70 = vld [vmem:[%s0 + $0x90] sm:$0xf]
  %v71 = vld [vmem:[%s0 + $0x94] sm:$0xf]
  %v72 = vld [vmem:[%s0 + $0x98] sm:$0xf]
  %v73 = vld [vmem:[%s0 + $0x9c] sm:$0xf]
  %v74 = vld [vmem:[%s0 + $0xa0] sm:$0xf]
  %v75 = vld [vmem:[%s0 + $0xa4] sm:$0xf]
  %v76 = vld [vmem:[%s0 + $0xa8] sm:$0x1]
  %v77 = vld [vmem:[%s1] sm:$0xf]
  %v78 = vld [vmem:[%s1 + $0x4] sm:$0xf]
  %v122 = vunpack.c.l.b16 %v34
  %v123 = vunpack.c.l.b16 %v35
  %v124 = vunpack.c.l.b16 %v36
  %v125 = vunpack.c.l.b16 %v37
  %v126 = vunpack.c.l.b16 %v38
  %v127 = vunpack.c.l.b16 %v39
  %v128 = vunpack.c.l.b16 %v40
  %v129 = vunpack.c.l.b16 %v41
  %v130 = vunpack.c.l.b16 %v42
  %v131 = vunpack.c.l.b16 %v43
  %v132 = vunpack.c.l.b16 %v44
  %v133 = vunpack.c.l.b16 %v45
  %v134 = vunpack.c.l.b16 %v46
  %v135 = vunpack.c.l.b16 %v47
  %v136 = vunpack.c.l.b16 %v48
  %v137 = vunpack.c.l.b16 %v49
  %v138 = vunpack.c.l.b16 %v50
  %v139 = vunpack.c.l.b16 %v51
  %v140 = vunpack.c.l.b16 %v52
  %v141 = vunpack.c.l.b16 %v53
  %v142 = vunpack.c.l.b16 %v54
  %v143 = vunpack.c.l.b16 %v55
  %v144 = vunpack.c.l.b16 %v56
  %v145 = vunpack.c.l.b16 %v57
  %v146 = vunpack.c.l.b16 %v58
  %v147 = vunpack.c.l.b16 %v59
  %v148 = vunpack.c.l.b16 %v60
  %v149 = vunpack.c.l.b16 %v61
  %v150 = vunpack.c.l.b16 %v62
  %v151 = vunpack.c.l.b16 %v63
  %v152 = vunpack.c.l.b16 %v64
  %v153 = vunpack.c.l.b16 %v65
  %v154 = vunpack.c.l.b16 %v66
  %v155 = vunpack.c.l.b16 %v67
  %v156 = vunpack.c.l.b16 %v68
  %v157 = vunpack.c.l.b16 %v69
  %v158 = vunpack.c.l.b16 %v70
  %v159 = vunpack.c.l.b16 %v71
  %v160 = vunpack.c.l.b16 %v72
  %v161 = vunpack.c.l.b16 %v73
  %v162 = vunpack.c.l.b16 %v74
  %v163 = vunpack.c.l.b16 %v75
  %v164 = vunpack.c.l.b16 %v76
  %v165 = vpack.c.b16 %v123, %v122
  %v166 = vpack.c.b16 %v125, %v124
  %v167 = vpack.c.b16 %v127, %v126
  %v168 = vpack.c.b16 %v129, %v128
  %v169 = vpack.c.b16 %v131, %v130
  %v170 = vpack.c.b16 %v133, %v132
  %v171 = vpack.c.b16 %v135, %v134
  %v172 = vpack.c.b16 %v137, %v136
  %v173 = vpack.c.b16 %v139, %v138
  %v174 = vpack.c.b16 %v141, %v140
  %v175 = vpack.c.b16 %v143, %v142
  %v176 = vpack.c.b16 %v145, %v144
  %v177 = vpack.c.b16 %v147, %v146
  %v178 = vpack.c.b16 %v149, %v148
  %v179 = vpack.c.b16 %v151, %v150
  %v180 = vpack.c.b16 %v153, %v152
  %v181 = vpack.c.b16 %v155, %v154
  %v182 = vpack.c.b16 %v157, %v156
  %v183 = vpack.c.b16 %v159, %v158
  %v184 = vpack.c.b16 %v161, %v160
  %v185 = vpack.c.b16 %v163, %v162
  %v186 = vpack.c.b16 %v164, %v164
  %v189 = vunpack.c.l.b16 %v77
  %v190 = vunpack.c.l.b16 %v78
  %v191 = vpack.c.b16 %v190, %v189
  %vm193 = vcmask 130048
  %v195 = vsel %vm193, %v165, 0
  %v198 = vsel %vm193, %v166, 0
  %v201 = vsel %vm193, %v167, 0
  %v204 = vsel %vm193, %v168, 0
  %v207 = vsel %vm193, %v169, 0
  %v210 = vsel %vm193, %v170, 0
  %v213 = vsel %vm193, %v171, 0
  %v216 = vsel %vm193, %v172, 0
  %v219 = vsel %vm193, %v173, 0
  %v222 = vsel %vm193, %v174, 0
  %v225 = vsel %vm193, %v175, 0
  %v228 = vsel %vm193, %v176, 0
  %v231 = vsel %vm193, %v177, 0
  %v234 = vsel %vm193, %v178, 0
  %v237 = vsel %vm193, %v179, 0
  %v240 = vsel %vm193, %v180, 0
  %v243 = vsel %vm193, %v181, 0
  %v246 = vsel %vm193, %v182, 0
  %v249 = vsel %vm193, %v183, 0
  %v252 = vsel %vm193, %v184, 0
  %v255 = vsel %vm193, %v185, 0
  %v258 = vsel %vm193, %v186, 0
  %260 = vmatprep.subr.bf16.mxu0 0
  %261 = vmatpush1.bf16.msra.mxu0 %v191
  %262 = vmatprep.subr.bf16.mxu0 0
  %263 = vmatpush1.bf16.msra.mxu0 0
  %264 = vmatprep.subr.bf16.mxu0 0
  %265 = vmatpush1.bf16.msra.mxu0 0
  %266 = vmatprep.subr.bf16.mxu0 0
  %267 = vmatpush1.bf16.msra.mxu0 0
  %268 = vmatprep.subr.bf16.mxu0 0
  %269 = vmatpush1.bf16.msra.mxu0 0
  %270 = vmatprep.subr.bf16.mxu0 0
  %271 = vmatpush1.bf16.msra.mxu0 0
  %272 = vmatprep.subr.bf16.mxu0 0
  %273 = vmatpush1.bf16.msra.mxu0 0
  %274 = vmatprep.subr.bf16.mxu0 0
  %275 = vmatpush1.bf16.msra.mxu0 0
  %276 = vmatprep.subr.bf16.mxu0 0
  %277 = vmatpush1.bf16.msra.mxu0 0
  %278 = vmatprep.subr.bf16.mxu0 0
  %279 = vmatpush1.bf16.msra.mxu0 0
  %280 = vmatprep.subr.bf16.mxu0 0
  %281 = vmatpush1.bf16.msra.mxu0 0
  %282 = vmatprep.subr.bf16.mxu0 0
  %283 = vmatpush1.bf16.msra.mxu0 0
  %284 = vmatprep.subr.bf16.mxu0 0
  %285 = vmatpush1.bf16.msra.mxu0 0
  %286 = vmatprep.subr.bf16.mxu0 0
  %287 = vmatpush1.bf16.msra.mxu0 0
  %288 = vmatprep.subr.bf16.mxu0 0
  %289 = vmatpush1.bf16.msra.mxu0 0
  %290 = vmatprep.subr.bf16.mxu0 0
  %291 = vmatpush1.bf16.msra.mxu0 0
  %292 = vmatprep.mubr.bf16.mxu0 0
  %293 = vmatmul.mubr.bf16.gmra.mrb[0].mxu0 %v195
  %v294 = vpop.f32.mrb[0].mxu0
  %v295 = vadd.f32 0.0, %v294
  %v296 = vpop.f32.mrb[0].mxu0
  %v297 = vpop.f32.mrb[0].mxu0
  %v298 = vadd.f32 0.0, %v297
  %v299 = vpop.f32.mrb[0].mxu0
  %300 = vmatprep.mubr.bf16.mxu0 0
  %301 = vmatmul.mubr.bf16.gmra.mrb[0].mxu0 %v198
  %v302 = vpop.f32.mrb[0].mxu0
  %v303 = vadd.f32 0.0, %v302
  %v304 = vpop.f32.mrb[0].mxu0
  %v305 = vpop.f32.mrb[0].mxu0
  %v306 = vadd.f32 0.0, %v305
  %v307 = vpop.f32.mrb[0].mxu0
  %308 = vmatprep.mubr.bf16.mxu0 0
  %309 = vmatmul.mubr.bf16.gmra.mrb[0].mxu0 %v201
  %v310 = vpop.f32.mrb[0].mxu0
  %v311 = vadd.f32 0.0, %v310
  %v312 = vpop.f32.mrb[0].mxu0
  %v313 = vpop.f32.mrb[0].mxu0
  %v314 = vadd.f32 0.0, %v313
  %v315 = vpop.f32.mrb[0].mxu0
  %316 = vmatprep.mubr.bf16.mxu0 0
  %317 = vmatmul.mubr.bf16.gmra.mrb[0].mxu0 %v204
  %v318 = vpop.f32.mrb[0].mxu0
  %v319 = vadd.f32 0.0, %v318
  %v320 = vpop.f32.mrb[0].mxu0
  %v321 = vpop.f32.mrb[0].mxu0
  %v322 = vadd.f32 0.0, %v321
  %v323 = vpop.f32.mrb[0].mxu0
  %324 = vmatprep.mubr.bf16.mxu0 0
  %325 = vmatmul.mubr.bf16.gmra.mrb[0].mxu0 %v207
  %v326 = vpop.f32.mrb[0].mxu0
  %v327 = vadd.f32 0.0, %v326
  %v328 = vpop.f32.mrb[0].mxu0
  %v329 = vpop.f32.mrb[0].mxu0
  %v330 = vadd.f32 0.0, %v329
  %v331 = vpop.f32.mrb[0].mxu0
  %332 = vmatprep.mubr.bf16.mxu0 0
  %333 = vmatmul.mubr.bf16.gmra.mrb[0].mxu0 %v210
  %v334 = vpop.f32.mrb[0].mxu0
  %v335 = vadd.f32 0.0, %v334
  %v336 = vpop.f32.mrb[0].mxu0
  %v337 = vpop.f32.mrb[0].mxu0
  %v338 = vadd.f32 0.0, %v337
  %v339 = vpop.f32.mrb[0].mxu0
  %340 = vmatprep.mubr.bf16.mxu0 0
  %341 = vmatmul.mubr.bf16.gmra.mrb[0].mxu0 %v213
  %v342 = vpop.f32.mrb[0].mxu0
  %v343 = vadd.f32 0.0, %v342
  %v344 = vpop.f32.mrb[0].mxu0
  %v345 = vpop.f32.mrb[0].mxu0
  %v346 = vadd.f32 0.0, %v345
  %v347 = vpop.f32.mrb[0].mxu0
  %348 = vmatprep.mubr.bf16.mxu0 0
  %349 = vmatmul.mubr.bf16.gmra.mrb[0].mxu0 %v216
  %v350 = vpop.f32.mrb[0].mxu0
  %v351 = vadd.f32 0.0, %v350
  %v352 = vpop.f32.mrb[0].mxu0
  %v353 = vpop.f32.mrb[0].mxu0
  %v354 = vadd.f32 0.0, %v353
  %v355 = vpop.f32.mrb[0].mxu0
  %356 = vmatprep.mubr.bf16.mxu0 0
  %357 = vmatmul.mubr.bf16.gmra.mrb[0].mxu0 %v219
  %v358 = vpop.f32.mrb[0].mxu0
  %v359 = vadd.f32 0.0, %v358
  %v360 = vpop.f32.mrb[0].mxu0
  %v361 = vpop.f32.mrb[0].mxu0
  %v362 = vadd.f32 0.0, %v361
  %v363 = vpop.f32.mrb[0].mxu0
  %364 = vmatprep.mubr.bf16.mxu0 0
  %365 = vmatmul.mubr.bf16.gmra.mrb[0].mxu0 %v222
  %v366 = vpop.f32.mrb[0].mxu0
  %v367 = vadd.f32 0.0, %v366
  %v368 = vpop.f32.mrb[0].mxu0
  %v369 = vpop.f32.mrb[0].mxu0
  %v370 = vadd.f32 0.0, %v369
  %v371 = vpop.f32.mrb[0].mxu0
  %372 = vmatprep.mubr.bf16.mxu0 0
  %373 = vmatmul.mubr.bf16.gmra.mrb[0].mxu0 %v225
  %v374 = vpop.f32.mrb[0].mxu0
  %v375 = vadd.f32 0.0, %v374
  %v376 = vpop.f32.mrb[0].mxu0
  %v377 = vpop.f32.mrb[0].mxu0
  %v378 = vadd.f32 0.0, %v377
  %v379 = vpop.f32.mrb[0].mxu0
  %380 = vmatprep.mubr.bf16.mxu0 0
  %381 = vmatmul.mubr.bf16.gmra.mrb[0].mxu0 %v228
  %v382 = vpop.f32.mrb[0].mxu0
  %v383 = vadd.f32 0.0, %v382
  %v384 = vpop.f32.mrb[0].mxu0
  %v385 = vpop.f32.mrb[0].mxu0
  %v386 = vadd.f32 0.0, %v385
  %v387 = vpop.f32.mrb[0].mxu0
  %388 = vmatprep.mubr.bf16.mxu0 0
  %389 = vmatmul.mubr.bf16.gmra.mrb[0].mxu0 %v231
  %v390 = vpop.f32.mrb[0].mxu0
  %v391 = vadd.f32 0.0, %v390
  %v392 = vpop.f32.mrb[0].mxu0
  %v393 = vpop.f32.mrb[0].mxu0
  %v394 = vadd.f32 0.0, %v393
  %v395 = vpop.f32.mrb[0].mxu0
  %396 = vmatprep.mubr.bf16.mxu0 0
  %397 = vmatmul.mubr.bf16.gmra.mrb[0].mxu0 %v234
  %v398 = vpop.f32.mrb[0].mxu0
  %v399 = vadd.f32 0.0, %v398
  %v400 = vpop.f32.mrb[0].mxu0
  %v401 = vpop.f32.mrb[0].mxu0
  %v402 = vadd.f32 0.0, %v401
  %v403 = vpop.f32.mrb[0].mxu0
  %404 = vmatprep.mubr.bf16.mxu0 0
  %405 = vmatmul.mubr.bf16.gmra.mrb[0].mxu0 %v237
  %v406 = vpop.f32.mrb[0].mxu0
  %v407 = vadd.f32 0.0, %v406
  %v408 = vpop.f32.mrb[0].mxu0
  %v409 = vpop.f32.mrb[0].mxu0
  %v410 = vadd.f32 0.0, %v409
  %v411 = vpop.f32.mrb[0].mxu0
  %412 = vmatprep.mubr.bf16.mxu0 0
  %413 = vmatmul.mubr.bf16.gmra.mrb[0].mxu0 %v240
  %v414 = vpop.f32.mrb[0].mxu0
  %v415 = vadd.f32 0.0, %v414
  %v416 = vpop.f32.mrb[0].mxu0
  %v417 = vpop.f32.mrb[0].mxu0
  %v418 = vadd.f32 0.0, %v417
  %v419 = vpop.f32.mrb[0].mxu0
  %420 = vmatprep.mubr.bf16.mxu0 0
  %421 = vmatmul.mubr.bf16.gmra.mrb[0].mxu0 %v243
  %v422 = vpop.f32.mrb[0].mxu0
  %v423 = vadd.f32 0.0, %v422
  %v424 = vpop.f32.mrb[0].mxu0
  %v425 = vpop.f32.mrb[0].mxu0
  %v426 = vadd.f32 0.0, %v425
  %v427 = vpop.f32.mrb[0].mxu0
  %428 = vmatprep.mubr.bf16.mxu0 0
  %429 = vmatmul.mubr.bf16.gmra.mrb[0].mxu0 %v246
  %v430 = vpop.f32.mrb[0].mxu0
  %v431 = vadd.f32 0.0, %v430
  %v432 = vpop.f32.mrb[0].mxu0
  %v433 = vpop.f32.mrb[0].mxu0
  %v434 = vadd.f32 0.0, %v433
  %v435 = vpop.f32.mrb[0].mxu0
  %436 = vmatprep.mubr.bf16.mxu0 0
  %437 = vmatmul.mubr.bf16.gmra.mrb[0].mxu0 %v249
  %v438 = vpop.f32.mrb[0].mxu0
  %v439 = vadd.f32 0.0, %v438
  %v440 = vpop.f32.mrb[0].mxu0
  %v441 = vpop.f32.mrb[0].mxu0
  %v442 = vadd.f32 0.0, %v441
  %v443 = vpop.f32.mrb[0].mxu0
  %444 = vmatprep.mubr.bf16.mxu0 0
  %445 = vmatmul.mubr.bf16.gmra.mrb[0].mxu0 %v252
  %v446 = vpop.f32.mrb[0].mxu0
  %v447 = vadd.f32 0.0, %v446
  %v448 = vpop.f32.mrb[0].mxu0
  %v449 = vpop.f32.mrb[0].mxu0
  %v450 = vadd.f32 0.0, %v449
  %v451 = vpop.f32.mrb[0].mxu0
  %452 = vmatprep.mubr.bf16.mxu0 0
  %453 = vmatmul.mubr.bf16.gmra.mrb[0].mxu0 %v255
  %v454 = vpop.f32.mrb[0].mxu0
  %v455 = vadd.f32 0.0, %v454
  %v456 = vpop.f32.mrb[0].mxu0
  %v457 = vpop.f32.mrb[0].mxu0
  %v458 = vadd.f32 0.0, %v457
  %v459 = vpop.f32.mrb[0].mxu0
  %460 = vmatprep.mubr.bf16.mxu0 0
  %461 = vmatmul.mubr.bf16.gmra.mrb[0].mxu0 %v258
  %v462 = vpop.f32.mrb[0].mxu0
  %v463 = vadd.f32 0.0, %v462
  %v464 = vpop.f32.mrb[0].mxu0
  %v465 = vpop.f32.mrb[0].mxu0
  %v466 = vpop.f32.mrb[0].mxu0
  %467 = vdwg.mxu0
  %v468 = vld [vmem:[%s2] sm:$0x1]
  %v469 = vld [vmem:[%s3] sm:$0x1]
  %vm470 = vcmask 523264
  %v471 = vsel %vm470, %v295, 0.0
  %v472 = vsel %vm470, %v298, 0.0
  %v473 = vadd.f32 %v471, %v472
  %v474 = vsel %vm470, %v303, 0.0
  %v475 = vadd.f32 %v473, %v474
  %v476 = vsel %vm470, %v306, 0.0
  %v477 = vadd.f32 %v475, %v476
  %v478 = vsel %vm470, %v311, 0.0
  %v479 = vadd.f32 %v477, %v478
  %v480 = vsel %vm470, %v314, 0.0
  %v481 = vadd.f32 %v479, %v480
  %v482 = vsel %vm470, %v319, 0.0
  %v483 = vadd.f32 %v481, %v482
  %v484 = vsel %vm470, %v322, 0.0
  %v485 = vadd.f32 %v483, %v484
  %v486 = vsel %vm470, %v327, 0.0
  %v487 = vadd.f32 %v485, %v486
  %v488 = vsel %vm470, %v330, 0.0
  %v489 = vadd.f32 %v487, %v488
  %v490 = vsel %vm470, %v335, 0.0
  %v491 = vadd.f32 %v489, %v490
  %v492 = vsel %vm470, %v338, 0.0
  %v493 = vadd.f32 %v491, %v492
  %v494 = vsel %vm470, %v343, 0.0
  %v495 = vadd.f32 %v493, %v494
  %v496 = vsel %vm470, %v346, 0.0
  %v497 = vadd.f32 %v495, %v496
  %v498 = vsel %vm470, %v351, 0.0
  %v499 = vadd.f32 %v497, %v498
  %v500 = vsel %vm470, %v354, 0.0
  %v501 = vadd.f32 %v499, %v500
  %v502 = vsel %vm470, %v359, 0.0
  %v503 = vadd.f32 %v501, %v502
  %v504 = vsel %vm470, %v362, 0.0
  %v505 = vadd.f32 %v503, %v504
  %v506 = vsel %vm470, %v367, 0.0
  %v507 = vadd.f32 %v505, %v506
  %v508 = vsel %vm470, %v370, 0.0
  %v509 = vadd.f32 %v507, %v508
  %v510 = vsel %vm470, %v375, 0.0
  %v511 = vadd.f32 %v509, %v510
  %v512 = vsel %vm470, %v378, 0.0
  %v513 = vadd.f32 %v511, %v512
  %v514 = vsel %vm470, %v383, 0.0
  %v515 = vadd.f32 %v513, %v514
  %v516 = vsel %vm470, %v386, 0.0
  %v517 = vadd.f32 %v515, %v516
  %v518 = vsel %vm470, %v391, 0.0
  %v519 = vadd.f32 %v517, %v518
  %v520 = vsel %vm470, %v394, 0.0
  %v521 = vadd.f32 %v519, %v520
  %v522 = vsel %vm470, %v399, 0.0
  %v523 = vadd.f32 %v521, %v522
  %v524 = vsel %vm470, %v402, 0.0
  %v525 = vadd.f32 %v523, %v524
  %v526 = vsel %vm470, %v407, 0.0
  %v527 = vadd.f32 %v525, %v526
  %v528 = vsel %vm470, %v410, 0.0
  %v529 = vadd.f32 %v527, %v528
  %v530 = vsel %vm470, %v415, 0.0
  %v531 = vadd.f32 %v529, %v530
  %v532 = vsel %vm470, %v418, 0.0
  %v533 = vadd.f32 %v531, %v532
  %v534 = vsel %vm470, %v423, 0.0
  %v535 = vadd.f32 %v533, %v534
  %v536 = vsel %vm470, %v426, 0.0
  %v537 = vadd.f32 %v535, %v536
  %v538 = vsel %vm470, %v431, 0.0
  %v539 = vadd.f32 %v537, %v538
  %v540 = vsel %vm470, %v434, 0.0
  %v541 = vadd.f32 %v539, %v540
  %v542 = vsel %vm470, %v439, 0.0
  %v543 = vadd.f32 %v541, %v542
  %v544 = vsel %vm470, %v442, 0.0
  %v545 = vadd.f32 %v543, %v544
  %v546 = vsel %vm470, %v447, 0.0
  %v547 = vadd.f32 %v545, %v546
  %v548 = vsel %vm470, %v450, 0.0
  %v549 = vadd.f32 %v547, %v548
  %v550 = vsel %vm470, %v455, 0.0
  %v551 = vadd.f32 %v549, %v550
  %v552 = vsel %vm470, %v458, 0.0
  %v553 = vadd.f32 %v551, %v552
  %vm554 = vcmask 517120
  %v555 = vsel %vm554, %v463, 0.0
  %v556 = vadd.f32 %v553, %v555
  %v557 = vrot.slane %v556, 4
  %v558 = vadd.f32 %v556, %v557
  %v559 = vrot.slane %v558, 2
  %v560 = vadd.f32 %v558, %v559
  %v561 = vrot.slane %v560, 1
  %v562 = vadd.f32 %v560, %v561
  %v563 = vmul.f32 %v562, 0.00295858
  %v564 = vmul.f32 %v295, %v295
  %v565 = vmul.f32 %v298, %v298
  %v566 = vmul.f32 %v303, %v303
  %v567 = vmul.f32 %v306, %v306
  %v568 = vmul.f32 %v311, %v311
  %v569 = vmul.f32 %v314, %v314
  %v570 = vmul.f32 %v319, %v319
  %v571 = vmul.f32 %v322, %v322
  %v572 = vmul.f32 %v327, %v327
  %v573 = vmul.f32 %v330, %v330
  %v574 = vmul.f32 %v335, %v335
  %v575 = vmul.f32 %v338, %v338
  %v576 = vmul.f32 %v343, %v343
  %v577 = vmul.f32 %v346, %v346
  %v578 = vmul.f32 %v351, %v351
  %v579 = vmul.f32 %v354, %v354
  %v580 = vmul.f32 %v359, %v359
  %v581 = vmul.f32 %v362, %v362
  %v582 = vmul.f32 %v367, %v367
  %v583 = vmul.f32 %v370, %v370
  %v584 = vmul.f32 %v375, %v375
  %v585 = vmul.f32 %v378, %v378
  %v586 = vmul.f32 %v383, %v383
  %v587 = vmul.f32 %v386, %v386
  %v588 = vmul.f32 %v391, %v391
  %v589 = vmul.f32 %v394, %v394
  %v590 = vmul.f32 %v399, %v399
  %v591 = vmul.f32 %v402, %v402
  %v592 = vmul.f32 %v407, %v407
  %v593 = vmul.f32 %v410, %v410
  %v594 = vmul.f32 %v415, %v415
  %v595 = vmul.f32 %v418, %v418
  %v596 = vmul.f32 %v423, %v423
  %v597 = vmul.f32 %v426, %v426
  %v598 = vmul.f32 %v431, %v431
  %v599 = vmul.f32 %v434, %v434
  %v600 = vmul.f32 %v439, %v439
  %v601 = vmul.f32 %v442, %v442
  %v602 = vmul.f32 %v447, %v447
  %v603 = vmul.f32 %v450, %v450
  %v604 = vmul.f32 %v455, %v455
  %v605 = vmul.f32 %v458, %v458
  %v606 = vmul.f32 %v463, %v463
  %v607 = vsel %vm470, %v564, 0.0
  %v608 = vsel %vm470, %v565, 0.0
  %v609 = vadd.f32 %v607, %v608
  %v610 = vsel %vm470, %v566, 0.0
  %v611 = vadd.f32 %v609, %v610
  %v612 = vsel %vm470, %v567, 0.0
  %v613 = vadd.f32 %v611, %v612
  %v614 = vsel %vm470, %v568, 0.0
  %v615 = vadd.f32 %v613, %v614
  %v616 = vsel %vm470, %v569, 0.0
  %v617 = vadd.f32 %v615, %v616
  %v618 = vsel %vm470, %v570, 0.0
  %v619 = vadd.f32 %v617, %v618
  %v620 = vsel %vm470, %v571, 0.0
  %v621 = vadd.f32 %v619, %v620
  %v622 = vsel %vm470, %v572, 0.0
  %v623 = vadd.f32 %v621, %v622
  %v624 = vsel %vm470, %v573, 0.0
  %v625 = vadd.f32 %v623, %v624
  %v626 = vsel %vm470, %v574, 0.0
  %v627 = vadd.f32 %v625, %v626
  %v628 = vsel %vm470, %v575, 0.0
  %v629 = vadd.f32 %v627, %v628
  %v630 = vsel %vm470, %v576, 0.0
  %v631 = vadd.f32 %v629, %v630
  %v632 = vsel %vm470, %v577, 0.0
  %v633 = vadd.f32 %v631, %v632
  %v634 = vsel %vm470, %v578, 0.0
  %v635 = vadd.f32 %v633, %v634
  %v636 = vsel %vm470, %v579, 0.0
  %v637 = vadd.f32 %v635, %v636
  %v638 = vsel %vm470, %v580, 0.0
  %v639 = vadd.f32 %v637, %v638
  %v640 = vsel %vm470, %v581, 0.0
  %v641 = vadd.f32 %v639, %v640
  %v642 = vsel %vm470, %v582, 0.0
  %v643 = vadd.f32 %v641, %v642
  %v644 = vsel %vm470, %v583, 0.0
  %v645 = vadd.f32 %v643, %v644
  %v646 = vsel %vm470, %v584, 0.0
  %v647 = vadd.f32 %v645, %v646
  %v648 = vsel %vm470, %v585, 0.0
  %v649 = vadd.f32 %v647, %v648
  %v650 = vsel %vm470, %v586, 0.0
  %v651 = vadd.f32 %v649, %v650
  %v652 = vsel %vm470, %v587, 0.0
  %v653 = vadd.f32 %v651, %v652
  %v654 = vsel %vm470, %v588, 0.0
  %v655 = vadd.f32 %v653, %v654
  %v656 = vsel %vm470, %v589, 0.0
  %v657 = vadd.f32 %v655, %v656
  %v658 = vsel %vm470, %v590, 0.0
  %v659 = vadd.f32 %v657, %v658
  %v660 = vsel %vm470, %v591, 0.0
  %v661 = vadd.f32 %v659, %v660
  %v662 = vsel %vm470, %v592, 0.0
  %v663 = vadd.f32 %v661, %v662
  %v664 = vsel %vm470, %v593, 0.0
  %v665 = vadd.f32 %v663, %v664
  %v666 = vsel %vm470, %v594, 0.0
  %v667 = vadd.f32 %v665, %v666
  %v668 = vsel %vm470, %v595, 0.0
  %v669 = vadd.f32 %v667, %v668
  %v670 = vsel %vm470, %v596, 0.0
  %v671 = vadd.f32 %v669, %v670
  %v672 = vsel %vm470, %v597, 0.0
  %v673 = vadd.f32 %v671, %v672
  %v674 = vsel %vm470, %v598, 0.0
  %v675 = vadd.f32 %v673, %v674
  %v676 = vsel %vm470, %v599, 0.0
  %v677 = vadd.f32 %v675, %v676
  %v678 = vsel %vm470, %v600, 0.0
  %v679 = vadd.f32 %v677, %v678
  %v680 = vsel %vm470, %v601, 0.0
  %v681 = vadd.f32 %v679, %v680
  %v682 = vsel %vm470, %v602, 0.0
  %v683 = vadd.f32 %v681, %v682
  %v684 = vsel %vm470, %v603, 0.0
  %v685 = vadd.f32 %v683, %v684
  %v686 = vsel %vm470, %v604, 0.0
  %v687 = vadd.f32 %v685, %v686
  %v688 = vsel %vm470, %v605, 0.0
  %v689 = vadd.f32 %v687, %v688
  %v690 = vsel %vm554, %v606, 0.0
  %v691 = vadd.f32 %v689, %v690
  %v692 = vrot.slane %v691, 4
  %v693 = vadd.f32 %v691, %v692
  %v694 = vrot.slane %v693, 2
  %v695 = vadd.f32 %v693, %v694
  %v696 = vrot.slane %v695, 1
  %v697 = vadd.f32 %v695, %v696
  %v698 = vmul.f32 %v697, 0.00295858
  %v699 = vmul.f32 %v563, %v563
  %v700 = vsub.f32 %v698, %v699
  %v701 = vsub.f32 %v295, %v563
  %v702 = vsub.f32 %v298, %v563
  %v703 = vsub.f32 %v303, %v563
  %v704 = vsub.f32 %v306, %v563
  %v705 = vsub.f32 %v311, %v563
  %v706 = vsub.f32 %v314, %v563
  %v707 = vsub.f32 %v319, %v563
  %v708 = vsub.f32 %v322, %v563
  %v709 = vsub.f32 %v327, %v563
  %v710 = vsub.f32 %v330, %v563
  %v711 = vsub.f32 %v335, %v563
  %v712 = vsub.f32 %v338, %v563
  %v713 = vsub.f32 %v343, %v563
  %v714 = vsub.f32 %v346, %v563
  %v715 = vsub.f32 %v351, %v563
  %v716 = vsub.f32 %v354, %v563
  %v717 = vsub.f32 %v359, %v563
  %v718 = vsub.f32 %v362, %v563
  %v719 = vsub.f32 %v367, %v563
  %v720 = vsub.f32 %v370, %v563
  %v721 = vsub.f32 %v375, %v563
  %v722 = vsub.f32 %v378, %v563
  %v723 = vsub.f32 %v383, %v563
  %v724 = vsub.f32 %v386, %v563
  %v725 = vsub.f32 %v391, %v563
  %v726 = vsub.f32 %v394, %v563
  %v727 = vsub.f32 %v399, %v563
  %v728 = vsub.f32 %v402, %v563
  %v729 = vsub.f32 %v407, %v563
  %v730 = vsub.f32 %v410, %v563
  %v731 = vsub.f32 %v415, %v563
  %v732 = vsub.f32 %v418, %v563
  %v733 = vsub.f32 %v423, %v563
  %v734 = vsub.f32 %v426, %v563
  %v735 = vsub.f32 %v431, %v563
  %v736 = vsub.f32 %v434, %v563
  %v737 = vsub.f32 %v439, %v563
  %v738 = vsub.f32 %v442, %v563
  %v739 = vsub.f32 %v447, %v563
  %v740 = vsub.f32 %v450, %v563
  %v741 = vsub.f32 %v455, %v563
  %v742 = vsub.f32 %v458, %v563
  %v743 = vsub.f32 %v463, %v563
  %v744 = vadd.f32 %v700, 1e-05
  %v745 = vrsqrt.pop %v744
  %v746 = vmul.f32 %v701, %v745
  %v747 = vmul.f32 %v702, %v745
  %v748 = vmul.f32 %v703, %v745
  %v749 = vmul.f32 %v704, %v745
  %v750 = vmul.f32 %v705, %v745
  %v751 = vmul.f32 %v706, %v745
  %v752 = vmul.f32 %v707, %v745
  %v753 = vmul.f32 %v708, %v745
  %v754 = vmul.f32 %v709, %v745
  %v755 = vmul.f32 %v710, %v745
  %v756 = vmul.f32 %v711, %v745
  %v757 = vmul.f32 %v712, %v745
  %v758 = vmul.f32 %v713, %v745
  %v759 = vmul.f32 %v714, %v745
  %v760 = vmul.f32 %v715, %v745
  %v761 = vmul.f32 %v716, %v745
  %v762 = vmul.f32 %v717, %v745
  %v763 = vmul.f32 %v718, %v745
  %v764 = vmul.f32 %v719, %v745
  %v765 = vmul.f32 %v720, %v745
  %v766 = vmul.f32 %v721, %v745
  %v767 = vmul.f32 %v722, %v745
  %v768 = vmul.f32 %v723, %v745
  %v769 = vmul.f32 %v724, %v745
  %v770 = vmul.f32 %v725, %v745
  %v771 = vmul.f32 %v726, %v745
  %v772 = vmul.f32 %v727, %v745
  %v773 = vmul.f32 %v728, %v745
  %v774 = vmul.f32 %v729, %v745
  %v775 = vmul.f32 %v730, %v745
  %v776 = vmul.f32 %v731, %v745
  %v777 = vmul.f32 %v732, %v745
  %v778 = vmul.f32 %v733, %v745
  %v779 = vmul.f32 %v734, %v745
  %v780 = vmul.f32 %v735, %v745
  %v781 = vmul.f32 %v736, %v745
  %v782 = vmul.f32 %v737, %v745
  %v783 = vmul.f32 %v738, %v745
  %v784 = vmul.f32 %v739, %v745
  %v785 = vmul.f32 %v740, %v745
  %v786 = vmul.f32 %v741, %v745
  %v787 = vmul.f32 %v742, %v745
  %v788 = vmul.f32 %v743, %v745
  %v790 = vlaneseq
  %v791 = vshrl.u32 %v790, 7
  %v792 = vsub.s32 0, %v791
  %v793 = vrot.slane %v468, %v792
  %v795 = vmul.f32 %v746, %v793
  %v796 = vmul.f32 %v747, %v793
  %v797 = vmul.f32 %v748, %v793
  %v798 = vmul.f32 %v749, %v793
  %v799 = vmul.f32 %v750, %v793
  %v800 = vmul.f32 %v751, %v793
  %v801 = vmul.f32 %v752, %v793
  %v802 = vmul.f32 %v753, %v793
  %v803 = vmul.f32 %v754, %v793
  %v804 = vmul.f32 %v755, %v793
  %v805 = vmul.f32 %v756, %v793
  %v806 = vmul.f32 %v757, %v793
  %v807 = vmul.f32 %v758, %v793
  %v808 = vmul.f32 %v759, %v793
  %v809 = vmul.f32 %v760, %v793
  %v810 = vmul.f32 %v761, %v793
  %v811 = vmul.f32 %v762, %v793
  %v812 = vmul.f32 %v763, %v793
  %v813 = vmul.f32 %v764, %v793
  %v814 = vmul.f32 %v765, %v793
  %v815 = vmul.f32 %v766, %v793
  %v816 = vmul.f32 %v767, %v793
  %v817 = vmul.f32 %v768, %v793
  %v818 = vmul.f32 %v769, %v793
  %v819 = vmul.f32 %v770, %v793
  %v820 = vmul.f32 %v771, %v793
  %v821 = vmul.f32 %v772, %v793
  %v822 = vmul.f32 %v773, %v793
  %v823 = vmul.f32 %v774, %v793
  %v824 = vmul.f32 %v775, %v793
  %v825 = vmul.f32 %v776, %v793
  %v826 = vmul.f32 %v777, %v793
  %v827 = vmul.f32 %v778, %v793
  %v828 = vmul.f32 %v779, %v793
  %v829 = vmul.f32 %v780, %v793
  %v830 = vmul.f32 %v781, %v793
  %v831 = vmul.f32 %v782, %v793
  %v832 = vmul.f32 %v783, %v793
  %v833 = vmul.f32 %v784, %v793
  %v834 = vmul.f32 %v785, %v793
  %v835 = vmul.f32 %v786, %v793
  %v836 = vmul.f32 %v787, %v793
  %v837 = vmul.f32 %v788, %v793
  %v839 = vlaneseq
  %v840 = vshrl.u32 %v839, 7
  %v841 = vsub.s32 0, %v840
  %v842 = vrot.slane %v469, %v841
  %v844 = vadd.f32 %v795, %v842
  %v845 = vadd.f32 %v796, %v842
  %v846 = vadd.f32 %v797, %v842
  %v847 = vadd.f32 %v798, %v842
  %v848 = vadd.f32 %v799, %v842
  %v849 = vadd.f32 %v800, %v842
  %v850 = vadd.f32 %v801, %v842
  %v851 = vadd.f32 %v802, %v842
  %v852 = vadd.f32 %v803, %v842
  %v853 = vadd.f32 %v804, %v842
  %v854 = vadd.f32 %v805, %v842
  %v855 = vadd.f32 %v806, %v842
  %v856 = vadd.f32 %v807, %v842
  %v857 = vadd.f32 %v808, %v842
  %v858 = vadd.f32 %v809, %v842
  %v859 = vadd.f32 %v810, %v842
  %v860 = vadd.f32 %v811, %v842
  %v861 = vadd.f32 %v812, %v842
  %v862 = vadd.f32 %v813, %v842
  %v863 = vadd.f32 %v814, %v842
  %v864 = vadd.f32 %v815, %v842
  %v865 = vadd.f32 %v816, %v842
  %v866 = vadd.f32 %v817, %v842
  %v867 = vadd.f32 %v818, %v842
  %v868 = vadd.f32 %v819, %v842
  %v869 = vadd.f32 %v820, %v842
  %v870 = vadd.f32 %v821, %v842
  %v871 = vadd.f32 %v822, %v842
  %v872 = vadd.f32 %v823, %v842
  %v873 = vadd.f32 %v824, %v842
  %v874 = vadd.f32 %v825, %v842
  %v875 = vadd.f32 %v826, %v842
  %v876 = vadd.f32 %v827, %v842
  %v877 = vadd.f32 %v828, %v842
  %v878 = vadd.f32 %v829, %v842
  %v879 = vadd.f32 %v830, %v842
  %v880 = vadd.f32 %v831, %v842
  %v881 = vadd.f32 %v832, %v842
  %v882 = vadd.f32 %v833, %v842
  %v883 = vadd.f32 %v834, %v842
  %v884 = vadd.f32 %v835, %v842
  %v885 = vadd.f32 %v836, %v842
  %v886 = vadd.f32 %v837, %v842
  %vm887 = vcmp.ge.f32.partialorder %v844, 0.0
  %vm888 = vcmp.ge.f32.partialorder %v845, 0.0
  %vm889 = vcmp.ge.f32.partialorder %v846, 0.0
  %vm890 = vcmp.ge.f32.partialorder %v847, 0.0
  %vm891 = vcmp.ge.f32.partialorder %v848, 0.0
  %vm892 = vcmp.ge.f32.partialorder %v849, 0.0
  %vm893 = vcmp.ge.f32.partialorder %v850, 0.0
  %vm894 = vcmp.ge.f32.partialorder %v851, 0.0
  %vm895 = vcmp.ge.f32.partialorder %v852, 0.0
  %vm896 = vcmp.ge.f32.partialorder %v853, 0.0
  %vm897 = vcmp.ge.f32.partialorder %v854, 0.0
  %vm898 = vcmp.ge.f32.partialorder %v855, 0.0
  %vm899 = vcmp.ge.f32.partialorder %v856, 0.0
  %vm900 = vcmp.ge.f32.partialorder %v857, 0.0
  %vm901 = vcmp.ge.f32.partialorder %v858, 0.0
  %vm902 = vcmp.ge.f32.partialorder %v859, 0.0
  %vm903 = vcmp.ge.f32.partialorder %v860, 0.0
  %vm904 = vcmp.ge.f32.partialorder %v861, 0.0
  %vm905 = vcmp.ge.f32.partialorder %v862, 0.0
  %vm906 = vcmp.ge.f32.partialorder %v863, 0.0
  %vm907 = vcmp.ge.f32.partialorder %v864, 0.0
  %vm908 = vcmp.ge.f32.partialorder %v865, 0.0
  %vm909 = vcmp.ge.f32.partialorder %v866, 0.0
  %vm910 = vcmp.ge.f32.partialorder %v867, 0.0
  %vm911 = vcmp.ge.f32.partialorder %v868, 0.0
  %vm912 = vcmp.ge.f32.partialorder %v869, 0.0
  %vm913 = vcmp.ge.f32.partialorder %v870, 0.0
  %vm914 = vcmp.ge.f32.partialorder %v871, 0.0
  %vm915 = vcmp.ge.f32.partialorder %v872, 0.0
  %vm916 = vcmp.ge.f32.partialorder %v873, 0.0
  %vm917 = vcmp.ge.f32.partialorder %v874, 0.0
  %vm918 = vcmp.ge.f32.partialorder %v875, 0.0
  %vm919 = vcmp.ge.f32.partialorder %v876, 0.0
  %vm920 = vcmp.ge.f32.partialorder %v877, 0.0
  %vm921 = vcmp.ge.f32.partialorder %v878, 0.0
  %vm922 = vcmp.ge.f32.partialorder %v879, 0.0
  %vm923 = vcmp.ge.f32.partialorder %v880, 0.0
  %vm924 = vcmp.ge.f32.partialorder %v881, 0.0
  %vm925 = vcmp.ge.f32.partialorder %v882, 0.0
  %vm926 = vcmp.ge.f32.partialorder %v883, 0.0
  %vm927 = vcmp.ge.f32.partialorder %v884, 0.0
  %vm928 = vcmp.ge.f32.partialorder %v885, 0.0
  %vm929 = vcmp.ge.f32.partialorder %v886, 0.0
  %v930 = vmul.f32 %v844, 0.2
  %v931 = vmul.f32 %v845, 0.2
  %v932 = vmul.f32 %v846, 0.2
  %v933 = vmul.f32 %v847, 0.2
  %v934 = vmul.f32 %v848, 0.2
  %v935 = vmul.f32 %v849, 0.2
  %v936 = vmul.f32 %v850, 0.2
  %v937 = vmul.f32 %v851, 0.2
  %v938 = vmul.f32 %v852, 0.2
  %v939 = vmul.f32 %v853, 0.2
  %v940 = vmul.f32 %v854, 0.2
  %v941 = vmul.f32 %v855, 0.2
  %v942 = vmul.f32 %v856, 0.2
  %v943 = vmul.f32 %v857, 0.2
  %v944 = vmul.f32 %v858, 0.2
  %v945 = vmul.f32 %v859, 0.2
  %v946 = vmul.f32 %v860, 0.2
  %v947 = vmul.f32 %v861, 0.2
  %v948 = vmul.f32 %v862, 0.2
  %v949 = vmul.f32 %v863, 0.2
  %v950 = vmul.f32 %v864, 0.2
  %v951 = vmul.f32 %v865, 0.2
  %v952 = vmul.f32 %v866, 0.2
  %v953 = vmul.f32 %v867, 0.2
  %v954 = vmul.f32 %v868, 0.2
  %v955 = vmul.f32 %v869, 0.2
  %v956 = vmul.f32 %v870, 0.2
  %v957 = vmul.f32 %v871, 0.2
  %v958 = vmul.f32 %v872, 0.2
  %v959 = vmul.f32 %v873, 0.2
  %v960 = vmul.f32 %v874, 0.2
  %v961 = vmul.f32 %v875, 0.2
  %v962 = vmul.f32 %v876, 0.2
  %v963 = vmul.f32 %v877, 0.2
  %v964 = vmul.f32 %v878, 0.2
  %v965 = vmul.f32 %v879, 0.2
  %v966 = vmul.f32 %v880, 0.2
  %v967 = vmul.f32 %v881, 0.2
  %v968 = vmul.f32 %v882, 0.2
  %v969 = vmul.f32 %v883, 0.2
  %v970 = vmul.f32 %v884, 0.2
  %v971 = vmul.f32 %v885, 0.2
  %v972 = vmul.f32 %v886, 0.2
  %v973 = vsel %vm887, %v844, %v930
  %v974 = vsel %vm888, %v845, %v931
  %v975 = vsel %vm889, %v846, %v932
  %v976 = vsel %vm890, %v847, %v933
  %v977 = vsel %vm891, %v848, %v934
  %v978 = vsel %vm892, %v849, %v935
  %v979 = vsel %vm893, %v850, %v936
  %v980 = vsel %vm894, %v851, %v937
  %v981 = vsel %vm895, %v852, %v938
  %v982 = vsel %vm896, %v853, %v939
  %v983 = vsel %vm897, %v854, %v940
  %v984 = vsel %vm898, %v855, %v941
  %v985 = vsel %vm899, %v856, %v942
  %v986 = vsel %vm900, %v857, %v943
  %v987 = vsel %vm901, %v858, %v944
  %v988 = vsel %vm902, %v859, %v945
  %v989 = vsel %vm903, %v860, %v946
  %v990 = vsel %vm904, %v861, %v947
  %v991 = vsel %vm905, %v862, %v948
  %v992 = vsel %vm906, %v863, %v949
  %v993 = vsel %vm907, %v864, %v950
  %v994 = vsel %vm908, %v865, %v951
  %v995 = vsel %vm909, %v866, %v952
  %v996 = vsel %vm910, %v867, %v953
  %v997 = vsel %vm911, %v868, %v954
  %v998 = vsel %vm912, %v869, %v955
  %v999 = vsel %vm913, %v870, %v956
  %v1000 = vsel %vm914, %v871, %v957
  %v1001 = vsel %vm915, %v872, %v958
  %v1002 = vsel %vm916, %v873, %v959
  %v1003 = vsel %vm917, %v874, %v960
  %v1004 = vsel %vm918, %v875, %v961
  %v1005 = vsel %vm919, %v876, %v962
  %v1006 = vsel %vm920, %v877, %v963
  %v1007 = vsel %vm921, %v878, %v964
  %v1008 = vsel %vm922, %v879, %v965
  %v1009 = vsel %vm923, %v880, %v966
  %v1010 = vsel %vm924, %v881, %v967
  %v1011 = vsel %vm925, %v882, %v968
  %v1012 = vsel %vm926, %v883, %v969
  %v1013 = vsel %vm927, %v884, %v970
  %v1014 = vsel %vm928, %v885, %v971
  %v1015 = vsel %vm929, %v886, %v972
  %1016 = vst.msk [vmem:[#allocation2] sm:$0xff] %vm470, %v973
  %1017 = vst.msk [vmem:[#allocation2 + $0x8] sm:$0xff] %vm470, %v974
  %1018 = vst.msk [vmem:[#allocation2 + $0x10] sm:$0xff] %vm470, %v975
  %1019 = vst.msk [vmem:[#allocation2 + $0x18] sm:$0xff] %vm470, %v976
  %1020 = vst.msk [vmem:[#allocation2 + $0x20] sm:$0xff] %vm470, %v977
  %1021 = vst.msk [vmem:[#allocation2 + $0x28] sm:$0xff] %vm470, %v978
  %1022 = vst.msk [vmem:[#allocation2 + $0x30] sm:$0xff] %vm470, %v979
  %1023 = vst.msk [vmem:[#allocation2 + $0x38] sm:$0xff] %vm470, %v980
  %1024 = vst.msk [vmem:[#allocation2 + $0x40] sm:$0xff] %vm470, %v981
  %1025 = vst.msk [vmem:[#allocation2 + $0x48] sm:$0xff] %vm470, %v982
  %1026 = vst.msk [vmem:[#allocation2 + $0x50] sm:$0xff] %vm470, %v983
  %1027 = vst.msk [vmem:[#allocation2 + $0x58] sm:$0xff] %vm470, %v984
  %1028 = vst.msk [vmem:[#allocation2 + $0x60] sm:$0xff] %vm470, %v985
  %1029 = vst.msk [vmem:[#allocation2 + $0x68] sm:$0xff] %vm470, %v986
  %1030 = vst.msk [vmem:[#allocation2 + $0x70] sm:$0xff] %vm470, %v987
  %1031 = vst.msk [vmem:[#allocation2 + $0x78] sm:$0xff] %vm470, %v988
  %1032 = vst.msk [vmem:[#allocation2 + $0x80] sm:$0xff] %vm470, %v989
  %1033 = vst.msk [vmem:[#allocation2 + $0x88] sm:$0xff] %vm470, %v990
  %1034 = vst.msk [vmem:[#allocation2 + $0x90] sm:$0xff] %vm470, %v991
  %1035 = vst.msk [vmem:[#allocation2 + $0x98] sm:$0xff] %vm470, %v992
  %1036 = vst.msk [vmem:[#allocation2 + $0xa0] sm:$0xff] %vm470, %v993
  %1037 = vst.msk [vmem:[#allocation2 + $0xa8] sm:$0xff] %vm470, %v994
  %1038 = vst.msk [vmem:[#allocation2 + $0xb0] sm:$0xff] %vm470, %v995
  %1039 = vst.msk [vmem:[#allocation2 + $0xb8] sm:$0xff] %vm470, %v996
  %1040 = vst.msk [vmem:[#allocation2 + $0xc0] sm:$0xff] %vm470, %v997
  %1041 = vst.msk [vmem:[#allocation2 + $0xc8] sm:$0xff] %vm470, %v998
  %1042 = vst.msk [vmem:[#allocation2 + $0xd0] sm:$0xff] %vm470, %v999
  %1043 = vst.msk [vmem:[#allocation2 + $0xd8] sm:$0xff] %vm470, %v1000
  %1044 = vst.msk [vmem:[#allocation2 + $0xe0] sm:$0xff] %vm470, %v1001
  %1045 = vst.msk [vmem:[#allocation2 + $0xe8] sm:$0xff] %vm470, %v1002
  %1046 = vst.msk [vmem:[#allocation2 + $0xf0] sm:$0xff] %vm470, %v1003
  %1047 = vst.msk [vmem:[#allocation2 + $0xf8] sm:$0xff] %vm470, %v1004
  %1048 = vst.msk [vmem:[#allocation2 + $0x100] sm:$0xff] %vm470, %v1005
  %1049 = vst.msk [vmem:[#allocation2 + $0x108] sm:$0xff] %vm470, %v1006
  %1050 = vst.msk [vmem:[#allocation2 + $0x110] sm:$0xff] %vm470, %v1007
  %1051 = vst.msk [vmem:[#allocation2 + $0x118] sm:$0xff] %vm470, %v1008
  %1052 = vst.msk [vmem:[#allocation2 + $0x120] sm:$0xff] %vm470, %v1009
  %1053 = vst.msk [vmem:[#allocation2 + $0x128] sm:$0xff] %vm470, %v1010
  %1054 = vst.msk [vmem:[#allocation2 + $0x130] sm:$0xff] %vm470, %v1011
  %1055 = vst.msk [vmem:[#allocation2 + $0x138] sm:$0xff] %vm470, %v1012
  %1056 = vst.msk [vmem:[#allocation2 + $0x140] sm:$0xff] %vm470, %v1013
  %1057 = vst.msk [vmem:[#allocation2 + $0x148] sm:$0xff] %vm470, %v1014
  %1058 = vst.msk [vmem:[#allocation2 + $0x150] sm:$0x3] %vm554, %v1015
  %v1059 = vld [vmem:[#allocation2] sm:$0x1f]
  %vm1060 = vcmask 520192
  %1061 = vst.msk [vmem:[#allocation3] sm:$0x1f] %vm1060, %v1059
  %v1062 = vld [vmem:[#allocation2 + $0x7] sm:$0x1f]
  %1064 = vrot.lane.b32.xlu0 %v1062, 64
  %v1065 = vpop.permute.xlu0 %1064
  %vm1067 = vcmask 1044992
  %1068 = vst.msk [vmem:[#allocation3] sm:$0x1f] %vm1067, %v1065
  %v1069 = vld [vmem:[#allocation2 + $0x1] sm:$0x1f]
  %1070 = vst.msk [vmem:[#allocation3 + $0x8] sm:$0x1f] %vm1060, %v1069
  %v1071 = vld [vmem:[#allocation2 + $0x8] sm:$0x1f]
  %1073 = vrot.lane.b32.xlu0 %v1071, 64
  %v1074 = vpop.permute.xlu0 %1073
  %1076 = vst.msk [vmem:[#allocation3 + $0x8] sm:$0x1f] %vm1067, %v1074
  %v1077 = vld [vmem:[#allocation2 + $0x5b] sm:$0x1f]
  %1078 = vst.msk [vmem:[#allocation3 + $0x10] sm:$0x1f] %vm1060, %v1077
  %v1079 = vld [vmem:[#allocation2 + $0x62] sm:$0x1f]
  %1081 = vrot.lane.b32.xlu0 %v1079, 64
  %v1082 = vpop.permute.xlu0 %1081
  %1084 = vst.msk [vmem:[#allocation3 + $0x10] sm:$0x1f] %vm1067, %v1082
  %v1085 = vld [vmem:[#allocation2 + $0x5c] sm:$0x1f]
  %1086 = vst.msk [vmem:[#allocation3 + $0x18] sm:$0x1f] %vm1060, %v1085
  %v1087 = vld [vmem:[#allocation2 + $0x63] sm:$0x1f]
  %1089 = vrot.lane.b32.xlu0 %v1087, 64
  %v1090 = vpop.permute.xlu0 %1089
  %1092 = vst.msk [vmem:[#allocation3 + $0x18] sm:$0x1f] %vm1067, %v1090
  %v1093 = vld [vmem:[#allocation2 + $0xd] sm:$0x1f]
  %1094 = vst.msk [vmem:[#allocation3 + $0x20] sm:$0x1f] %vm1060, %v1093
  %v1095 = vld [vmem:[#allocation2 + $0x14] sm:$0x1f]
  %1097 = vrot.lane.b32.xlu0 %v1095, 64
  %v1098 = vpop.permute.xlu0 %1097
  %1100 = vst.msk [vmem:[#allocation3 + $0x20] sm:$0x1f] %vm1067, %v1098
  %v1101 = vld [vmem:[#allocation2 + $0xe] sm:$0x1f]
  %1102 = vst.msk [vmem:[#allocation3 + $0x28] sm:$0x1f] %vm1060, %v1101
  %v1103 = vld [vmem:[#allocation2 + $0x15] sm:$0x1f]
  %1105 = vrot.lane.b32.xlu0 %v1103, 64
  %v1106 = vpop.permute.xlu0 %1105
  %1108 = vst.msk [vmem:[#allocation3 + $0x28] sm:$0x1f] %vm1067, %v1106
  %v1109 = vld [vmem:[#allocation2 + $0x68] sm:$0x1f]
  %1110 = vst.msk [vmem:[#allocation3 + $0x30] sm:$0x1f] %vm1060, %v1109
  %v1111 = vld [vmem:[#allocation2 + $0x6f] sm:$0x1f]
  %1113 = vrot.lane.b32.xlu0 %v1111, 64
  %v1114 = vpop.permute.xlu0 %1113
  %1116 = vst.msk [vmem:[#allocation3 + $0x30] sm:$0x1f] %vm1067, %v1114
  %v1117 = vld [vmem:[#allocation2 + $0x69] sm:$0x1f]
  %1118 = vst.msk [vmem:[#allocation3 + $0x38] sm:$0x1f] %vm1060, %v1117
  %v1119 = vld [vmem:[#allocation2 + $0x70] sm:$0x1f]
  %1121 = vrot.lane.b32.xlu0 %v1119, 64
  %v1122 = vpop.permute.xlu0 %1121
  %1124 = vst.msk [vmem:[#allocation3 + $0x38] sm:$0x1f] %vm1067, %v1122
  %v1125 = vld [vmem:[#allocation2 + $0xd] sm:$0x1f]
  %v1127 = vrot.slane %v1125, 3
  %vm1129 = vcmask 523269
  %1130 = vst.msk [vmem:[#allocation3] sm:$0xe0] %vm1129, %v1127
  %1131 = vst.msk [vmem:[#allocation3 + $0x40] sm:$0x3] %vm554, %v1127
  %v1132 = vld [vmem:[#allocation2 + $0x14] sm:$0x1f]
  %v1134 = vrot.slane %v1132, 3
  %1135 = vrot.lane.b32.xlu0 %v1134, 64
  %v1136 = vpop.permute.xlu0 %1135
  %vm1138 = vcmask 1048069
  %1139 = vst.msk [vmem:[#allocation3] sm:$0xe0] %vm1138, %v1136
  %vm1140 = vcmask 1041920
  %1141 = vst.msk [vmem:[#allocation3 + $0x40] sm:$0x3] %vm1140, %v1136
  %v1142 = vld [vmem:[#allocation2 + $0xe] sm:$0x1f]
  %v1144 = vrot.slane %v1142, 3
  %1146 = vst.msk [vmem:[#allocation3 + $0x8] sm:$0xe0] %vm1129, %v1144
  %1147 = vst.msk [vmem:[#allocation3 + $0x48] sm:$0x3] %vm554, %v1144
  %v1148 = vld [vmem:[#allocation2 + $0x15] sm:$0x1f]
  %v1150 = vrot.slane %v1148, 3
  %1151 = vrot.lane.b32.xlu0 %v1150, 64
  %v1152 = vpop.permute.xlu0 %1151
  %1154 = vst.msk [vmem:[#allocation3 + $0x8] sm:$0xe0] %vm1138, %v1152
  %1155 = vst.msk [vmem:[#allocation3 + $0x48] sm:$0x3] %vm1140, %v1152
  %v1156 = vld [vmem:[#allocation2 + $0x68] sm:$0x1f]
  %v1158 = vrot.slane %v1156, 3
  %1160 = vst.msk [vmem:[#allocation3 + $0x10] sm:$0xe0] %vm1129, %v1158
  %1161 = vst.msk [vmem:[#allocation3 + $0x50] sm:$0x3] %vm554, %v1158
  %v1162 = vld [vmem:[#allocation2 + $0x6f] sm:$0x1f]
  %v1164 = vrot.slane %v1162, 3
  %1165 = vrot.lane.b32.xlu0 %v1164, 64
  %v1166 = vpop.permute.xlu0 %1165
  %1168 = vst.msk [vmem:[#allocation3 + $0x10] sm:$0xe0] %vm1138, %v1166
  %1169 = vst.msk [vmem:[#allocation3 + $0x50] sm:$0x3] %vm1140, %v1166
  %v1170 = vld [vmem:[#allocation2 + $0x69] sm:$0x1f]
  %v1172 = vrot.slane %v1170, 3
  %1174 = vst.msk [vmem:[#allocation3 + $0x18] sm:$0xe0] %vm1129, %v1172
  %1175 = vst.msk [vmem:[#allocation3 + $0x58] sm:$0x3] %vm554, %v1172
  %v1176 = vld [vmem:[#allocation2 + $0x70] sm:$0x1f]
  %v1178 = vrot.slane %v1176, 3
  %1179 = vrot.lane.b32.xlu0 %v1178, 64
  %v1180 = vpop.permute.xlu0 %1179
  %1182 = vst.msk [vmem:[#allocation3 + $0x18] sm:$0xe0] %vm1138, %v1180
  %1183 = vst.msk [vmem:[#allocation3 + $0x58] sm:$0x3] %vm1140, %v1180
  %v1184 = vld [vmem:[#allocation2 + $0x1a] sm:$0x1f]
  %v1186 = vrot.slane %v1184, 3
  %1188 = vst.msk [vmem:[#allocation3 + $0x20] sm:$0xe0] %vm1129, %v1186
  %1189 = vst.msk [vmem:[#allocation3 + $0x60] sm:$0x3] %vm554, %v1186
  %v1190 = vld [vmem:[#allocation2 + $0x21] sm:$0x1f]
  %v1192 = vrot.slane %v1190, 3
  %1193 = vrot.lane.b32.xlu0 %v1192, 64
  %v1194 = vpop.permute.xlu0 %1193
  %1196 = vst.msk [vmem:[#allocation3 + $0x20] sm:$0xe0] %vm1138, %v1194
  %1197 = vst.msk [vmem:[#allocation3 + $0x60] sm:$0x3] %vm1140, %v1194
  %v1198 = vld [vmem:[#allocation2 + $0x1b] sm:$0x1f]
  %v1200 = vrot.slane %v1198, 3
  %1202 = vst.msk [vmem:[#allocation3 + $0x28] sm:$0xe0] %vm1129, %v1200
  %1203 = vst.msk [vmem:[#allocation3 + $0x68] sm:$0x3] %vm554, %v1200
  %v1204 = vld [vmem:[#allocation2 + $0x22] sm:$0x1f]
  %v1206 = vrot.slane %v1204, 3
  %1207 = vrot.lane.b32.xlu0 %v1206, 64
  %v1208 = vpop.permute.xlu0 %1207
  %1210 = vst.msk [vmem:[#allocation3 + $0x28] sm:$0xe0] %vm1138, %v1208
  %1211 = vst.msk [vmem:[#allocation3 + $0x68] sm:$0x3] %vm1140, %v1208
  %v1212 = vld [vmem:[#allocation2 + $0x75] sm:$0x1f]
  %v1214 = vrot.slane %v1212, 3
  %1216 = vst.msk [vmem:[#allocation3 + $0x30] sm:$0xe0] %vm1129, %v1214
  %1217 = vst.msk [vmem:[#allocation3 + $0x70] sm:$0x3] %vm554, %v1214
  %v1218 = vld [vmem:[#allocation2 + $0x7c] sm:$0x1f]
  %v1220 = vrot.slane %v1218, 3
  %1221 = vrot.lane.b32.xlu0 %v1220, 64
  %v1222 = vpop.permute.xlu0 %1221
  %1224 = vst.msk [vmem:[#allocation3 + $0x30] sm:$0xe0] %vm1138, %v1222
  %1225 = vst.msk [vmem:[#allocation3 + $0x70] sm:$0x3] %vm1140, %v1222
  %v1226 = vld [vmem:[#allocation2 + $0x76] sm:$0x1f]
  %v1228 = vrot.slane %v1226, 3
  %1230 = vst.msk [vmem:[#allocation3 + $0x38] sm:$0xe0] %vm1129, %v1228
  %1231 = vst.msk [vmem:[#allocation3 + $0x78] sm:$0x3] %vm554, %v1228
  %v1232 = vld [vmem:[#allocation2 + $0x7d] sm:$0x1f]
  %v1234 = vrot.slane %v1232, 3
  %1235 = vrot.lane.b32.xlu0 %v1234, 64
  %v1236 = vpop.permute.xlu0 %1235
  %1238 = vst.msk [vmem:[#allocation3 + $0x38] sm:$0xe0] %vm1138, %v1236
  %1239 = vst.msk [vmem:[#allocation3 + $0x78] sm:$0x3] %vm1140, %v1236
  %v1240 = vld [vmem:[#allocation2 + $0x1a] sm:$0x1f]
  %v1242 = vrot.slane %v1240, 6
  %vm1244 = vcmask 522242
  %1245 = vst.msk [vmem:[#allocation3 + $0x40] sm:$0x7c] %vm1244, %v1242
  %v1246 = vld [vmem:[#allocation2 + $0x21] sm:$0x1f]
  %v1248 = vrot.slane %v1246, 6
  %1249 = vrot.lane.b32.xlu0 %v1248, 64
  %v1250 = vpop.permute.xlu0 %1249
  %vm1252 = vcmask 1047042
  %1253 = vst.msk [vmem:[#allocation3 + $0x40] sm:$0x7c] %vm1252, %v1250
  %v1254 = vld [vmem:[#allocation2 + $0x1b] sm:$0x1f]
  %v1256 = vrot.slane %v1254, 6
  %1258 = vst.msk [vmem:[#allocation3 + $0x48] sm:$0x7c] %vm1244, %v1256
  %v1259 = vld [vmem:[#allocation2 + $0x22] sm:$0x1f]
  %v1261 = vrot.slane %v1259, 6
  %1262 = vrot.lane.b32.xlu0 %v1261, 64
  %v1263 = vpop.permute.xlu0 %1262
  %1265 = vst.msk [vmem:[#allocation3 + $0x48] sm:$0x7c] %vm1252, %v1263
  %v1266 = vld [vmem:[#allocation2 + $0x75] sm:$0x1f]
  %v1268 = vrot.slane %v1266, 6
  %1270 = vst.msk [vmem:[#allocation3 + $0x50] sm:$0x7c] %vm1244, %v1268
  %v1271 = vld [vmem:[#allocation2 + $0x7c] sm:$0x1f]
  %v1273 = vrot.slane %v1271, 6
  %1274 = vrot.lane.b32.xlu0 %v1273, 64
  %v1275 = vpop.permute.xlu0 %1274
  %1277 = vst.msk [vmem:[#allocation3 + $0x50] sm:$0x7c] %vm1252, %v1275
  %v1278 = vld [vmem:[#allocation2 + $0x76] sm:$0x1f]
  %v1280 = vrot.slane %v1278, 6
  %1282 = vst.msk [vmem:[#allocation3 + $0x58] sm:$0x7c] %vm1244, %v1280
  %v1283 = vld [vmem:[#allocation2 + $0x7d] sm:$0x1f]
  %v1285 = vrot.slane %v1283, 6
  %1286 = vrot.lane.b32.xlu0 %v1285, 64
  %v1287 = vpop.permute.xlu0 %1286
  %1289 = vst.msk [vmem:[#allocation3 + $0x58] sm:$0x7c] %vm1252, %v1287
  %v1290 = vld [vmem:[#allocation2 + $0x27] sm:$0x1f]
  %v1292 = vrot.slane %v1290, 6
  %1294 = vst.msk [vmem:[#allocation3 + $0x60] sm:$0x7c] %vm1244, %v1292
  %v1295 = vld [vmem:[#allocation2 + $0x2e] sm:$0x1f]
  %v1297 = vrot.slane %v1295, 6
  %1298 = vrot.lane.b32.xlu0 %v1297, 64
  %v1299 = vpop.permute.xlu0 %1298
  %1301 = vst.msk [vmem:[#allocation3 + $0x60] sm:$0x7c] %vm1252, %v1299
  %v1302 = vld [vmem:[#allocation2 + $0x28] sm:$0x1f]
  %v1304 = vrot.slane %v1302, 6
  %1306 = vst.msk [vmem:[#allocation3 + $0x68] sm:$0x7c] %vm1244, %v1304
  %v1307 = vld [vmem:[#allocation2 + $0x2f] sm:$0x1f]
  %v1309 = vrot.slane %v1307, 6
  %1310 = vrot.lane.b32.xlu0 %v1309, 64
  %v1311 = vpop.permute.xlu0 %1310
  %1313 = vst.msk [vmem:[#allocation3 + $0x68] sm:$0x7c] %vm1252, %v1311
  %v1314 = vld [vmem:[#allocation2 + $0x82] sm:$0x1f]
  %v1316 = vrot.slane %v1314, 6
  %1318 = vst.msk [vmem:[#allocation3 + $0x70] sm:$0x7c] %vm1244, %v1316
  %v1319 = vld [vmem:[#allocation2 + $0x89] sm:$0x1f]
  %v1321 = vrot.slane %v1319, 6
  %1322 = vrot.lane.b32.xlu0 %v1321, 64
  %v1323 = vpop.permute.xlu0 %1322
  %1325 = vst.msk [vmem:[#allocation3 + $0x70] sm:$0x7c] %vm1252, %v1323
  %v1326 = vld [vmem:[#allocation2 + $0x83] sm:$0x1f]
  %v1328 = vrot.slane %v1326, 6
  %1330 = vst.msk [vmem:[#allocation3 + $0x78] sm:$0x7c] %vm1244, %v1328
  %v1331 = vld [vmem:[#allocation2 + $0x8a] sm:$0x1f]
  %v1333 = vrot.slane %v1331, 6
  %1334 = vrot.lane.b32.xlu0 %v1333, 64
  %v1335 = vpop.permute.xlu0 %1334
  %1337 = vst.msk [vmem:[#allocation3 + $0x78] sm:$0x7c] %vm1252, %v1335
  %v1338 = vld [vmem:[#allocation2 + $0x27] sm:$0x1f]
  %v1340 = vrot.slane %v1338, 1
  %vm1342 = vcmask 523271
  %1343 = vst.msk [vmem:[#allocation3 + $0x40] sm:$0x80] %vm1342, %v1340
  %vm1344 = vcmask 519168
  %1345 = vst.msk [vmem:[#allocation3 + $0x80] sm:$0xf] %vm1344, %v1340
  %v1346 = vld [vmem:[#allocation2 + $0x2e] sm:$0x1f]
  %v1348 = vrot.slane %v1346, 1
  %1349 = vrot.lane.b32.xlu0 %v1348, 64
  %v1350 = vpop.permute.xlu0 %1349
  %vm1352 = vcmask 1048071
  %1353 = vst.msk [vmem:[#allocation3 + $0x40] sm:$0x80] %vm1352, %v1350
  %vm1354 = vcmask 1043968
  %1355 = vst.msk [vmem:[#allocation3 + $0x80] sm:$0xf] %vm1354, %v1350
  %v1356 = vld [vmem:[#allocation2 + $0x28] sm:$0x1f]
  %v1358 = vrot.slane %v1356, 1
  %1360 = vst.msk [vmem:[#allocation3 + $0x48] sm:$0x80] %vm1342, %v1358
  %1361 = vst.msk [vmem:[#allocation3 + $0x88] sm:$0xf] %vm1344, %v1358
  %v1362 = vld [vmem:[#allocation2 + $0x2f] sm:$0x1f]
  %v1364 = vrot.slane %v1362, 1
  %1365 = vrot.lane.b32.xlu0 %v1364, 64
  %v1366 = vpop.permute.xlu0 %1365
  %1368 = vst.msk [vmem:[#allocation3 + $0x48] sm:$0x80] %vm1352, %v1366
  %1369 = vst.msk [vmem:[#allocation3 + $0x88] sm:$0xf] %vm1354, %v1366
  %v1370 = vld [vmem:[#allocation2 + $0x82] sm:$0x1f]
  %v1372 = vrot.slane %v1370, 1
  %1374 = vst.msk [vmem:[#allocation3 + $0x50] sm:$0x80] %vm1342, %v1372
  %1375 = vst.msk [vmem:[#allocation3 + $0x90] sm:$0xf] %vm1344, %v1372
  %v1376 = vld [vmem:[#allocation2 + $0x89] sm:$0x1f]
  %v1378 = vrot.slane %v1376, 1
  %1379 = vrot.lane.b32.xlu0 %v1378, 64
  %v1380 = vpop.permute.xlu0 %1379
  %1382 = vst.msk [vmem:[#allocation3 + $0x50] sm:$0x80] %vm1352, %v1380
  %1383 = vst.msk [vmem:[#allocation3 + $0x90] sm:$0xf] %vm1354, %v1380
  %v1384 = vld [vmem:[#allocation2 + $0x83] sm:$0x1f]
  %v1386 = vrot.slane %v1384, 1
  %1388 = vst.msk [vmem:[#allocation3 + $0x58] sm:$0x80] %vm1342, %v1386
  %1389 = vst.msk [vmem:[#allocation3 + $0x98] sm:$0xf] %vm1344, %v1386
  %v1390 = vld [vmem:[#allocation2 + $0x8a] sm:$0x1f]
  %v1392 = vrot.slane %v1390, 1
  %1393 = vrot.lane.b32.xlu0 %v1392, 64
  %v1394 = vpop.permute.xlu0 %1393
  %1396 = vst.msk [vmem:[#allocation3 + $0x58] sm:$0x80] %vm1352, %v1394
  %1397 = vst.msk [vmem:[#allocation3 + $0x98] sm:$0xf] %vm1354, %v1394
  %v1398 = vld [vmem:[#allocation2 + $0x34] sm:$0x1f]
  %v1400 = vrot.slane %v1398, 1
  %1402 = vst.msk [vmem:[#allocation3 + $0x60] sm:$0x80] %vm1342, %v1400
  %1403 = vst.msk [vmem:[#allocation3 + $0xa0] sm:$0xf] %vm1344, %v1400
  %v1404 = vld [vmem:[#allocation2 + $0x3b] sm:$0x1f]
  %v1406 = vrot.slane %v1404, 1
  %1407 = vrot.lane.b32.xlu0 %v1406, 64
  %v1408 = vpop.permute.xlu0 %1407
  %1410 = vst.msk [vmem:[#allocation3 + $0x60] sm:$0x80] %vm1352, %v1408
  %1411 = vst.msk [vmem:[#allocation3 + $0xa0] sm:$0xf] %vm1354, %v1408
  %v1412 = vld [vmem:[#allocation2 + $0x35] sm:$0x1f]
  %v1414 = vrot.slane %v1412, 1
  %1416 = vst.msk [vmem:[#allocation3 + $0x68] sm:$0x80] %vm1342, %v1414
  %1417 = vst.msk [vmem:[#allocation3 + $0xa8] sm:$0xf] %vm1344, %v1414
  %v1418 = vld [vmem:[#allocation2 + $0x3c] sm:$0x1f]
  %v1420 = vrot.slane %v1418, 1
  %1421 = vrot.lane.b32.xlu0 %v1420, 64
  %v1422 = vpop.permute.xlu0 %1421
  %1424 = vst.msk [vmem:[#allocation3 + $0x68] sm:$0x80] %vm1352, %v1422
  %1425 = vst.msk [vmem:[#allocation3 + $0xa8] sm:$0xf] %vm1354, %v1422
  %v1426 = vld [vmem:[#allocation2 + $0x8f] sm:$0x1f]
  %v1428 = vrot.slane %v1426, 1
  %1430 = vst.msk [vmem:[#allocation3 + $0x70] sm:$0x80] %vm1342, %v1428
  %1431 = vst.msk [vmem:[#allocation3 + $0xb0] sm:$0xf] %vm1344, %v1428
  %v1432 = vld [vmem:[#allocation2 + $0x96] sm:$0x1f]
  %v1434 = vrot.slane %v1432, 1
  %1435 = vrot.lane.b32.xlu0 %v1434, 64
  %v1436 = vpop.permute.xlu0 %1435
  %1438 = vst.msk [vmem:[#allocation3 + $0x70] sm:$0x80] %vm1352, %v1436
  %1439 = vst.msk [vmem:[#allocation3 + $0xb0] sm:$0xf] %vm1354, %v1436
  %v1440 = vld [vmem:[#allocation2 + $0x90] sm:$0x1f]
  %v1442 = vrot.slane %v1440, 1
  %1444 = vst.msk [vmem:[#allocation3 + $0x78] sm:$0x80] %vm1342, %v1442
  %1445 = vst.msk [vmem:[#allocation3 + $0xb8] sm:$0xf] %vm1344, %v1442
  %v1446 = vld [vmem:[#allocation2 + $0x97] sm:$0x1f]
  %v1448 = vrot.slane %v1446, 1
  %1449 = vrot.lane.b32.xlu0 %v1448, 64
  %v1450 = vpop.permute.xlu0 %1449
  %1452 = vst.msk [vmem:[#allocation3 + $0x78] sm:$0x80] %vm1352, %v1450
  %1453 = vst.msk [vmem:[#allocation3 + $0xb8] sm:$0xf] %vm1354, %v1450
  %v1454 = vld [vmem:[#allocation2 + $0x34] sm:$0x1f]
  %v1456 = vrot.slane %v1454, 4
  %vm1458 = vcmask 523268
  %1459 = vst.msk [vmem:[#allocation3 + $0x80] sm:$0xf0] %vm1458, %v1456
  %vm1460 = vcmask 516096
  %1461 = vst.msk [vmem:[#allocation3 + $0xc0] sm:$0x1] %vm1460, %v1456
  %v1462 = vld [vmem:[#allocation2 + $0x3b] sm:$0x1f]
  %v1464 = vrot.slane %v1462, 4
  %1465 = vrot.lane.b32.xlu0 %v1464, 64
  %v1466 = vpop.permute.xlu0 %1465
  %vm1468 = vcmask 1048068
  %1469 = vst.msk [vmem:[#allocation3 + $0x80] sm:$0xf0] %vm1468, %v1466
  %vm1470 = vcmask 1040896
  %1471 = vst.msk [vmem:[#allocation3 + $0xc0] sm:$0x1] %vm1470, %v1466
  %v1472 = vld [vmem:[#allocation2 + $0x35] sm:$0x1f]
  %v1474 = vrot.slane %v1472, 4
  %1476 = vst.msk [vmem:[#allocation3 + $0x88] sm:$0xf0] %vm1458, %v1474
  %1477 = vst.msk [vmem:[#allocation3 + $0xc8] sm:$0x1] %vm1460, %v1474
  %v1478 = vld [vmem:[#allocation2 + $0x3c] sm:$0x1f]
  %v1480 = vrot.slane %v1478, 4
  %1481 = vrot.lane.b32.xlu0 %v1480, 64
  %v1482 = vpop.permute.xlu0 %1481
  %1484 = vst.msk [vmem:[#allocation3 + $0x88] sm:$0xf0] %vm1468, %v1482
  %1485 = vst.msk [vmem:[#allocation3 + $0xc8] sm:$0x1] %vm1470, %v1482
  %v1486 = vld [vmem:[#allocation2 + $0x8f] sm:$0x1f]
  %v1488 = vrot.slane %v1486, 4
  %1490 = vst.msk [vmem:[#allocation3 + $0x90] sm:$0xf0] %vm1458, %v1488
  %1491 = vst.msk [vmem:[#allocation3 + $0xd0] sm:$0x1] %vm1460, %v1488
  %v1492 = vld [vmem:[#allocation2 + $0x96] sm:$0x1f]
  %v1494 = vrot.slane %v1492, 4
  %1495 = vrot.lane.b32.xlu0 %v1494, 64
  %v1496 = vpop.permute.xlu0 %1495
  %1498 = vst.msk [vmem:[#allocation3 + $0x90] sm:$0xf0] %vm1468, %v1496
  %1499 = vst.msk [vmem:[#allocation3 + $0xd0] sm:$0x1] %vm1470, %v1496
  %v1500 = vld [vmem:[#allocation2 + $0x90] sm:$0x1f]
  %v1502 = vrot.slane %v1500, 4
  %1504 = vst.msk [vmem:[#allocation3 + $0x98] sm:$0xf0] %vm1458, %v1502
  %1505 = vst.msk [vmem:[#allocation3 + $0xd8] sm:$0x1] %vm1460, %v1502
  %v1506 = vld [vmem:[#allocation2 + $0x97] sm:$0x1f]
  %v1508 = vrot.slane %v1506, 4
  %1509 = vrot.lane.b32.xlu0 %v1508, 64
  %v1510 = vpop.permute.xlu0 %1509
  %1512 = vst.msk [vmem:[#allocation3 + $0x98] sm:$0xf0] %vm1468, %v1510
  %1513 = vst.msk [vmem:[#allocation3 + $0xd8] sm:$0x1] %vm1470, %v1510
  %v1514 = vld [vmem:[#allocation2 + $0x41] sm:$0x1f]
  %v1516 = vrot.slane %v1514, 4
  %1518 = vst.msk [vmem:[#allocation3 + $0xa0] sm:$0xf0] %vm1458, %v1516
  %1519 = vst.msk [vmem:[#allocation3 + $0xe0] sm:$0x1] %vm1460, %v1516
  %v1520 = vld [vmem:[#allocation2 + $0x48] sm:$0x1f]
  %v1522 = vrot.slane %v1520, 4
  %1523 = vrot.lane.b32.xlu0 %v1522, 64
  %v1524 = vpop.permute.xlu0 %1523
  %1526 = vst.msk [vmem:[#allocation3 + $0xa0] sm:$0xf0] %vm1468, %v1524
  %1527 = vst.msk [vmem:[#allocation3 + $0xe0] sm:$0x1] %vm1470, %v1524
  %v1528 = vld [vmem:[#allocation2 + $0x42] sm:$0x1f]
  %v1530 = vrot.slane %v1528, 4
  %1532 = vst.msk [vmem:[#allocation3 + $0xa8] sm:$0xf0] %vm1458, %v1530
  %1533 = vst.msk [vmem:[#allocation3 + $0xe8] sm:$0x1] %vm1460, %v1530
  %v1534 = vld [vmem:[#allocation2 + $0x49] sm:$0x1f]
  %v1536 = vrot.slane %v1534, 4
  %1537 = vrot.lane.b32.xlu0 %v1536, 64
  %v1538 = vpop.permute.xlu0 %1537
  %1540 = vst.msk [vmem:[#allocation3 + $0xa8] sm:$0xf0] %vm1468, %v1538
  %1541 = vst.msk [vmem:[#allocation3 + $0xe8] sm:$0x1] %vm1470, %v1538
  %v1542 = vld [vmem:[#allocation2 + $0x9c] sm:$0x1f]
  %v1544 = vrot.slane %v1542, 4
  %1546 = vst.msk [vmem:[#allocation3 + $0xb0] sm:$0xf0] %vm1458, %v1544
  %1547 = vst.msk [vmem:[#allocation3 + $0xf0] sm:$0x1] %vm1460, %v1544
  %v1548 = vld [vmem:[#allocation2 + $0xa3] sm:$0x1f]
  %v1550 = vrot.slane %v1548, 4
  %1551 = vrot.lane.b32.xlu0 %v1550, 64
  %v1552 = vpop.permute.xlu0 %1551
  %1554 = vst.msk [vmem:[#allocation3 + $0xb0] sm:$0xf0] %vm1468, %v1552
  %1555 = vst.msk [vmem:[#allocation3 + $0xf0] sm:$0x1] %vm1470, %v1552
  %v1556 = vld [vmem:[#allocation2 + $0x9d] sm:$0x1f]
  %v1558 = vrot.slane %v1556, 4
  %1560 = vst.msk [vmem:[#allocation3 + $0xb8] sm:$0xf0] %vm1458, %v1558
  %1561 = vst.msk [vmem:[#allocation3 + $0xf8] sm:$0x1] %vm1460, %v1558
  %v1562 = vld [vmem:[#allocation2 + $0xa4] sm:$0x1f]
  %v1564 = vrot.slane %v1562, 4
  %1565 = vrot.lane.b32.xlu0 %v1564, 64
  %v1566 = vpop.permute.xlu0 %1565
  %1568 = vst.msk [vmem:[#allocation3 + $0xb8] sm:$0xf0] %vm1468, %v1566
  %1569 = vst.msk [vmem:[#allocation3 + $0xf8] sm:$0x1] %vm1470, %v1566
  %v1570 = vld [vmem:[#allocation2 + $0xa9] sm:$0x1f]
  %v1572 = vrot.slane %v1570, 7
  %vm1574 = vcmask 521217
  %1575 = vst.msk [vmem:[#allocation3 + $0xc0] sm:$0x3e] %vm1574, %v1572
  %v1576 = vld [vmem:[#allocation2 + $0xb0] sm:$0x1f]
  %v1578 = vrot.slane %v1576, 7
  %1579 = vrot.lane.b32.xlu0 %v1578, 64
  %v1580 = vpop.permute.xlu0 %1579
  %vm1582 = vcmask 1046017
  %1583 = vst.msk [vmem:[#allocation3 + $0xc0] sm:$0x3e] %vm1582, %v1580
  %v1584 = vld [vmem:[#allocation2 + $0xaa] sm:$0x1f]
  %v1586 = vrot.slane %v1584, 7
  %1588 = vst.msk [vmem:[#allocation3 + $0xc8] sm:$0x3e] %vm1574, %v1586
  %v1589 = vld [vmem:[#allocation2 + $0xb1] sm:$0x1f]
  %v1591 = vrot.slane %v1589, 7
  %1592 = vrot.lane.b32.xlu0 %v1591, 64
  %v1593 = vpop.permute.xlu0 %1592
  %1595 = vst.msk [vmem:[#allocation3 + $0xc8] sm:$0x3e] %vm1582, %v1593
  %v1596 = vld [vmem:[#allocation2 + $0x104] sm:$0x1f]
  %v1598 = vrot.slane %v1596, 7
  %1600 = vst.msk [vmem:[#allocation3 + $0xd0] sm:$0x3e] %vm1574, %v1598
  %v1601 = vld [vmem:[#allocation2 + $0x10b] sm:$0x1f]
  %v1603 = vrot.slane %v1601, 7
  %1604 = vrot.lane.b32.xlu0 %v1603, 64
  %v1605 = vpop.permute.xlu0 %1604
  %1607 = vst.msk [vmem:[#allocation3 + $0xd0] sm:$0x3e] %vm1582, %v1605
  %v1608 = vld [vmem:[#allocation2 + $0x105] sm:$0x1f]
  %v1610 = vrot.slane %v1608, 7
  %1612 = vst.msk [vmem:[#allocation3 + $0xd8] sm:$0x3e] %vm1574, %v1610
  %v1613 = vld [vmem:[#allocation2 + $0x10c] sm:$0x1f]
  %v1615 = vrot.slane %v1613, 7
  %1616 = vrot.lane.b32.xlu0 %v1615, 64
  %v1617 = vpop.permute.xlu0 %1616
  %1619 = vst.msk [vmem:[#allocation3 + $0xd8] sm:$0x3e] %vm1582, %v1617
  %v1620 = vld [vmem:[#allocation2 + $0xb6] sm:$0x1f]
  %v1622 = vrot.slane %v1620, 7
  %1624 = vst.msk [vmem:[#allocation3 + $0xe0] sm:$0x3e] %vm1574, %v1622
  %v1625 = vld [vmem:[#allocation2 + $0xbd] sm:$0x1f]
  %v1627 = vrot.slane %v1625, 7
  %1628 = vrot.lane.b32.xlu0 %v1627, 64
  %v1629 = vpop.permute.xlu0 %1628
  %1631 = vst.msk [vmem:[#allocation3 + $0xe0] sm:$0x3e] %vm1582, %v1629
  %v1632 = vld [vmem:[#allocation2 + $0xb7] sm:$0x1f]
  %v1634 = vrot.slane %v1632, 7
  %1636 = vst.msk [vmem:[#allocation3 + $0xe8] sm:$0x3e] %vm1574, %v1634
  %v1637 = vld [vmem:[#allocation2 + $0xbe] sm:$0x1f]
  %v1639 = vrot.slane %v1637, 7
  %1640 = vrot.lane.b32.xlu0 %v1639, 64
  %v1641 = vpop.permute.xlu0 %1640
  %1643 = vst.msk [vmem:[#allocation3 + $0xe8] sm:$0x3e] %vm1582, %v1641
  %v1644 = vld [vmem:[#allocation2 + $0x111] sm:$0x1f]
  %v1646 = vrot.slane %v1644, 7
  %1648 = vst.msk [vmem:[#allocation3 + $0xf0] sm:$0x3e] %vm1574, %v1646
  %v1649 = vld [vmem:[#allocation2 + $0x118] sm:$0x1f]
  %v1651 = vrot.slane %v1649, 7
  %1652 = vrot.lane.b32.xlu0 %v1651, 64
  %v1653 = vpop.permute.xlu0 %1652
  %1655 = vst.msk [vmem:[#allocation3 + $0xf0] sm:$0x3e] %vm1582, %v1653
  %v1656 = vld [vmem:[#allocation2 + $0x112] sm:$0x1f]
  %v1658 = vrot.slane %v1656, 7
  %1660 = vst.msk [vmem:[#allocation3 + $0xf8] sm:$0x3e] %vm1574, %v1658
  %v1661 = vld [vmem:[#allocation2 + $0x119] sm:$0x1f]
  %v1663 = vrot.slane %v1661, 7
  %1664 = vrot.lane.b32.xlu0 %v1663, 64
  %v1665 = vpop.permute.xlu0 %1664
  %1667 = vst.msk [vmem:[#allocation3 + $0xf8] sm:$0x3e] %vm1582, %v1665
  %v1668 = vld [vmem:[#allocation2 + $0xb6] sm:$0x1f]
  %v1670 = vrot.slane %v1668, 2
  %vm1672 = vcmask 523270
  %1673 = vst.msk [vmem:[#allocation3 + $0xc0] sm:$0xc0] %vm1672, %v1670
  %vm1674 = vcmask 518144
  %1675 = vst.msk [vmem:[#allocation3 + $0x100] sm:$0x7] %vm1674, %v1670
  %v1676 = vld [vmem:[#allocation2 + $0xbd] sm:$0x1f]
  %v1678 = vrot.slane %v1676, 2
  %1679 = vrot.lane.b32.xlu0 %v1678, 64
  %v1680 = vpop.permute.xlu0 %1679
  %vm1682 = vcmask 1048070
  %1683 = vst.msk [vmem:[#allocation3 + $0xc0] sm:$0xc0] %vm1682, %v1680
  %vm1684 = vcmask 1042944
  %1685 = vst.msk [vmem:[#allocation3 + $0x100] sm:$0x7] %vm1684, %v1680
  %v1686 = vld [vmem:[#allocation2 + $0xb7] sm:$0x1f]
  %v1688 = vrot.slane %v1686, 2
  %1690 = vst.msk [vmem:[#allocation3 + $0xc8] sm:$0xc0] %vm1672, %v1688
  %1691 = vst.msk [vmem:[#allocation3 + $0x108] sm:$0x7] %vm1674, %v1688
  %v1692 = vld [vmem:[#allocation2 + $0xbe] sm:$0x1f]
  %v1694 = vrot.slane %v1692, 2
  %1695 = vrot.lane.b32.xlu0 %v1694, 64
  %v1696 = vpop.permute.xlu0 %1695
  %1698 = vst.msk [vmem:[#allocation3 + $0xc8] sm:$0xc0] %vm1682, %v1696
  %1699 = vst.msk [vmem:[#allocation3 + $0x108] sm:$0x7] %vm1684, %v1696
  %v1700 = vld [vmem:[#allocation2 + $0x111] sm:$0x1f]
  %v1702 = vrot.slane %v1700, 2
  %1704 = vst.msk [vmem:[#allocation3 + $0xd0] sm:$0xc0] %vm1672, %v1702
  %1705 = vst.msk [vmem:[#allocation3 + $0x110] sm:$0x7] %vm1674, %v1702
  %v1706 = vld [vmem:[#allocation2 + $0x118] sm:$0x1f]
  %v1708 = vrot.slane %v1706, 2
  %1709 = vrot.lane.b32.xlu0 %v1708, 64
  %v1710 = vpop.permute.xlu0 %1709
  %1712 = vst.msk [vmem:[#allocation3 + $0xd0] sm:$0xc0] %vm1682, %v1710
  %1713 = vst.msk [vmem:[#allocation3 + $0x110] sm:$0x7] %vm1684, %v1710
  %v1714 = vld [vmem:[#allocation2 + $0x112] sm:$0x1f]
  %v1716 = vrot.slane %v1714, 2
  %1718 = vst.msk [vmem:[#allocation3 + $0xd8] sm:$0xc0] %vm1672, %v1716
  %1719 = vst.msk [vmem:[#allocation3 + $0x118] sm:$0x7] %vm1674, %v1716
  %v1720 = vld [vmem:[#allocation2 + $0x119] sm:$0x1f]
  %v1722 = vrot.slane %v1720, 2
  %1723 = vrot.lane.b32.xlu0 %v1722, 64
  %v1724 = vpop.permute.xlu0 %1723
  %1726 = vst.msk [vmem:[#allocation3 + $0xd8] sm:$0xc0] %vm1682, %v1724
  %1727 = vst.msk [vmem:[#allocation3 + $0x118] sm:$0x7] %vm1684, %v1724
  %v1728 = vld [vmem:[#allocation2 + $0xc3] sm:$0x1f]
  %v1730 = vrot.slane %v1728, 2
  %1732 = vst.msk [vmem:[#allocation3 + $0xe0] sm:$0xc0] %vm1672, %v1730
  %1733 = vst.msk [vmem:[#allocation3 + $0x120] sm:$0x7] %vm1674, %v1730
  %v1734 = vld [vmem:[#allocation2 + $0xca] sm:$0x1f]
  %v1736 = vrot.slane %v1734, 2
  %1737 = vrot.lane.b32.xlu0 %v1736, 64
  %v1738 = vpop.permute.xlu0 %1737
  %1740 = vst.msk [vmem:[#allocation3 + $0xe0] sm:$0xc0] %vm1682, %v1738
  %1741 = vst.msk [vmem:[#allocation3 + $0x120] sm:$0x7] %vm1684, %v1738
  %v1742 = vld [vmem:[#allocation2 + $0xc4] sm:$0x1f]
  %v1744 = vrot.slane %v1742, 2
  %1746 = vst.msk [vmem:[#allocation3 + $0xe8] sm:$0xc0] %vm1672, %v1744
  %1747 = vst.msk [vmem:[#allocation3 + $0x128] sm:$0x7] %vm1674, %v1744
  %v1748 = vld [vmem:[#allocation2 + $0xcb] sm:$0x1f]
  %v1750 = vrot.slane %v1748, 2
  %1751 = vrot.lane.b32.xlu0 %v1750, 64
  %v1752 = vpop.permute.xlu0 %1751
  %1754 = vst.msk [vmem:[#allocation3 + $0xe8] sm:$0xc0] %vm1682, %v1752
  %1755 = vst.msk [vmem:[#allocation3 + $0x128] sm:$0x7] %vm1684, %v1752
  %v1756 = vld [vmem:[#allocation2 + $0x11e] sm:$0x1f]
  %v1758 = vrot.slane %v1756, 2
  %1760 = vst.msk [vmem:[#allocation3 + $0xf0] sm:$0xc0] %vm1672, %v1758
  %1761 = vst.msk [vmem:[#allocation3 + $0x130] sm:$0x7] %vm1674, %v1758
  %v1762 = vld [vmem:[#allocation2 + $0x125] sm:$0x1f]
  %v1764 = vrot.slane %v1762, 2
  %1765 = vrot.lane.b32.xlu0 %v1764, 64
  %v1766 = vpop.permute.xlu0 %1765
  %1768 = vst.msk [vmem:[#allocation3 + $0xf0] sm:$0xc0] %vm1682, %v1766
  %1769 = vst.msk [vmem:[#allocation3 + $0x130] sm:$0x7] %vm1684, %v1766
  %v1770 = vld [vmem:[#allocation2 + $0x11f] sm:$0x1f]
  %v1772 = vrot.slane %v1770, 2
  %1774 = vst.msk [vmem:[#allocation3 + $0xf8] sm:$0xc0] %vm1672, %v1772
  %1775 = vst.msk [vmem:[#allocation3 + $0x138] sm:$0x7] %vm1674, %v1772
  %v1776 = vld [vmem:[#allocation2 + $0x126] sm:$0x1f]
  %v1778 = vrot.slane %v1776, 2
  %1779 = vrot.lane.b32.xlu0 %v1778, 64
  %v1780 = vpop.permute.xlu0 %1779
  %1782 = vst.msk [vmem:[#allocation3 + $0xf8] sm:$0xc0] %vm1682, %v1780
  %1783 = vst.msk [vmem:[#allocation3 + $0x138] sm:$0x7] %vm1684, %v1780
  %v1784 = vld [vmem:[#allocation2 + $0xc3] sm:$0x1f]
  %v1786 = vrot.slane %v1784, 5
  %vm1788 = vcmask 523267
  %1789 = vst.msk [vmem:[#allocation3 + $0x100] sm:$0xf8] %vm1788, %v1786
  %v1790 = vld [vmem:[#allocation2 + $0xca] sm:$0x1f]
  %v1792 = vrot.slane %v1790, 5
  %1793 = vrot.lane.b32.xlu0 %v1792, 64
  %v1794 = vpop.permute.xlu0 %1793
  %vm1796 = vcmask 1048067
  %1797 = vst.msk [vmem:[#allocation3 + $0x100] sm:$0xf8] %vm1796, %v1794
  %v1798 = vld [vmem:[#allocation2 + $0xc4] sm:$0x1f]
  %v1800 = vrot.slane %v1798, 5
  %1802 = vst.msk [vmem:[#allocation3 + $0x108] sm:$0xf8] %vm1788, %v1800
  %v1803 = vld [vmem:[#allocation2 + $0xcb] sm:$0x1f]
  %v1805 = vrot.slane %v1803, 5
  %1806 = vrot.lane.b32.xlu0 %v1805, 64
  %v1807 = vpop.permute.xlu0 %1806
  %1809 = vst.msk [vmem:[#allocation3 + $0x108] sm:$0xf8] %vm1796, %v1807
  %v1810 = vld [vmem:[#allocation2 + $0x11e] sm:$0x1f]
  %v1812 = vrot.slane %v1810, 5
  %1814 = vst.msk [vmem:[#allocation3 + $0x110] sm:$0xf8] %vm1788, %v1812
  %v1815 = vld [vmem:[#allocation2 + $0x125] sm:$0x1f]
  %v1817 = vrot.slane %v1815, 5
  %1818 = vrot.lane.b32.xlu0 %v1817, 64
  %v1819 = vpop.permute.xlu0 %1818
  %1821 = vst.msk [vmem:[#allocation3 + $0x110] sm:$0xf8] %vm1796, %v1819
  %v1822 = vld [vmem:[#allocation2 + $0x11f] sm:$0x1f]
  %v1824 = vrot.slane %v1822, 5
  %1826 = vst.msk [vmem:[#allocation3 + $0x118] sm:$0xf8] %vm1788, %v1824
  %v1827 = vld [vmem:[#allocation2 + $0x126] sm:$0x1f]
  %v1829 = vrot.slane %v1827, 5
  %1830 = vrot.lane.b32.xlu0 %v1829, 64
  %v1831 = vpop.permute.xlu0 %1830
  %1833 = vst.msk [vmem:[#allocation3 + $0x118] sm:$0xf8] %vm1796, %v1831
  %v1834 = vld [vmem:[#allocation2 + $0xd0] sm:$0x1f]
  %v1836 = vrot.slane %v1834, 5
  %1838 = vst.msk [vmem:[#allocation3 + $0x120] sm:$0xf8] %vm1788, %v1836
  %v1839 = vld [vmem:[#allocation2 + $0xd7] sm:$0x1f]
  %v1841 = vrot.slane %v1839, 5
  %1842 = vrot.lane.b32.xlu0 %v1841, 64
  %v1843 = vpop.permute.xlu0 %1842
  %1845 = vst.msk [vmem:[#allocation3 + $0x120] sm:$0xf8] %vm1796, %v1843
  %v1846 = vld [vmem:[#allocation2 + $0xd1] sm:$0x1f]
  %v1848 = vrot.slane %v1846, 5
  %1850 = vst.msk [vmem:[#allocation3 + $0x128] sm:$0xf8] %vm1788, %v1848
  %v1851 = vld [vmem:[#allocation2 + $0xd8] sm:$0x1f]
  %v1853 = vrot.slane %v1851, 5
  %1854 = vrot.lane.b32.xlu0 %v1853, 64
  %v1855 = vpop.permute.xlu0 %1854
  %1857 = vst.msk [vmem:[#allocation3 + $0x128] sm:$0xf8] %vm1796, %v1855
  %v1858 = vld [vmem:[#allocation2 + $0x12b] sm:$0x1f]
  %v1860 = vrot.slane %v1858, 5
  %1862 = vst.msk [vmem:[#allocation3 + $0x130] sm:$0xf8] %vm1788, %v1860
  %v1863 = vld [vmem:[#allocation2 + $0x132] sm:$0x1f]
  %v1865 = vrot.slane %v1863, 5
  %1866 = vrot.lane.b32.xlu0 %v1865, 64
  %v1867 = vpop.permute.xlu0 %1866
  %1869 = vst.msk [vmem:[#allocation3 + $0x130] sm:$0xf8] %vm1796, %v1867
  %v1870 = vld [vmem:[#allocation2 + $0x12c] sm:$0x1f]
  %v1872 = vrot.slane %v1870, 5
  %1874 = vst.msk [vmem:[#allocation3 + $0x138] sm:$0xf8] %vm1788, %v1872
  %v1875 = vld [vmem:[#allocation2 + $0x133] sm:$0x1f]
  %v1877 = vrot.slane %v1875, 5
  %1878 = vrot.lane.b32.xlu0 %v1877, 64
  %v1879 = vpop.permute.xlu0 %1878
  %1881 = vst.msk [vmem:[#allocation3 + $0x138] sm:$0xf8] %vm1796, %v1879
  %v1882 = vld [vmem:[#allocation2 + $0xd0] sm:$0x1f]
  %1883 = vst.msk [vmem:[#allocation3 + $0x140] sm:$0x1f] %vm1060, %v1882
  %v1884 = vld [vmem:[#allocation2 + $0xd7] sm:$0x1f]
  %1886 = vrot.lane.b32.xlu0 %v1884, 64
  %v1887 = vpop.permute.xlu0 %1886
  %1889 = vst.msk [vmem:[#allocation3 + $0x140] sm:$0x1f] %vm1067, %v1887
  %v1890 = vld [vmem:[#allocation2 + $0xd1] sm:$0x1f]
  %1891 = vst.msk [vmem:[#allocation3 + $0x148] sm:$0x1f] %vm1060, %v1890
  %v1892 = vld [vmem:[#allocation2 + $0xd8] sm:$0x1f]
  %1894 = vrot.lane.b32.xlu0 %v1892, 64
  %v1895 = vpop.permute.xlu0 %1894
  %1897 = vst.msk [vmem:[#allocation3 + $0x148] sm:$0x1f] %vm1067, %v1895
  %v1898 = vld [vmem:[#allocation2 + $0x12b] sm:$0x1f]
  %1899 = vst.msk [vmem:[#allocation3 + $0x150] sm:$0x1f] %vm1060, %v1898
  %v1900 = vld [vmem:[#allocation2 + $0x132] sm:$0x1f]
  %1902 = vrot.lane.b32.xlu0 %v1900, 64
  %v1903 = vpop.permute.xlu0 %1902
  %1905 = vst.msk [vmem:[#allocation3 + $0x150] sm:$0x1f] %vm1067, %v1903
  %v1906 = vld [vmem:[#allocation2 + $0x12c] sm:$0x1f]
  %1907 = vst.msk [vmem:[#allocation3 + $0x158] sm:$0x1f] %vm1060, %v1906
  %v1908 = vld [vmem:[#allocation2 + $0x133] sm:$0x1f]
  %1910 = vrot.lane.b32.xlu0 %v1908, 64
  %v1911 = vpop.permute.xlu0 %1910
  %1913 = vst.msk [vmem:[#allocation3 + $0x158] sm:$0x1f] %vm1067, %v1911
  %v1914 = vld [vmem:[#allocation2 + $0xdd] sm:$0x1f]
  %1915 = vst.msk [vmem:[#allocation3 + $0x160] sm:$0x1f] %vm1060, %v1914
  %v1916 = vld [vmem:[#allocation2 + $0xe4] sm:$0x1f]
  %1918 = vrot.lane.b32.xlu0 %v1916, 64
  %v1919 = vpop.permute.xlu0 %1918
  %1921 = vst.msk [vmem:[#allocation3 + $0x160] sm:$0x1f] %vm1067, %v1919
  %v1922 = vld [vmem:[#allocation2 + $0xde] sm:$0x1f]
  %1923 = vst.msk [vmem:[#allocation3 + $0x168] sm:$0x1f] %vm1060, %v1922
  %v1924 = vld [vmem:[#allocation2 + $0xe5] sm:$0x1f]
  %1926 = vrot.lane.b32.xlu0 %v1924, 64
  %v1927 = vpop.permute.xlu0 %1926
  %1929 = vst.msk [vmem:[#allocation3 + $0x168] sm:$0x1f] %vm1067, %v1927
  %v1930 = vld [vmem:[#allocation2 + $0x138] sm:$0x1f]
  %1931 = vst.msk [vmem:[#allocation3 + $0x170] sm:$0x1f] %vm1060, %v1930
  %v1932 = vld [vmem:[#allocation2 + $0x13f] sm:$0x1f]
  %1934 = vrot.lane.b32.xlu0 %v1932, 64
  %v1935 = vpop.permute.xlu0 %1934
  %1937 = vst.msk [vmem:[#allocation3 + $0x170] sm:$0x1f] %vm1067, %v1935
  %v1938 = vld [vmem:[#allocation2 + $0x139] sm:$0x1f]
  %1939 = vst.msk [vmem:[#allocation3 + $0x178] sm:$0x1f] %vm1060, %v1938
  %v1940 = vld [vmem:[#allocation2 + $0x140] sm:$0x1f]
  %1942 = vrot.lane.b32.xlu0 %v1940, 64
  %v1943 = vpop.permute.xlu0 %1942
  %1945 = vst.msk [vmem:[#allocation3 + $0x178] sm:$0x1f] %vm1067, %v1943
  %v1946 = vld [vmem:[#allocation2 + $0xdd] sm:$0x1f]
  %v1948 = vrot.slane %v1946, 3
  %1950 = vst.msk [vmem:[#allocation3 + $0x140] sm:$0xe0] %vm1129, %v1948
  %1951 = vst.msk [vmem:[#allocation3 + $0x180] sm:$0x3] %vm554, %v1948
  %v1952 = vld [vmem:[#allocation2 + $0xe4] sm:$0x1f]
  %v1954 = vrot.slane %v1952, 3
  %1955 = vrot.lane.b32.xlu0 %v1954, 64
  %v1956 = vpop.permute.xlu0 %1955
  %1958 = vst.msk [vmem:[#allocation3 + $0x140] sm:$0xe0] %vm1138, %v1956
  %1959 = vst.msk [vmem:[#allocation3 + $0x180] sm:$0x3] %vm1140, %v1956
  %v1960 = vld [vmem:[#allocation2 + $0xde] sm:$0x1f]
  %v1962 = vrot.slane %v1960, 3
  %1964 = vst.msk [vmem:[#allocation3 + $0x148] sm:$0xe0] %vm1129, %v1962
  %1965 = vst.msk [vmem:[#allocation3 + $0x188] sm:$0x3] %vm554, %v1962
  %v1966 = vld [vmem:[#allocation2 + $0xe5] sm:$0x1f]
  %v1968 = vrot.slane %v1966, 3
  %1969 = vrot.lane.b32.xlu0 %v1968, 64
  %v1970 = vpop.permute.xlu0 %1969
  %1972 = vst.msk [vmem:[#allocation3 + $0x148] sm:$0xe0] %vm1138, %v1970
  %1973 = vst.msk [vmem:[#allocation3 + $0x188] sm:$0x3] %vm1140, %v1970
  %v1974 = vld [vmem:[#allocation2 + $0x138] sm:$0x1f]
  %v1976 = vrot.slane %v1974, 3
  %1978 = vst.msk [vmem:[#allocation3 + $0x150] sm:$0xe0] %vm1129, %v1976
  %1979 = vst.msk [vmem:[#allocation3 + $0x190] sm:$0x3] %vm554, %v1976
  %v1980 = vld [vmem:[#allocation2 + $0x13f] sm:$0x1f]
  %v1982 = vrot.slane %v1980, 3
  %1983 = vrot.lane.b32.xlu0 %v1982, 64
  %v1984 = vpop.permute.xlu0 %1983
  %1986 = vst.msk [vmem:[#allocation3 + $0x150] sm:$0xe0] %vm1138, %v1984
  %1987 = vst.msk [vmem:[#allocation3 + $0x190] sm:$0x3] %vm1140, %v1984
  %v1988 = vld [vmem:[#allocation2 + $0x139] sm:$0x1f]
  %v1990 = vrot.slane %v1988, 3
  %1992 = vst.msk [vmem:[#allocation3 + $0x158] sm:$0xe0] %vm1129, %v1990
  %1993 = vst.msk [vmem:[#allocation3 + $0x198] sm:$0x3] %vm554, %v1990
  %v1994 = vld [vmem:[#allocation2 + $0x140] sm:$0x1f]
  %v1996 = vrot.slane %v1994, 3
  %1997 = vrot.lane.b32.xlu0 %v1996, 64
  %v1998 = vpop.permute.xlu0 %1997
  %2000 = vst.msk [vmem:[#allocation3 + $0x158] sm:$0xe0] %vm1138, %v1998
  %2001 = vst.msk [vmem:[#allocation3 + $0x198] sm:$0x3] %vm1140, %v1998
  %v2002 = vld [vmem:[#allocation2 + $0xea] sm:$0x1f]
  %v2004 = vrot.slane %v2002, 3
  %2006 = vst.msk [vmem:[#allocation3 + $0x160] sm:$0xe0] %vm1129, %v2004
  %2007 = vst.msk [vmem:[#allocation3 + $0x1a0] sm:$0x3] %vm554, %v2004
  %v2008 = vld [vmem:[#allocation2 + $0xf1] sm:$0x1f]
  %v2010 = vrot.slane %v2008, 3
  %2011 = vrot.lane.b32.xlu0 %v2010, 64
  %v2012 = vpop.permute.xlu0 %2011
  %2014 = vst.msk [vmem:[#allocation3 + $0x160] sm:$0xe0] %vm1138, %v2012
  %2015 = vst.msk [vmem:[#allocation3 + $0x1a0] sm:$0x3] %vm1140, %v2012
  %v2016 = vld [vmem:[#allocation2 + $0xeb] sm:$0x1f]
  %v2018 = vrot.slane %v2016, 3
  %2020 = vst.msk [vmem:[#allocation3 + $0x168] sm:$0xe0] %vm1129, %v2018
  %2021 = vst.msk [vmem:[#allocation3 + $0x1a8] sm:$0x3] %vm554, %v2018
  %v2022 = vld [vmem:[#allocation2 + $0xf2] sm:$0x1f]
  %v2024 = vrot.slane %v2022, 3
  %2025 = vrot.lane.b32.xlu0 %v2024, 64
  %v2026 = vpop.permute.xlu0 %2025
  %2028 = vst.msk [vmem:[#allocation3 + $0x168] sm:$0xe0] %vm1138, %v2026
  %2029 = vst.msk [vmem:[#allocation3 + $0x1a8] sm:$0x3] %vm1140, %v2026
  %v2030 = vld [vmem:[#allocation2 + $0x145] sm:$0x1f]
  %v2032 = vrot.slane %v2030, 3
  %2034 = vst.msk [vmem:[#allocation3 + $0x170] sm:$0xe0] %vm1129, %v2032
  %2035 = vst.msk [vmem:[#allocation3 + $0x1b0] sm:$0x3] %vm554, %v2032
  %v2036 = vld [vmem:[#allocation2 + $0x14c] sm:$0x1f]
  %v2038 = vrot.slane %v2036, 3
  %2039 = vrot.lane.b32.xlu0 %v2038, 64
  %v2040 = vpop.permute.xlu0 %2039
  %2042 = vst.msk [vmem:[#allocation3 + $0x170] sm:$0xe0] %vm1138, %v2040
  %2043 = vst.msk [vmem:[#allocation3 + $0x1b0] sm:$0x3] %vm1140, %v2040
  %v2044 = vld [vmem:[#allocation2 + $0x146] sm:$0x1f]
  %v2046 = vrot.slane %v2044, 3
  %2048 = vst.msk [vmem:[#allocation3 + $0x178] sm:$0xe0] %vm1129, %v2046
  %2049 = vst.msk [vmem:[#allocation3 + $0x1b8] sm:$0x3] %vm554, %v2046
  %v2050 = vld [vmem:[#allocation2 + $0x14d] sm:$0x1f]
  %v2052 = vrot.slane %v2050, 3
  %2053 = vrot.lane.b32.xlu0 %v2052, 64
  %v2054 = vpop.permute.xlu0 %2053
  %2056 = vst.msk [vmem:[#allocation3 + $0x178] sm:$0xe0] %vm1138, %v2054
  %2057 = vst.msk [vmem:[#allocation3 + $0x1b8] sm:$0x3] %vm1140, %v2054
  %v2058 = vld [vmem:[#allocation3] sm:$0xff]
  %v2059 = vld [vmem:[#allocation3 + $0x8] sm:$0xff]
  %v2060 = vld [vmem:[#allocation3 + $0x10] sm:$0xff]
  %v2061 = vld [vmem:[#allocation3 + $0x18] sm:$0xff]
  %v2062 = vld [vmem:[#allocation3 + $0x20] sm:$0xff]
  %v2063 = vld [vmem:[#allocation3 + $0x28] sm:$0xff]
  %v2064 = vld [vmem:[#allocation3 + $0x30] sm:$0xff]
  %v2065 = vld [vmem:[#allocation3 + $0x38] sm:$0xff]
  %v2066 = vld [vmem:[#allocation3 + $0x40] sm:$0xff]
  %v2067 = vld [vmem:[#allocation3 + $0x48] sm:$0xff]
  %v2068 = vld [vmem:[#allocation3 + $0x50] sm:$0xff]
  %v2069 = vld [vmem:[#allocation3 + $0x58] sm:$0xff]
  %v2070 = vld [vmem:[#allocation3 + $0x60] sm:$0xff]
  %v2071 = vld [vmem:[#allocation3 + $0x68] sm:$0xff]
  %v2072 = vld [vmem:[#allocation3 + $0x70] sm:$0xff]
  %v2073 = vld [vmem:[#allocation3 + $0x78] sm:$0xff]
  %v2074 = vld [vmem:[#allocation3 + $0x80] sm:$0xff]
  %v2075 = vld [vmem:[#allocation3 + $0x88] sm:$0xff]
  %v2076 = vld [vmem:[#allocation3 + $0x90] sm:$0xff]
  %v2077 = vld [vmem:[#allocation3 + $0x98] sm:$0xff]
  %v2078 = vld [vmem:[#allocation3 + $0xa0] sm:$0xff]
  %v2079 = vld [vmem:[#allocation3 + $0xa8] sm:$0xff]
  %v2080 = vld [vmem:[#allocation3 + $0xb0] sm:$0xff]
  %v2081 = vld [vmem:[#allocation3 + $0xb8] sm:$0xff]
  %v2082 = vld [vmem:[#allocation3 + $0xc0] sm:$0xff]
  %v2083 = vld [vmem:[#allocation3 + $0xc8] sm:$0xff]
  %v2084 = vld [vmem:[#allocation3 + $0xd0] sm:$0xff]
  %v2085 = vld [vmem:[#allocation3 + $0xd8] sm:$0xff]
  %v2086 = vld [vmem:[#allocation3 + $0xe0] sm:$0xff]
  %v2087 = vld [vmem:[#allocation3 + $0xe8] sm:$0xff]
  %v2088 = vld [vmem:[#allocation3 + $0xf0] sm:$0xff]
  %v2089 = vld [vmem:[#allocation3 + $0xf8] sm:$0xff]
  %v2090 = vld [vmem:[#allocation3 + $0x100] sm:$0xff]
  %v2091 = vld [vmem:[#allocation3 + $0x108] sm:$0xff]
  %v2092 = vld [vmem:[#allocation3 + $0x110] sm:$0xff]
  %v2093 = vld [vmem:[#allocation3 + $0x118] sm:$0xff]
  %v2094 = vld [vmem:[#allocation3 + $0x120] sm:$0xff]
  %v2095 = vld [vmem:[#allocation3 + $0x128] sm:$0xff]
  %v2096 = vld [vmem:[#allocation3 + $0x130] sm:$0xff]
  %v2097 = vld [vmem:[#allocation3 + $0x138] sm:$0xff]
  %v2098 = vld [vmem:[#allocation3 + $0x140] sm:$0xff]
  %v2099 = vld [vmem:[#allocation3 + $0x148] sm:$0xff]
  %v2100 = vld [vmem:[#allocation3 + $0x150] sm:$0xff]
  %v2101 = vld [vmem:[#allocation3 + $0x158] sm:$0xff]
  %v2102 = vld [vmem:[#allocation3 + $0x160] sm:$0xff]
  %v2103 = vld [vmem:[#allocation3 + $0x168] sm:$0xff]
  %v2104 = vld [vmem:[#allocation3 + $0x170] sm:$0xff]
  %v2105 = vld [vmem:[#allocation3 + $0x178] sm:$0xff]
  %v2106 = vld [vmem:[#allocation3 + $0x180] sm:$0x3]
  %v2107 = vld [vmem:[#allocation3 + $0x188] sm:$0x3]
  %v2108 = vld [vmem:[#allocation3 + $0x190] sm:$0x3]
  %v2109 = vld [vmem:[#allocation3 + $0x198] sm:$0x3]
  %v2110 = vld [vmem:[#allocation3 + $0x1a0] sm:$0x3]
  %v2111 = vld [vmem:[#allocation3 + $0x1a8] sm:$0x3]
  %v2112 = vld [vmem:[#allocation3 + $0x1b0] sm:$0x3]
  %v2113 = vld [vmem:[#allocation3 + $0x1b8] sm:$0x3]
  %v2114 = vpack.c.bf16 %v2066, %v2058
  %v2115 = vpack.c.bf16 %v2067, %v2059
  %v2116 = vpack.c.bf16 %v2068, %v2060
  %v2117 = vpack.c.bf16 %v2069, %v2061
  %v2118 = vpack.c.bf16 %v2070, %v2062
  %v2119 = vpack.c.bf16 %v2071, %v2063
  %v2120 = vpack.c.bf16 %v2072, %v2064
  %v2121 = vpack.c.bf16 %v2073, %v2065
  %v2122 = vpack.c.bf16 %v2082, %v2074
  %v2123 = vpack.c.bf16 %v2083, %v2075
  %v2124 = vpack.c.bf16 %v2084, %v2076
  %v2125 = vpack.c.bf16 %v2085, %v2077
  %v2126 = vpack.c.bf16 %v2086, %v2078
  %v2127 = vpack.c.bf16 %v2087, %v2079
  %v2128 = vpack.c.bf16 %v2088, %v2080
  %v2129 = vpack.c.bf16 %v2089, %v2081
  %v2130 = vpack.c.bf16 %v2098, %v2090
  %v2131 = vpack.c.bf16 %v2099, %v2091
  %v2132 = vpack.c.bf16 %v2100, %v2092
  %v2133 = vpack.c.bf16 %v2101, %v2093
  %v2134 = vpack.c.bf16 %v2102, %v2094
  %v2135 = vpack.c.bf16 %v2103, %v2095
  %v2136 = vpack.c.bf16 %v2104, %v2096
  %v2137 = vpack.c.bf16 %v2105, %v2097
  %v2138 = vpack.c.bf16 %v2106, %v2106
  %v2139 = vpack.c.bf16 %v2107, %v2107
  %v2140 = vpack.c.bf16 %v2108, %v2108
  %v2141 = vpack.c.bf16 %v2109, %v2109
  %v2142 = vpack.c.bf16 %v2110, %v2110
  %v2143 = vpack.c.bf16 %v2111, %v2111
  %v2144 = vpack.c.bf16 %v2112, %v2112
  %v2145 = vpack.c.bf16 %v2113, %v2113
  %v2146 = vld [vmem:[%s4] sm:$0xf]
  %v2147 = vld [vmem:[%s4 + $0x4] sm:$0xf]
  %v2148 = vld [vmem:[%s4 + $0x8] sm:$0xf]
  %v2149 = vld [vmem:[%s4 + $0xc] sm:$0xf]
  %v2150 = vld [vmem:[%s4 + $0x10] sm:$0xf]
  %v2151 = vld [vmem:[%s4 + $0x14] sm:$0xf]
  %v2152 = vld [vmem:[%s4 + $0x18] sm:$0xf]
  %v2153 = vld [vmem:[%s4 + $0x1c] sm:$0xf]
  %v2154 = vld [vmem:[%s4 + $0x20] sm:$0xf]
  %v2155 = vld [vmem:[%s4 + $0x24] sm:$0xf]
  %v2156 = vld [vmem:[%s4 + $0x28] sm:$0xf]
  %v2157 = vld [vmem:[%s4 + $0x2c] sm:$0xf]
  %v2158 = vld [vmem:[%s4 + $0x30] sm:$0xf]
  %v2159 = vld [vmem:[%s4 + $0x34] sm:$0xf]
  %v2160 = vld [vmem:[%s4 + $0x38] sm:$0xf]
  %v2161 = vld [vmem:[%s4 + $0x3c] sm:$0xf]
  %v2162 = vld [vmem:[%s4 + $0x40] sm:$0xf]
  %v2163 = vld [vmem:[%s4 + $0x44] sm:$0xf]
  %v2164 = vld [vmem:[%s4 + $0x48] sm:$0xf]
  %v2165 = vld [vmem:[%s4 + $0x4c] sm:$0xf]
  %v2166 = vld [vmem:[%s4 + $0x50] sm:$0xf]
  %v2167 = vld [vmem:[%s4 + $0x54] sm:$0xf]
  %v2168 = vld [vmem:[%s4 + $0x58] sm:$0xf]
  %v2169 = vld [vmem:[%s4 + $0x5c] sm:$0xf]
  %v2170 = vld [vmem:[%s4 + $0x60] sm:$0xf]
  %v2171 = vld [vmem:[%s4 + $0x64] sm:$0xf]
  %v2172 = vld [vmem:[%s4 + $0x68] sm:$0xf]
  %v2173 = vld [vmem:[%s4 + $0x6c] sm:$0xf]
  %v2174 = vld [vmem:[%s4 + $0x70] sm:$0xf]
  %v2175 = vld [vmem:[%s4 + $0x74] sm:$0xf]
  %v2176 = vld [vmem:[%s4 + $0x78] sm:$0xf]
  %v2177 = vld [vmem:[%s4 + $0x7c] sm:$0xf]
  %v2178 = vld [vmem:[%s4 + $0x80] sm:$0xf]
  %v2179 = vld [vmem:[%s4 + $0x84] sm:$0xf]
  %v2180 = vld [vmem:[%s4 + $0x88] sm:$0xf]
  %v2181 = vld [vmem:[%s4 + $0x8c] sm:$0xf]
  %v2182 = vld [vmem:[%s4 + $0x90] sm:$0xf]
  %v2183 = vld [vmem:[%s4 + $0x94] sm:$0xf]
  %v2184 = vld [vmem:[%s4 + $0x98] sm:$0xf]
  %v2185 = vld [vmem:[%s4 + $0x9c] sm:$0xf]
  %v2186 = vld [vmem:[%s4 + $0xa0] sm:$0xf]
  %v2187 = vld [vmem:[%s4 + $0xa4] sm:$0xf]
  %v2188 = vld [vmem:[%s4 + $0xa8] sm:$0xf]
  %v2189 = vld [vmem:[%s4 + $0xac] sm:$0xf]
  %v2190 = vld [vmem:[%s4 + $0xb0] sm:$0xf]
  %v2191 = vld [vmem:[%s4 + $0xb4] sm:$0xf]
  %v2192 = vld [vmem:[%s4 + $0xb8] sm:$0xf]
  %v2193 = vld [vmem:[%s4 + $0xbc] sm:$0xf]
  %v2194 = vld [vmem:[%s4 + $0xc0] sm:$0xf]
  %v2195 = vld [vmem:[%s4 + $0xc4] sm:$0xf]
  %v2196 = vld [vmem:[%s4 + $0xc8] sm:$0xf]
  %v2197 = vld [vmem:[%s4 + $0xcc] sm:$0xf]
  %v2198 = vld [vmem:[%s4 + $0xd0] sm:$0xf]
  %v2199 = vld [vmem:[%s4 + $0xd4] sm:$0xf]
  %v2200 = vld [vmem:[%s4 + $0xd8] sm:$0xf]
  %v2201 = vld [vmem:[%s4 + $0xdc] sm:$0xf]
  %v2202 = vld [vmem:[%s4 + $0xe0] sm:$0xf]
  %v2203 = vld [vmem:[%s4 + $0xe4] sm:$0xf]
  %v2204 = vld [vmem:[%s4 + $0xe8] sm:$0xf]
  %v2205 = vld [vmem:[%s4 + $0xec] sm:$0xf]
  %v2206 = vld [vmem:[%s4 + $0xf0] sm:$0xf]
  %v2207 = vld [vmem:[%s4 + $0xf4] sm:$0xf]
  %v2208 = vld [vmem:[%s4 + $0xf8] sm:$0xf]
  %v2209 = vld [vmem:[%s4 + $0xfc] sm:$0xf]
  %v2210 = vld [vmem:[%s4 + $0x100] sm:$0xf]
  %v2211 = vld [vmem:[%s4 + $0x104] sm:$0xf]
  %v2212 = vld [vmem:[%s4 + $0x108] sm:$0xf]
  %v2213 = vld [vmem:[%s4 + $0x10c] sm:$0xf]
  %v2214 = vld [vmem:[%s4 + $0x110] sm:$0xf]
  %v2215 = vld [vmem:[%s4 + $0x114] sm:$0xf]
  %v2216 = vld [vmem:[%s4 + $0x118] sm:$0xf]
  %v2217 = vld [vmem:[%s4 + $0x11c] sm:$0xf]
  %v2218 = vld [vmem:[%s4 + $0x120] sm:$0xf]
  %v2219 = vld [vmem:[%s4 + $0x124] sm:$0xf]
  %v2220 = vld [vmem:[%s4 + $0x128] sm:$0xf]
  %v2221 = vld [vmem:[%s4 + $0x12c] sm:$0xf]
  %v2222 = vld [vmem:[%s4 + $0x130] sm:$0xf]
  %v2223 = vld [vmem:[%s4 + $0x134] sm:$0xf]
  %v2224 = vld [vmem:[%s4 + $0x138] sm:$0xf]
  %v2225 = vld [vmem:[%s4 + $0x13c] sm:$0xf]
  %v2226 = vld [vmem:[%s4 + $0x140] sm:$0xf]
  %v2227 = vld [vmem:[%s4 + $0x144] sm:$0xf]
  %v2228 = vld [vmem:[%s4 + $0x148] sm:$0xf]
  %v2229 = vld [vmem:[%s4 + $0x14c] sm:$0xf]
  %v2230 = vld [vmem:[%s4 + $0x150] sm:$0xf]
  %v2231 = vld [vmem:[%s4 + $0x154] sm:$0xf]
  %v2232 = vld [vmem:[%s4 + $0x158] sm:$0xf]
  %v2233 = vld [vmem:[%s4 + $0x15c] sm:$0xf]
  %v2234 = vld [vmem:[%s4 + $0x160] sm:$0xf]
  %v2235 = vld [vmem:[%s4 + $0x164] sm:$0xf]
  %v2236 = vld [vmem:[%s4 + $0x168] sm:$0xf]
  %v2237 = vld [vmem:[%s4 + $0x16c] sm:$0xf]
  %v2238 = vld [vmem:[%s4 + $0x170] sm:$0xf]
  %v2239 = vld [vmem:[%s4 + $0x174] sm:$0xf]
  %v2240 = vld [vmem:[%s4 + $0x178] sm:$0xf]
  %v2241 = vld [vmem:[%s4 + $0x17c] sm:$0xf]
  %v2242 = vld [vmem:[%s4 + $0x180] sm:$0xf]
  %v2243 = vld [vmem:[%s4 + $0x184] sm:$0xf]
  %v2244 = vld [vmem:[%s4 + $0x188] sm:$0xf]
  %v2245 = vld [vmem:[%s4 + $0x18c] sm:$0xf]
  %v2246 = vld [vmem:[%s4 + $0x190] sm:$0xf]
  %v2247 = vld [vmem:[%s4 + $0x194] sm:$0xf]
  %v2248 = vld [vmem:[%s4 + $0x198] sm:$0xf]
  %v2249 = vld [vmem:[%s4 + $0x19c] sm:$0xf]
  %v2250 = vld [vmem:[%s4 + $0x1a0] sm:$0xf]
  %v2251 = vld [vmem:[%s4 + $0x1a4] sm:$0xf]
  %v2252 = vld [vmem:[%s4 + $0x1a8] sm:$0xf]
  %v2253 = vld [vmem:[%s4 + $0x1ac] sm:$0xf]
  %v2254 = vld [vmem:[%s4 + $0x1b0] sm:$0xf]
  %v2255 = vld [vmem:[%s4 + $0x1b4] sm:$0xf]
  %v2256 = vld [vmem:[%s4 + $0x1b8] sm:$0xf]
  %v2257 = vld [vmem:[%s4 + $0x1bc] sm:$0xf]
  %v2258 = vld [vmem:[%s4 + $0x1c0] sm:$0xf]
  %v2259 = vld [vmem:[%s4 + $0x1c4] sm:$0xf]
  %v2260 = vld [vmem:[%s4 + $0x1c8] sm:$0xf]
  %v2261 = vld [vmem:[%s4 + $0x1cc] sm:$0xf]
  %v2262 = vld [vmem:[%s4 + $0x1d0] sm:$0xf]
  %v2263 = vld [vmem:[%s4 + $0x1d4] sm:$0xf]
  %v2264 = vld [vmem:[%s4 + $0x1d8] sm:$0xf]
  %v2265 = vld [vmem:[%s4 + $0x1dc] sm:$0xf]
  %v2266 = vld [vmem:[%s4 + $0x1e0] sm:$0xf]
  %v2267 = vld [vmem:[%s4 + $0x1e4] sm:$0xf]
  %v2268 = vld [vmem:[%s4 + $0x1e8] sm:$0xf]
  %v2269 = vld [vmem:[%s4 + $0x1ec] sm:$0xf]
  %v2270 = vld [vmem:[%s4 + $0x1f0] sm:$0xf]
  %v2271 = vld [vmem:[%s4 + $0x1f4] sm:$0xf]
  %v2272 = vld [vmem:[%s4 + $0x1f8] sm:$0xf]
  %v2273 = vld [vmem:[%s4 + $0x1fc] sm:$0xf]
  %v2402 = vunpack.c.l.b16 %v2146
  %v2403 = vunpack.c.l.b16 %v2147
  %v2404 = vunpack.c.l.b16 %v2148
  %v2405 = vunpack.c.l.b16 %v2149
  %v2406 = vunpack.c.l.b16 %v2150
  %v2407 = vunpack.c.l.b16 %v2151
  %v2408 = vunpack.c.l.b16 %v2152
  %v2409 = vunpack.c.l.b16 %v2153
  %v2410 = vunpack.c.l.b16 %v2154
  %v2411 = vunpack.c.l.b16 %v2155
  %v2412 = vunpack.c.l.b16 %v2156
  %v2413 = vunpack.c.l.b16 %v2157
  %v2414 = vunpack.c.l.b16 %v2158
  %v2415 = vunpack.c.l.b16 %v2159
  %v2416 = vunpack.c.l.b16 %v2160
  %v2417 = vunpack.c.l.b16 %v2161
  %v2418 = vunpack.c.l.b16 %v2162
  %v2419 = vunpack.c.l.b16 %v2163
  %v2420 = vunpack.c.l.b16 %v2164
  %v2421 = vunpack.c.l.b16 %v2165
  %v2422 = vunpack.c.l.b16 %v2166
  %v2423 = vunpack.c.l.b16 %v2167
  %v2424 = vunpack.c.l.b16 %v2168
  %v2425 = vunpack.c.l.b16 %v2169
  %v2426 = vunpack.c.l.b16 %v2170
  %v2427 = vunpack.c.l.b16 %v2171
  %v2428 = vunpack.c.l.b16 %v2172
  %v2429 = vunpack.c.l.b16 %v2173
  %v2430 = vunpack.c.l.b16 %v2174
  %v2431 = vunpack.c.l.b16 %v2175
  %v2432 = vunpack.c.l.b16 %v2176
  %v2433 = vunpack.c.l.b16 %v2177
  %v2434 = vunpack.c.l.b16 %v2178
  %v2435 = vunpack.c.l.b16 %v2179
  %v2436 = vunpack.c.l.b16 %v2180
  %v2437 = vunpack.c.l.b16 %v2181
  %v2438 = vunpack.c.l.b16 %v2182
  %v2439 = vunpack.c.l.b16 %v2183
  %v2440 = vunpack.c.l.b16 %v2184
  %v2441 = vunpack.c.l.b16 %v2185
  %v2442 = vunpack.c.l.b16 %v2186
  %v2443 = vunpack.c.l.b16 %v2187
  %v2444 = vunpack.c.l.b16 %v2188
  %v2445 = vunpack.c.l.b16 %v2189
  %v2446 = vunpack.c.l.b16 %v2190
  %v2447 = vunpack.c.l.b16 %v2191
  %v2448 = vunpack.c.l.b16 %v2192
  %v2449 = vunpack.c.l.b16 %v2193
  %v2450 = vunpack.c.l.b16 %v2194
  %v2451 = vunpack.c.l.b16 %v2195
  %v2452 = vunpack.c.l.b16 %v2196
  %v2453 = vunpack.c.l.b16 %v2197
  %v2454 = vunpack.c.l.b16 %v2198
  %v2455 = vunpack.c.l.b16 %v2199
  %v2456 = vunpack.c.l.b16 %v2200
  %v2457 = vunpack.c.l.b16 %v2201
  %v2458 = vunpack.c.l.b16 %v2202
  %v2459 = vunpack.c.l.b16 %v2203
  %v2460 = vunpack.c.l.b16 %v2204
  %v2461 = vunpack.c.l.b16 %v2205
  %v2462 = vunpack.c.l.b16 %v2206
  %v2463 = vunpack.c.l.b16 %v2207
  %v2464 = vunpack.c.l.b16 %v2208
  %v2465 = vunpack.c.l.b16 %v2209
  %v2466 = vunpack.c.l.b16 %v2210
  %v2467 = vunpack.c.l.b16 %v2211
  %v2468 = vunpack.c.l.b16 %v2212
  %v2469 = vunpack.c.l.b16 %v2213
  %v2470 = vunpack.c.l.b16 %v2214
  %v2471 = vunpack.c.l.b16 %v2215
  %v2472 = vunpack.c.l.b16 %v2216
  %v2473 = vunpack.c.l.b16 %v2217
  %v2474 = vunpack.c.l.b16 %v2218
  %v2475 = vunpack.c.l.b16 %v2219
  %v2476 = vunpack.c.l.b16 %v2220
  %v2477 = vunpack.c.l.b16 %v2221
  %v2478 = vunpack.c.l.b16 %v2222
  %v2479 = vunpack.c.l.b16 %v2223
  %v2480 = vunpack.c.l.b16 %v2224
  %v2481 = vunpack.c.l.b16 %v2225
  %v2482 = vunpack.c.l.b16 %v2226
  %v2483 = vunpack.c.l.b16 %v2227
  %v2484 = vunpack.c.l.b16 %v2228
  %v2485 = vunpack.c.l.b16 %v2229
  %v2486 = vunpack.c.l.b16 %v2230
  %v2487 = vunpack.c.l.b16 %v2231
  %v2488 = vunpack.c.l.b16 %v2232
  %v2489 = vunpack.c.l.b16 %v2233
  %v2490 = vunpack.c.l.b16 %v2234
  %v2491 = vunpack.c.l.b16 %v2235
  %v2492 = vunpack.c.l.b16 %v2236
  %v2493 = vunpack.c.l.b16 %v2237
  %v2494 = vunpack.c.l.b16 %v2238
  %v2495 = vunpack.c.l.b16 %v2239
  %v2496 = vunpack.c.l.b16 %v2240
  %v2497 = vunpack.c.l.b16 %v2241
  %v2498 = vunpack.c.l.b16 %v2242
  %v2499 = vunpack.c.l.b16 %v2243
  %v2500 = vunpack.c.l.b16 %v2244
  %v2501 = vunpack.c.l.b16 %v2245
  %v2502 = vunpack.c.l.b16 %v2246
  %v2503 = vunpack.c.l.b16 %v2247
  %v2504 = vunpack.c.l.b16 %v2248
  %v2505 = vunpack.c.l.b16 %v2249
  %v2506 = vunpack.c.l.b16 %v2250
  %v2507 = vunpack.c.l.b16 %v2251
  %v2508 = vunpack.c.l.b16 %v2252
  %v2509 = vunpack.c.l.b16 %v2253
  %v2510 = vunpack.c.l.b16 %v2254
  %v2511 = vunpack.c.l.b16 %v2255
  %v2512 = vunpack.c.l.b16 %v2256
  %v2513 = vunpack.c.l.b16 %v2257
  %v2514 = vunpack.c.l.b16 %v2258
  %v2515 = vunpack.c.l.b16 %v2259
  %v2516 = vunpack.c.l.b16 %v2260
  %v2517 = vunpack.c.l.b16 %v2261
  %v2518 = vunpack.c.l.b16 %v2262
  %v2519 = vunpack.c.l.b16 %v2263
  %v2520 = vunpack.c.l.b16 %v2264
  %v2521 = vunpack.c.l.b16 %v2265
  %v2522 = vunpack.c.l.b16 %v2266
  %v2523 = vunpack.c.l.b16 %v2267
  %v2524 = vunpack.c.l.b16 %v2268
  %v2525 = vunpack.c.l.b16 %v2269
  %v2526 = vunpack.c.l.b16 %v2270
  %v2527 = vunpack.c.l.b16 %v2271
  %v2528 = vunpack.c.l.b16 %v2272
  %v2529 = vunpack.c.l.b16 %v2273
  %v2530 = vpack.c.b16 %v2403, %v2402
  %v2531 = vpack.c.b16 %v2405, %v2404
  %v2532 = vpack.c.b16 %v2407, %v2406
  %v2533 = vpack.c.b16 %v2409, %v2408
  %v2534 = vpack.c.b16 %v2411, %v2410
  %v2535 = vpack.c.b16 %v2413, %v2412
  %v2536 = vpack.c.b16 %v2415, %v2414
  %v2537 = vpack.c.b16 %v2417, %v2416
  %v2538 = vpack.c.b16 %v2419, %v2418
  %v2539 = vpack.c.b16 %v2421, %v2420
  %v2540 = vpack.c.b16 %v2423, %v2422
  %v2541 = vpack.c.b16 %v2425, %v2424
  %v2542 = vpack.c.b16 %v2427, %v2426
  %v2543 = vpack.c.b16 %v2429, %v2428
  %v2544 = vpack.c.b16 %v2431, %v2430
  %v2545 = vpack.c.b16 %v2433, %v2432
  %v2546 = vpack.c.b16 %v2435, %v2434
  %v2547 = vpack.c.b16 %v2437, %v2436
  %v2548 = vpack.c.b16 %v2439, %v2438
  %v2549 = vpack.c.b16 %v2441, %v2440
  %v2550 = vpack.c.b16 %v2443, %v2442
  %v2551 = vpack.c.b16 %v2445, %v2444
  %v2552 = vpack.c.b16 %v2447, %v2446
  %v2553 = vpack.c.b16 %v2449, %v2448
  %v2554 = vpack.c.b16 %v2451, %v2450
  %v2555 = vpack.c.b16 %v2453, %v2452
  %v2556 = vpack.c.b16 %v2455, %v2454
  %v2557 = vpack.c.b16 %v2457, %v2456
  %v2558 = vpack.c.b16 %v2459, %v2458
  %v2559 = vpack.c.b16 %v2461, %v2460
  %v2560 = vpack.c.b16 %v2463, %v2462
  %v2561 = vpack.c.b16 %v2465, %v2464
  %v2562 = vpack.c.b16 %v2467, %v2466
  %v2563 = vpack.c.b16 %v2469, %v2468
  %v2564 = vpack.c.b16 %v2471, %v2470
  %v2565 = vpack.c.b16 %v2473, %v2472
  %v2566 = vpack.c.b16 %v2475, %v2474
  %v2567 = vpack.c.b16 %v2477, %v2476
  %v2568 = vpack.c.b16 %v2479, %v2478
  %v2569 = vpack.c.b16 %v2481, %v2480
  %v2570 = vpack.c.b16 %v2483, %v2482
  %v2571 = vpack.c.b16 %v2485, %v2484
  %v2572 = vpack.c.b16 %v2487, %v2486
  %v2573 = vpack.c.b16 %v2489, %v2488
  %v2574 = vpack.c.b16 %v2491, %v2490
  %v2575 = vpack.c.b16 %v2493, %v2492
  %v2576 = vpack.c.b16 %v2495, %v2494
  %v2577 = vpack.c.b16 %v2497, %v2496
  %v2578 = vpack.c.b16 %v2499, %v2498
  %v2579 = vpack.c.b16 %v2501, %v2500
  %v2580 = vpack.c.b16 %v2503, %v2502
  %v2581 = vpack.c.b16 %v2505, %v2504
  %v2582 = vpack.c.b16 %v2507, %v2506
  %v2583 = vpack.c.b16 %v2509, %v2508
  %v2584 = vpack.c.b16 %v2511, %v2510
  %v2585 = vpack.c.b16 %v2513, %v2512
  %v2586 = vpack.c.b16 %v2515, %v2514
  %v2587 = vpack.c.b16 %v2517, %v2516
  %v2588 = vpack.c.b16 %v2519, %v2518
  %v2589 = vpack.c.b16 %v2521, %v2520
  %v2590 = vpack.c.b16 %v2523, %v2522
  %v2591 = vpack.c.b16 %v2525, %v2524
  %v2592 = vpack.c.b16 %v2527, %v2526
  %v2593 = vpack.c.b16 %v2529, %v2528
  %2658 = vmatprep.subr.bf16.mxu0 0
  %2659 = vmatpush1.bf16.msra.mxu0 %v2530
  %2660 = vmatprep.subr.bf16.mxu0 0
  %2661 = vmatpush1.bf16.msra.mxu0 %v2531
  %2662 = vmatprep.subr.bf16.mxu0 0
  %2663 = vmatpush1.bf16.msra.mxu0 %v2532
  %2664 = vmatprep.subr.bf16.mxu0 0
  %2665 = vmatpush1.bf16.msra.mxu0 %v2533
  %2666 = vmatprep.subr.bf16.mxu0 0
  %2667 = vmatpush1.bf16.msra.mxu0 %v2534
  %2668 = vmatprep.subr.bf16.mxu0 0
  %2669 = vmatpush1.bf16.msra.mxu0 %v2535
  %2670 = vmatprep.subr.bf16.mxu0 0
  %2671 = vmatpush1.bf16.msra.mxu0 %v2536
  %2672 = vmatprep.subr.bf16.mxu0 0
  %2673 = vmatpush1.bf16.msra.mxu0 %v2537
  %2674 = vmatprep.subr.bf16.mxu0 0
  %2675 = vmatpush1.bf16.msra.mxu0 %v2538
  %2676 = vmatprep.subr.bf16.mxu0 0
  %2677 = vmatpush1.bf16.msra.mxu0 %v2539
  %2678 = vmatprep.subr.bf16.mxu0 0
  %2679 = vmatpush1.bf16.msra.mxu0 %v2540
  %2680 = vmatprep.subr.bf16.mxu0 0
  %2681 = vmatpush1.bf16.msra.mxu0 %v2541
  %2682 = vmatprep.subr.bf16.mxu0 0
  %2683 = vmatpush1.bf16.msra.mxu0 %v2542
  %2684 = vmatprep.subr.bf16.mxu0 0
  %2685 = vmatpush1.bf16.msra.mxu0 %v2543
  %2686 = vmatprep.subr.bf16.mxu0 0
  %2687 = vmatpush1.bf16.msra.mxu0 %v2544
  %2688 = vmatprep.subr.bf16.mxu0 0
  %2689 = vmatpush1.bf16.msra.mxu0 %v2545
  %2690 = vmatprep.mubr.bf16.mxu0 %v2115
  %2691 = vmatmul.mubr.bf16.gmra.mrb[0].mxu0 %v2114
  %v2692 = vpop.f32.mrb[0].mxu0
  %v2693 = vadd.f32 0.0, %v2692
  %v2694 = vpop.f32.mrb[0].mxu0
  %v2695 = vpop.f32.mrb[0].mxu0
  %v2696 = vadd.f32 0.0, %v2695
  %v2697 = vpop.f32.mrb[0].mxu0
  %2698 = vmatprep.mubr.bf16.mxu0 %v2123
  %2699 = vmatmul.mubr.bf16.gmra.mrb[0].mxu0 %v2122
  %v2700 = vpop.f32.mrb[0].mxu0
  %v2701 = vadd.f32 0.0, %v2700
  %v2702 = vpop.f32.mrb[0].mxu0
  %v2703 = vpop.f32.mrb[0].mxu0
  %v2704 = vadd.f32 0.0, %v2703
  %v2705 = vpop.f32.mrb[0].mxu0
  %2706 = vmatprep.mubr.bf16.mxu0 %v2131
  %2707 = vmatmul.mubr.bf16.gmra.mrb[0].mxu0 %v2130
  %v2708 = vpop.f32.mrb[0].mxu0
  %v2709 = vadd.f32 0.0, %v2708
  %v2710 = vpop.f32.mrb[0].mxu0
  %v2711 = vpop.f32.mrb[0].mxu0
  %v2712 = vadd.f32 0.0, %v2711
  %v2713 = vpop.f32.mrb[0].mxu0
  %2714 = vmatprep.mubr.bf16.mxu0 %v2139
  %2715 = vmatmul.mubr.bf16.gmra.mrb[0].mxu0 %v2138
  %v2716 = vpop.f32.mrb[0].mxu0
  %v2717 = vadd.f32 0.0, %v2716
  %v2718 = vpop.f32.mrb[0].mxu0
  %v2719 = vpop.f32.mrb[0].mxu0
  %v2720 = vpop.f32.mrb[0].mxu0
  %2721 = vdwg.mxu0
  %2722 = vmatprep.subr.bf16.mxu0 0
  %2723 = vmatpush1.bf16.msra.mxu0 %v2546
  %2724 = vmatprep.subr.bf16.mxu0 0
  %2725 = vmatpush1.bf16.msra.mxu0 %v2547
  %2726 = vmatprep.subr.bf16.mxu0 0
  %2727 = vmatpush1.bf16.msra.mxu0 %v2548
  %2728 = vmatprep.subr.bf16.mxu0 0
  %2729 = vmatpush1.bf16.msra.mxu0 %v2549
  %2730 = vmatprep.subr.bf16.mxu0 0
  %2731 = vmatpush1.bf16.msra.mxu0 %v2550
  %2732 = vmatprep.subr.bf16.mxu0 0
  %2733 = vmatpush1.bf16.msra.mxu0 %v2551
  %2734 = vmatprep.subr.bf16.mxu0 0
  %2735 = vmatpush1.bf16.msra.mxu0 %v2552
  %2736 = vmatprep.subr.bf16.mxu0 0
  %2737 = vmatpush1.bf16.msra.mxu0 %v2553
  %2738 = vmatprep.subr.bf16.mxu0 0
  %2739 = vmatpush1.bf16.msra.mxu0 %v2554
  %2740 = vmatprep.subr.bf16.mxu0 0
  %2741 = vmatpush1.bf16.msra.mxu0 %v2555
  %2742 = vmatprep.subr.bf16.mxu0 0
  %2743 = vmatpush1.bf16.msra.mxu0 %v2556
  %2744 = vmatprep.subr.bf16.mxu0 0
  %2745 = vmatpush1.bf16.msra.mxu0 %v2557
  %2746 = vmatprep.subr.bf16.mxu0 0
  %2747 = vmatpush1.bf16.msra.mxu0 %v2558
  %2748 = vmatprep.subr.bf16.mxu0 0
  %2749 = vmatpush1.bf16.msra.mxu0 %v2559
  %2750 = vmatprep.subr.bf16.mxu0 0
  %2751 = vmatpush1.bf16.msra.mxu0 %v2560
  %2752 = vmatprep.subr.bf16.mxu0 0
  %2753 = vmatpush1.bf16.msra.mxu0 %v2561
  %2754 = vmatprep.mubr.bf16.mxu0 %v2117
  %2755 = vmatmul.mubr.bf16.gmra.mrb[0].mxu0 %v2116
  %v2756 = vpop.f32.mrb[0].mxu0
  %v2757 = vadd.f32 %v2693, %v2756
  %v2758 = vpop.f32.mrb[0].mxu0
  %v2759 = vpop.f32.mrb[0].mxu0
  %v2760 = vadd.f32 %v2696, %v2759
  %v2761 = vpop.f32.mrb[0].mxu0
  %2762 = vmatprep.mubr.bf16.mxu0 %v2125
  %2763 = vmatmul.mubr.bf16.gmra.mrb[0].mxu0 %v2124
  %v2764 = vpop.f32.mrb[0].mxu0
  %v2765 = vadd.f32 %v2701, %v2764
  %v2766 = vpop.f32.mrb[0].mxu0
  %v2767 = vpop.f32.mrb[0].mxu0
  %v2768 = vadd.f32 %v2704, %v2767
  %v2769 = vpop.f32.mrb[0].mxu0
  %2770 = vmatprep.mubr.bf16.mxu0 %v2133
  %2771 = vmatmul.mubr.bf16.gmra.mrb[0].mxu0 %v2132
  %v2772 = vpop.f32.mrb[0].mxu0
  %v2773 = vadd.f32 %v2709, %v2772
  %v2774 = vpop.f32.mrb[0].mxu0
  %v2775 = vpop.f32.mrb[0].mxu0
  %v2776 = vadd.f32 %v2712, %v2775
  %v2777 = vpop.f32.mrb[0].mxu0
  %2778 = vmatprep.mubr.bf16.mxu0 %v2141
  %2779 = vmatmul.mubr.bf16.gmra.mrb[0].mxu0 %v2140
  %v2780 = vpop.f32.mrb[0].mxu0
  %v2781 = vadd.f32 %v2717, %v2780
  %v2782 = vpop.f32.mrb[0].mxu0
  %v2783 = vpop.f32.mrb[0].mxu0
  %v2784 = vpop.f32.mrb[0].mxu0
  %2785 = vdwg.mxu0
  %2786 = vmatprep.subr.bf16.mxu0 0
  %2787 = vmatpush1.bf16.msra.mxu0 %v2562
  %2788 = vmatprep.subr.bf16.mxu0 0
  %2789 = vmatpush1.bf16.msra.mxu0 %v2563
  %2790 = vmatprep.subr.bf16.mxu0 0
  %2791 = vmatpush1.bf16.msra.mxu0 %v2564
  %2792 = vmatprep.subr.bf16.mxu0 0
  %2793 = vmatpush1.bf16.msra.mxu0 %v2565
  %2794 = vmatprep.subr.bf16.mxu0 0
  %2795 = vmatpush1.bf16.msra.mxu0 %v2566
  %2796 = vmatprep.subr.bf16.mxu0 0
  %2797 = vmatpush1.bf16.msra.mxu0 %v2567
  %2798 = vmatprep.subr.bf16.mxu0 0
  %2799 = vmatpush1.bf16.msra.mxu0 %v2568
  %2800 = vmatprep.subr.bf16.mxu0 0
  %2801 = vmatpush1.bf16.msra.mxu0 %v2569
  %2802 = vmatprep.subr.bf16.mxu0 0
  %2803 = vmatpush1.bf16.msra.mxu0 %v2570
  %2804 = vmatprep.subr.bf16.mxu0 0
  %2805 = vmatpush1.bf16.msra.mxu0 %v2571
  %2806 = vmatprep.subr.bf16.mxu0 0
  %2807 = vmatpush1.bf16.msra.mxu0 %v2572
  %2808 = vmatprep.subr.bf16.mxu0 0
  %2809 = vmatpush1.bf16.msra.mxu0 %v2573
  %2810 = vmatprep.subr.bf16.mxu0 0
  %2811 = vmatpush1.bf16.msra.mxu0 %v2574
  %2812 = vmatprep.subr.bf16.mxu0 0
  %2813 = vmatpush1.bf16.msra.mxu0 %v2575
  %2814 = vmatprep.subr.bf16.mxu0 0
  %2815 = vmatpush1.bf16.msra.mxu0 %v2576
  %2816 = vmatprep.subr.bf16.mxu0 0
  %2817 = vmatpush1.bf16.msra.mxu0 %v2577
  %2818 = vmatprep.mubr.bf16.mxu0 %v2119
  %2819 = vmatmul.mubr.bf16.gmra.mrb[0].mxu0 %v2118
  %v2820 = vpop.f32.mrb[0].mxu0
  %v2821 = vadd.f32 %v2757, %v2820
  %v2822 = vpop.f32.mrb[0].mxu0
  %v2823 = vpop.f32.mrb[0].mxu0
  %v2824 = vadd.f32 %v2760, %v2823
  %v2825 = vpop.f32.mrb[0].mxu0
  %2826 = vmatprep.mubr.bf16.mxu0 %v2127
  %2827 = vmatmul.mubr.bf16.gmra.mrb[0].mxu0 %v2126
  %v2828 = vpop.f32.mrb[0].mxu0
  %v2829 = vadd.f32 %v2765, %v2828
  %v2830 = vpop.f32.mrb[0].mxu0
  %v2831 = vpop.f32.mrb[0].mxu0
  %v2832 = vadd.f32 %v2768, %v2831
  %v2833 = vpop.f32.mrb[0].mxu0
  %2834 = vmatprep.mubr.bf16.mxu0 %v2135
  %2835 = vmatmul.mubr.bf16.gmra.mrb[0].mxu0 %v2134
  %v2836 = vpop.f32.mrb[0].mxu0
  %v2837 = vadd.f32 %v2773, %v2836
  %v2838 = vpop.f32.mrb[0].mxu0
  %v2839 = vpop.f32.mrb[0].mxu0
  %v2840 = vadd.f32 %v2776, %v2839
  %v2841 = vpop.f32.mrb[0].mxu0
  %2842 = vmatprep.mubr.bf16.mxu0 %v2143
  %2843 = vmatmul.mubr.bf16.gmra.mrb[0].mxu0 %v2142
  %v2844 = vpop.f32.mrb[0].mxu0
  %v2845 = vadd.f32 %v2781, %v2844
  %v2846 = vpop.f32.mrb[0].mxu0
  %v2847 = vpop.f32.mrb[0].mxu0
  %v2848 = vpop.f32.mrb[0].mxu0
  %2849 = vdwg.mxu0
  %2850 = vmatprep.subr.bf16.mxu0 0
  %2851 = vmatpush1.bf16.msra.mxu0 %v2578
  %2852 = vmatprep.subr.bf16.mxu0 0
  %2853 = vmatpush1.bf16.msra.mxu0 %v2579
  %2854 = vmatprep.subr.bf16.mxu0 0
  %2855 = vmatpush1.bf16.msra.mxu0 %v2580
  %2856 = vmatprep.subr.bf16.mxu0 0
  %2857 = vmatpush1.bf16.msra.mxu0 %v2581
  %2858 = vmatprep.subr.bf16.mxu0 0
  %2859 = vmatpush1.bf16.msra.mxu0 %v2582
  %2860 = vmatprep.subr.bf16.mxu0 0
  %2861 = vmatpush1.bf16.msra.mxu0 %v2583
  %2862 = vmatprep.subr.bf16.mxu0 0
  %2863 = vmatpush1.bf16.msra.mxu0 %v2584
  %2864 = vmatprep.subr.bf16.mxu0 0
  %2865 = vmatpush1.bf16.msra.mxu0 %v2585
  %2866 = vmatprep.subr.bf16.mxu0 0
  %2867 = vmatpush1.bf16.msra.mxu0 %v2586
  %2868 = vmatprep.subr.bf16.mxu0 0
  %2869 = vmatpush1.bf16.msra.mxu0 %v2587
  %2870 = vmatprep.subr.bf16.mxu0 0
  %2871 = vmatpush1.bf16.msra.mxu0 %v2588
  %2872 = vmatprep.subr.bf16.mxu0 0
  %2873 = vmatpush1.bf16.msra.mxu0 %v2589
  %2874 = vmatprep.subr.bf16.mxu0 0
  %2875 = vmatpush1.bf16.msra.mxu0 %v2590
  %2876 = vmatprep.subr.bf16.mxu0 0
  %2877 = vmatpush1.bf16.msra.mxu0 %v2591
  %2878 = vmatprep.subr.bf16.mxu0 0
  %2879 = vmatpush1.bf16.msra.mxu0 %v2592
  %2880 = vmatprep.subr.bf16.mxu0 0
  %2881 = vmatpush1.bf16.msra.mxu0 %v2593
  %2882 = vmatprep.mubr.bf16.mxu0 %v2121
  %2883 = vmatmul.mubr.bf16.gmra.mrb[0].mxu0 %v2120
  %v2884 = vpop.f32.mrb[0].mxu0
  %v2885 = vadd.f32 %v2821, %v2884
  %v2886 = vpop.f32.mrb[0].mxu0
  %v2887 = vpop.f32.mrb[0].mxu0
  %v2888 = vadd.f32 %v2824, %v2887
  %v2889 = vpop.f32.mrb[0].mxu0
  %2890 = vmatprep.mubr.bf16.mxu0 %v2129
  %2891 = vmatmul.mubr.bf16.gmra.mrb[0].mxu0 %v2128
  %v2892 = vpop.f32.mrb[0].mxu0
  %v2893 = vadd.f32 %v2829, %v2892
  %v2894 = vpop.f32.mrb[0].mxu0
  %v2895 = vpop.f32.mrb[0].mxu0
  %v2896 = vadd.f32 %v2832, %v2895
  %v2897 = vpop.f32.mrb[0].mxu0
  %2898 = vmatprep.mubr.bf16.mxu0 %v2137
  %2899 = vmatmul.mubr.bf16.gmra.mrb[0].mxu0 %v2136
  %v2900 = vpop.f32.mrb[0].mxu0
  %v2901 = vadd.f32 %v2837, %v2900
  %v2902 = vpop.f32.mrb[0].mxu0
  %v2903 = vpop.f32.mrb[0].mxu0
  %v2904 = vadd.f32 %v2840, %v2903
  %v2905 = vpop.f32.mrb[0].mxu0
  %2906 = vmatprep.mubr.bf16.mxu0 %v2145
  %2907 = vmatmul.mubr.bf16.gmra.mrb[0].mxu0 %v2144
  %v2908 = vpop.f32.mrb[0].mxu0
  %v2909 = vadd.f32 %v2845, %v2908
  %v2910 = vpop.f32.mrb[0].mxu0
  %v2911 = vpop.f32.mrb[0].mxu0
  %v2912 = vpop.f32.mrb[0].mxu0
  %2913 = vdwg.mxu0
  %v2914 = vld [vmem:[%s5] sm:$0x1]
  %v2915 = vld [vmem:[%s6] sm:$0x1]
  %v2916 = vadd.f32 %v2885, %v2888
  %v2917 = vadd.f32 %v2916, %v2893
  %v2918 = vadd.f32 %v2917, %v2896
  %v2919 = vadd.f32 %v2918, %v2901
  %v2920 = vadd.f32 %v2919, %v2904
  %vm2921 = vcmask 1041408
  %v2922 = vsel %vm2921, %v2909, 0.0
  %v2923 = vadd.f32 %v2920, %v2922
  %v2924 = vrot.slane %v2923, 4
  %v2925 = vadd.f32 %v2923, %v2924
  %v2926 = vrot.slane %v2925, 2
  %v2927 = vadd.f32 %v2925, %v2926
  %v2928 = vrot.slane %v2927, 1
  %v2929 = vadd.f32 %v2927, %v2928
  %v2930 = vmul.f32 %v2929, 0.02
  %v2931 = vmul.f32 %v2885, %v2885
  %v2932 = vmul.f32 %v2888, %v2888
  %v2933 = vmul.f32 %v2893, %v2893
  %v2934 = vmul.f32 %v2896, %v2896
  %v2935 = vmul.f32 %v2901, %v2901
  %v2936 = vmul.f32 %v2904, %v2904
  %v2937 = vmul.f32 %v2909, %v2909
  %v2938 = vadd.f32 %v2931, %v2932
  %v2939 = vadd.f32 %v2938, %v2933
  %v2940 = vadd.f32 %v2939, %v2934
  %v2941 = vadd.f32 %v2940, %v2935
  %v2942 = vadd.f32 %v2941, %v2936
  %v2943 = vsel %vm2921, %v2937, 0.0
  %v2944 = vadd.f32 %v2942, %v2943
  %v2945 = vrot.slane %v2944, 4
  %v2946 = vadd.f32 %v2944, %v2945
  %v2947 = vrot.slane %v2946, 2
  %v2948 = vadd.f32 %v2946, %v2947
  %v2949 = vrot.slane %v2948, 1
  %v2950 = vadd.f32 %v2948, %v2949
  %v2951 = vmul.f32 %v2950, 0.02
  %v2952 = vmul.f32 %v2930, %v2930
  %v2953 = vsub.f32 %v2951, %v2952
  %v2954 = vsub.f32 %v2885, %v2930
  %v2955 = vsub.f32 %v2888, %v2930
  %v2956 = vsub.f32 %v2893, %v2930
  %v2957 = vsub.f32 %v2896, %v2930
  %v2958 = vsub.f32 %v2901, %v2930
  %v2959 = vsub.f32 %v2904, %v2930
  %v2960 = vsub.f32 %v2909, %v2930
  %v2961 = vadd.f32 %v2953, 1e-05
  %v2962 = vrsqrt.pop %v2961
  %v2963 = vmul.f32 %v2954, %v2962
  %v2964 = vmul.f32 %v2955, %v2962
  %v2965 = vmul.f32 %v2956, %v2962
  %v2966 = vmul.f32 %v2957, %v2962
  %v2967 = vmul.f32 %v2958, %v2962
  %v2968 = vmul.f32 %v2959, %v2962
  %v2969 = vmul.f32 %v2960, %v2962
  %v2971 = vlaneseq
  %v2972 = vshrl.u32 %v2971, 7
  %v2973 = vsub.s32 0, %v2972
  %v2974 = vrot.slane %v2914, %v2973
  %v2976 = vmul.f32 %v2963, %v2974
  %v2977 = vmul.f32 %v2964, %v2974
  %v2978 = vmul.f32 %v2965, %v2974
  %v2979 = vmul.f32 %v2966, %v2974
  %v2980 = vmul.f32 %v2967, %v2974
  %v2981 = vmul.f32 %v2968, %v2974
  %v2982 = vmul.f32 %v2969, %v2974
  %v2984 = vlaneseq
  %v2985 = vshrl.u32 %v2984, 7
  %v2986 = vsub.s32 0, %v2985
  %v2987 = vrot.slane %v2915, %v2986
  %v2989 = vadd.f32 %v2976, %v2987
  %v2990 = vadd.f32 %v2977, %v2987
  %v2991 = vadd.f32 %v2978, %v2987
  %v2992 = vadd.f32 %v2979, %v2987
  %v2993 = vadd.f32 %v2980, %v2987
  %v2994 = vadd.f32 %v2981, %v2987
  %v2995 = vadd.f32 %v2982, %v2987
  %vm2996 = vcmp.ge.f32.partialorder %v2989, 0.0
  %vm2997 = vcmp.ge.f32.partialorder %v2990, 0.0
  %vm2998 = vcmp.ge.f32.partialorder %v2991, 0.0
  %vm2999 = vcmp.ge.f32.partialorder %v2992, 0.0
  %vm3000 = vcmp.ge.f32.partialorder %v2993, 0.0
  %vm3001 = vcmp.ge.f32.partialorder %v2994, 0.0
  %vm3002 = vcmp.ge.f32.partialorder %v2995, 0.0
  %v3003 = vmul.f32 %v2989, 0.2
  %v3004 = vmul.f32 %v2990, 0.2
  %v3005 = vmul.f32 %v2991, 0.2
  %v3006 = vmul.f32 %v2992, 0.2
  %v3007 = vmul.f32 %v2993, 0.2
  %v3008 = vmul.f32 %v2994, 0.2
  %v3009 = vmul.f32 %v2995, 0.2
  %v3010 = vsel %vm2996, %v2989, %v3003
  %v3011 = vsel %vm2997, %v2990, %v3004
  %v3012 = vsel %vm2998, %v2991, %v3005
  %v3013 = vsel %vm2999, %v2992, %v3006
  %v3014 = vsel %vm3000, %v2993, %v3007
  %v3015 = vsel %vm3001, %v2994, %v3008
  %v3016 = vsel %vm3002, %v2995, %v3009
  %v3017 = vld [vmem:[%s7] sm:$0xff]
  %v3018 = vld [vmem:[%s7 + $0x8] sm:$0xff]
  %v3019 = vld [vmem:[%s7 + $0x10] sm:$0xff]
  %v3020 = vld [vmem:[%s7 + $0x18] sm:$0xff]
  %v3021 = vld [vmem:[%s7 + $0x20] sm:$0xff]
  %v3022 = vld [vmem:[%s7 + $0x28] sm:$0xff]
  %v3023 = vld [vmem:[%s7 + $0x30] sm:$0x3]
  %v3024 = vmul.f32 %v3010, %v3017
  %v3025 = vmul.f32 %v3011, %v3018
  %v3026 = vmul.f32 %v3012, %v3019
  %v3027 = vmul.f32 %v3013, %v3020
  %v3028 = vmul.f32 %v3014, %v3021
  %v3029 = vmul.f32 %v3015, %v3022
  %v3030 = vmul.f32 %v3016, %v3023
  %3031 = vadd.xlane.f32.xlu0 %v3024
  %v3032 = vpop.xlane.xlu0 %3031
  %3033 = vadd.xlane.f32.xlu0 %v3025
  %v3034 = vpop.xlane.xlu0 %3033
  %3035 = vadd.xlane.f32.xlu0 %v3026
  %v3036 = vpop.xlane.xlu0 %3035
  %3037 = vadd.xlane.f32.xlu0 %v3027
  %v3038 = vpop.xlane.xlu0 %3037
  %3039 = vadd.xlane.f32.xlu0 %v3028
  %v3040 = vpop.xlane.xlu0 %3039
  %3041 = vadd.xlane.f32.xlu0 %v3029
  %v3042 = vpop.xlane.xlu0 %3041
  %v3043 = vsel %vm2921, %v3030, 0.0
  %3044 = vadd.xlane.f32.xlu0 %v3043
  %v3045 = vpop.xlane.xlu0 %3044
  %v3046 = vlaneseq
  %v3047 = vshrl.u32 %v3046, 7
  %v3048 = vlaneseq
  %v3049 = vand.u32 %v3048, 127
  %v3050 = vmul.u32 %v3047, 25
  %vm3051 = vcmp.ge.s32.totalorder %v3049, %v3050
  %v3052 = vadd.s32 %v3047, 1
  %v3053 = vmul.u32 %v3052, 25
  %vm3054 = vcmp.lt.s32.totalorder %v3049, %v3053
  %vm3055 = vmand %vm3051, %vm3054
  %v3056 = vsel %vm3055, 1, 0
  %v3057 = vcvt.s32.f32 %v3056
  %s3058 = sld [smem:[#allocation4]]
  %v3059 = vstv %s3058
  %vm3060 = vcmask 408576
  %v3062 = vsel %vm3060, %v3057, 0
  %v3065 = vsel %vm2921, %v3045, 0
  %3067 = vmatprep.subr.mxu0 0.0
  %3068 = vmatpush1.msra.mxu0 %v3032
  %3069 = vmatprep.subr.mxu0 0.0
  %3070 = vmatpush1.msra.mxu0 %v3034
  %3071 = vmatprep.subr.mxu0 0.0
  %3072 = vmatpush1.msra.mxu0 %v3036
  %3073 = vmatprep.subr.mxu0 0.0
  %3074 = vmatpush1.msra.mxu0 %v3038
  %3075 = vmatprep.subr.mxu0 0.0
  %3076 = vmatpush1.msra.mxu0 %v3040
  %3077 = vmatprep.subr.mxu0 0.0
  %3078 = vmatpush1.msra.mxu0 %v3042
  %3079 = vmatprep.subr.mxu0 0.0
  %3080 = vmatpush1.msra.mxu0 %v3065
  %3081 = vmatprep.subr.mxu0 0.0
  %3082 = vmatpush1.msra.mxu0 0.0
  %3083 = vmatprep.subr.mxu0 0.0
  %3084 = vmatpush1.msra.mxu0 0.0
  %3085 = vmatprep.subr.mxu0 0.0
  %3086 = vmatpush1.msra.mxu0 0.0
  %3087 = vmatprep.subr.mxu0 0.0
  %3088 = vmatpush1.msra.mxu0 0.0
  %3089 = vmatprep.subr.mxu0 0.0
  %3090 = vmatpush1.msra.mxu0 0.0
  %3091 = vmatprep.subr.mxu0 0.0
  %3092 = vmatpush1.msra.mxu0 0.0
  %3093 = vmatprep.subr.mxu0 0.0
  %3094 = vmatpush1.msra.mxu0 0.0
  %3095 = vmatprep.subr.mxu0 0.0
  %3096 = vmatpush1.msra.mxu0 0.0
  %3097 = vmatprep.subr.mxu0 0.0
  %3098 = vmatpush1.msra.mxu0 0.0
  %3099 = vmatprep.subr.mxu0 0.0
  %3100 = vmatpush1.msra.mxu0 0.0
  %3101 = vmatprep.subr.mxu0 0.0
  %3102 = vmatpush1.msra.mxu0 0.0
  %3103 = vmatprep.subr.mxu0 0.0
  %3104 = vmatpush1.msra.mxu0 0.0
  %3105 = vmatprep.subr.mxu0 0.0
  %3106 = vmatpush1.msra.mxu0 0.0
  %3107 = vmatprep.subr.mxu0 0.0
  %3108 = vmatpush1.msra.mxu0 0.0
  %3109 = vmatprep.subr.mxu0 0.0
  %3110 = vmatpush1.msra.mxu0 0.0
  %3111 = vmatprep.subr.mxu0 0.0
  %3112 = vmatpush1.msra.mxu0 0.0
  %3113 = vmatprep.subr.mxu0 0.0
  %3114 = vmatpush1.msra.mxu0 0.0
  %3115 = vmatprep.subr.mxu0 0.0
  %3116 = vmatpush1.msra.mxu0 0.0
  %3117 = vmatprep.subr.mxu0 0.0
  %3118 = vmatpush1.msra.mxu0 0.0
  %3119 = vmatprep.subr.mxu0 0.0
  %3120 = vmatpush1.msra.mxu0 0.0
  %3121 = vmatprep.subr.mxu0 0.0
  %3122 = vmatpush1.msra.mxu0 0.0
  %3123 = vmatprep.subr.mxu0 0.0
  %3124 = vmatpush1.msra.mxu0 0.0
  %3125 = vmatprep.subr.mxu0 0.0
  %3126 = vmatpush1.msra.mxu0 0.0
  %3127 = vmatprep.subr.mxu0 0.0
  %3128 = vmatpush1.msra.mxu0 0.0
  %3129 = vmatprep.subr.mxu0 0.0
  %3130 = vmatpush1.msra.mxu0 0.0
  %3131 = vmatprep.mubr.f32.mxu0 0.0
  %3132 = vmatmul.mubr.f32.gmra.mrb[0].mxu0 %v3062
  %v3133 = vpop.f32.mrb[0].mxu0
  %v3134 = vadd.f32 %v3059, %v3133
  %v3135 = vpop.f32.mrb[0].mxu0
  %3136 = vdwg.mxu0
  %v3137 = vsub.f32 0.0, %v3134
  %v3138 = vmul.f32 %v3137, 1.442695
  %v3139 = vpow.pop %v3138
  %v3140 = vadd.f32 %v3139, 1.0
  %v3141 = vrcp.pop %v3140
  %v3142 = vmul.f32 1.0, %v3141
  %vm3143 = vcmask 1024
  %3144 = vst.msk [vmem:[%s9] sm:$0x3] %vm3143, %v3142
  // Predicated region
  $region38: #{discriminator_forward.1} parent=0 // pred_check
    _
  $region39: #{discriminator_forward.1} parent=0 // pred_check_branch
    %3146 = sbr.rel (0) target = $region41
  $region40: #{discriminator_forward.1} parent=0 // pred_region
    _
  $region41: #{discriminator_forward.1} parent=0 // pred_fallthru
    _
  // Predicated region
  $region42: #{discriminator_forward.1} parent=0 // pred_check
    _
  $region43: #{discriminator_forward.1} parent=0 // pred_check_branch
    %3148 = sbr.rel (0) target = $region45
  $region44: #{discriminator_forward.1} parent=0 // pred_region
    _
  $region45: #{discriminator_forward.1} parent=0 // pred_fallthru
    _

</llo_original>
